<compile_context>
chip_gen: v6e
topology: v6e:2x2x1
jax: 0.10.0
libtpu: 0.0.40
codegen_flags: <defaults>
</compile_context>

<pallas_src>
import functools

import jax
import jax.numpy as jnp
from jax import lax
from jax.experimental import pallas as pl
from jax.experimental.pallas import tpu as pltpu


def _round_up(x, m):
    return ((x + m - 1) // m) * m


# ------------------------ exact GELU (erf polynomial) -------------------------
def _erf(x):
    # Abramowitz & Stegun 7.1.26, |error| <= 1.5e-7 (matches F.gelu default
    # 'none' approximation to well below bf16 noise; avoids relying on a
    # lax.erf lowering inside the kernel).
    a1, a2, a3, a4, a5 = (0.254829592, -0.284496736, 1.421413741,
                          -1.453152027, 1.061405429)
    p = 0.3275911
    sgn = jnp.where(x >= 0.0, 1.0, -1.0)
    ax = jnp.abs(x)
    t = 1.0 / (1.0 + p * ax)
    poly = ((((a5 * t + a4) * t + a3) * t + a2) * t + a1) * t
    return sgn * (1.0 - poly * jnp.exp(-ax * ax))


def _gelu_exact(x):
    return 0.5 * x * (1.0 + _erf(x * 0.7071067811865476))


# -------------------- kernel 1: LayerNorm + GELU + x @ W_ih --------------------
def prep_kernel(x_ref, gamma_ref, beta_ref, wih_ref, bih_ref, o_ref,
                *, d_true, eps):
    x = x_ref[...]                                          # [TM, Dp] f32
    inv_d = 1.0 / d_true
    mean = jnp.sum(x, axis=-1, keepdims=True) * inv_d       # zeros pad -> true sum
    xc = x - mean
    if d_true < x.shape[-1]:
        mask = lax.broadcasted_iota(jnp.int32, x.shape, 1) < d_true
        xc = jnp.where(mask, xc, 0.0)                       # exclude padded lanes
    var = jnp.sum(xc * xc, axis=-1, keepdims=True) * inv_d
    xn = xc * lax.rsqrt(var + eps)
    y = xn * gamma_ref[...] + beta_ref[...]                 # padded lanes stay 0
    g = _gelu_exact(y)
    # big batched MXU matmul (both directions at once); bf16 in, f32 accumulate
    o_ref[...] = (jnp.dot(g.astype(wih_ref.dtype), wih_ref[...],
                          preferred_element_type=jnp.float32)
                  + bih_ref[...])


def fused_ln_gelu_proj(x2d, gamma, beta, w_ih_t, b_ih, d_true, tile_m,
                       eps=1e-5):
    Mpad, Dp = x2d.shape
    G6 = w_ih_t.shape[1]                                    # 6 * Hp (fwd|bwd gates)
    kernel = functools.partial(prep_kernel, d_true=d_true, eps=eps)
    return pl.pallas_call(
        kernel,
        out_shape=jax.ShapeDtypeStruct((Mpad, G6), jnp.float32),
        grid=(Mpad // tile_m,),
        in_specs=[pl.BlockSpec((tile_m, Dp), lambda i: (i, 0)),
                  pl.BlockSpec((1, Dp), lambda i: (0, 0)),
                  pl.BlockSpec((1, Dp), lambda i: (0, 0)),
                  pl.BlockSpec((Dp, G6), lambda i: (0, 0)),
                  pl.BlockSpec((1, G6), lambda i: (0, 0))],
        out_specs=pl.BlockSpec((tile_m, G6), lambda i: (i, 0)),
        compiler_params=pltpu.CompilerParams(
            dimension_semantics=("parallel",)),             # megacore-shardable
    )(x2d, gamma, beta, w_ih_t, b_ih)


# ----------------- kernel 2: bidirectional GRU recurrence ---------------------
def bigru_kernel(xp_ref, whh_ref, bhh_ref, y_ref, h_sc):
    # grid = (direction, time_chunk); h carried across time chunks in scratch.
    tc = pl.program_id(1)

    @pl.when(tc == 0)
    def _():
        h_sc[...] = jnp.zeros_like(h_sc)

    whh = whh_ref[...]                                      # [Hp, 3Hp] f32, resident
    bhh = bhh_ref[...]                                      # [1, 3Hp]
    TT, _, Hp = y_ref.shape

    def step(t, h):
        hh = jnp.dot(h, whh, preferred_element_type=jnp.float32) + bhh
        xp = xp_ref[t]                                      # [Bp, 3Hp] (x@W_ih + b_ih)
        # 128-aligned gate slabs -> slices are free views (PyTorch order r, z, n)
        r = jax.nn.sigmoid(xp[:, 0 * Hp:1 * Hp] + hh[:, 0 * Hp:1 * Hp])
        z = jax.nn.sigmoid(xp[:, 1 * Hp:2 * Hp] + hh[:, 1 * Hp:2 * Hp])
        n = jnp.tanh(xp[:, 2 * Hp:3 * Hp] + r * hh[:, 2 * Hp:3 * Hp])
        h_new = (1.0 - z) * n + z * h
        y_ref[t] = h_new.astype(y_ref.dtype)                # lane-dense [Bp, Hp] store
        return h_new

    h_sc[...] = lax.fori_loop(0, TT, step, h_sc[...], unroll=(TT <= 16))


def bigru_scan(xp, w_hh_t, b_hh, hidden_pad, time_tile):
    # xp:     [2, Tpad, Bp, 3Hp]  (direction 1 already time-reversed)
    # w_hh_t: [2, Hp, 3Hp], b_hh: [2, 1, 3Hp]
    _, Tpad, Bp, G3 = xp.shape
    Hp = hidden_pad
    # NOTE: for large H, single-buffer the weight specs (pipeline_mode=
    # pl.Buffered(1)) and set vmem_limit_bytes to stay under v7x's 64 MiB.
    return pl.pallas_call(
        bigru_kernel,
        out_shape=jax.ShapeDtypeStruct((2, Tpad, Bp, Hp), jnp.float32),
        grid=(2, Tpad // time_tile),
        in_specs=[
            pl.BlockSpec((None, time_tile, Bp, G3), lambda d, tc: (d, tc, 0, 0)),
            pl.BlockSpec((None, Hp, G3), lambda d, tc: (d, 0, 0)),
            pl.BlockSpec((None, 1, G3), lambda d, tc: (d, 0, 0)),
        ],
        out_specs=pl.BlockSpec((None, time_tile, Bp, Hp),
                               lambda d, tc: (d, tc, 0, 0)),
        scratch_shapes=[pltpu.VMEM((Bp, Hp), jnp.float32)],  # h carry
        compiler_params=pltpu.CompilerParams(
            dimension_semantics=("parallel", "arbitrary")),  # dir || , time serial
    )(xp, w_hh_t, b_hh)


# --------------------------------- parameters ---------------------------------
def init_raw_params(key, rnn_dim, hidden_size):
    """PyTorch-layout params: nn.LayerNorm + nn.GRU(bidirectional, 1 layer)."""
    D, H = rnn_dim, hidden_size
    stdv = 1.0 / (H ** 0.5)
    ks = jax.random.split(key, 8)
    u = lambda k, s: jax.random.uniform(k, s, jnp.float32, -stdv, stdv)
    return dict(
        ln_gamma=jnp.ones((D,), jnp.float32),
        ln_beta=jnp.zeros((D,), jnp.float32),
        w_ih=jnp.stack([u(ks[0], (3 * H, D)), u(ks[1], (3 * H, D))]),   # [2,3H,D]
        w_hh=jnp.stack([u(ks[2], (3 * H, H)), u(ks[3], (3 * H, H))]),   # [2,3H,H]
        b_ih=jnp.stack([u(ks[4], (3 * H,)), u(ks[5], (3 * H,))]),       # [2,3H]
        b_hh=jnp.stack([u(ks[6], (3 * H,)), u(ks[7], (3 * H,))]),       # [2,3H]
    )


def pack_params(raw, rnn_dim, hidden_size):
    """Pad gates to 128-lane slabs, pre-transpose, combine directions."""
    D, H = rnn_dim, hidden_size
    Dp, Hp = _round_up(D, 128), _round_up(H, 128)

    def pad_gates_mat(w, in_dim, in_pad):                   # [3H,in] -> [3Hp,in_pad]
        out = jnp.zeros((3 * Hp, in_pad), jnp.float32)
        for k in range(3):
            out = out.at[k * Hp:k * Hp + H, :in_dim].set(w[k * H:(k + 1) * H])
        return out

    def pad_gates_vec(b):                                   # [3H] -> [3Hp]
        out = jnp.zeros((3 * Hp,), jnp.float32)
        for k in range(3):
            out = out.at[k * Hp:k * Hp + H].set(b[k * H:(k + 1) * H])
        return out

    w_ih_t = jnp.concatenate(
        [pad_gates_mat(raw["w_ih"][d], D, Dp).T for d in range(2)], axis=1)
    b_ih = jnp.concatenate([pad_gates_vec(raw["b_ih"][d]) for d in range(2)])
    w_hh_t = jnp.stack([pad_gates_mat(raw["w_hh"][d], H, Hp).T for d in range(2)])
    b_hh = jnp.stack([pad_gates_vec(raw["b_hh"][d]) for d in range(2)])

    return dict(
        gamma=jnp.pad(raw["ln_gamma"], (0, Dp - D))[None, :],   # [1, Dp]
        beta=jnp.pad(raw["ln_beta"], (0, Dp - D))[None, :],     # [1, Dp]
        w_ih_t=w_ih_t.astype(jnp.bfloat16),                     # [Dp, 6Hp] bf16 (MXU)
        b_ih=b_ih[None, :],                                     # [1, 6Hp]  f32
        w_hh_t=w_hh_t,                                          # [2, Hp, 3Hp] f32
        b_hh=b_hh[:, None, :],                                  # [2, 1, 3Hp]  f32
    )


# ----------------------------------- forward ----------------------------------
def bigru_layer_forward(packed, x, hidden_size):
    """x: [B, T, rnn_dim] -> [B, T, 2*hidden_size] (eval-mode forward)."""
    B, T, D = x.shape
    H = hidden_size
    Dp = packed["gamma"].shape[1]
    Hp = packed["w_hh_t"].shape[1]
    Bp = _round_up(B, 8)                                    # fill all 8 sublanes

    # pad batch/feature, go time-major, flatten tokens
    xpad = jnp.pad(x.astype(jnp.float32), ((0, Bp - B), (0, 0), (0, Dp - D)))
    x2d = jnp.transpose(xpad, (1, 0, 2)).reshape(T * Bp, Dp)

    M = T * Bp
    TM = M if M <= 256 else 256
    Mpad = _round_up(M, TM)
    if Mpad != M:
        x2d = jnp.pad(x2d, ((0, Mpad - M), (0, 0)))

    # LayerNorm + GELU + input projection for both directions (one big matmul)
    x_proj = fused_ln_gelu_proj(x2d, packed["gamma"], packed["beta"],
                                packed["w_ih_t"], packed["b_ih"], D, TM)
    x_proj = x_proj[:M].reshape(T, Bp, 6 * Hp)

    xf = x_proj[..., :3 * Hp]                               # forward direction
    xb = jnp.flip(x_proj[..., 3 * Hp:], axis=0)             # backward, scanned fwd
    xd = jnp.stack([xf, xb], axis=0)                        # [2, T, Bp, 3Hp]

    TT = T if T <= 128 else 128
    Tpad = _round_up(T, TT)
    if Tpad != T:
        xd = jnp.pad(xd, ((0, 0), (0, Tpad - T), (0, 0), (0, 0)))

    y = bigru_scan(xd, packed["w_hh_t"], packed["b_hh"], Hp, TT)   # [2,Tpad,Bp,Hp]

    y_f = y[0, :T, :B, :H]
    y_b = jnp.flip(y[1, :T], axis=0)[:, :B, :H]
    out = jnp.concatenate([y_f, y_b], axis=-1)              # [T, B, 2H]
    # TODO(synk): nn.Dropout is identity in eval mode; train-mode dropout RNG
    # masking is not implemented here.
    return jnp.transpose(out, (1, 0, 2))                    # [B, T, 2H]


# ------------------------- pure-JAX reference (check) -------------------------
def reference_forward(raw, x, hidden_size):
    H = hidden_size
    mu = jnp.mean(x, axis=-1, keepdims=True)
    var = jnp.mean((x - mu) ** 2, axis=-1, keepdims=True)
    xn = (x - mu) * lax.rsqrt(var + 1e-5)
    xn = xn * raw["ln_gamma"] + raw["ln_beta"]
    g = jax.nn.gelu(xn, approximate=False)
    xs = jnp.transpose(g, (1, 0, 2))                        # [T, B, D]

    def run_dir(d, reverse):
        w_ih, w_hh = raw["w_ih"][d], raw["w_hh"][d]
        b_ih, b_hh = raw["b_ih"][d], raw["b_hh"][d]

        def step(h, x_t):
            gi = x_t @ w_ih.T + b_ih
            gh = h @ w_hh.T + b_hh
            r = jax.nn.sigmoid(gi[:, :H] + gh[:, :H])
            z = jax.nn.sigmoid(gi[:, H:2 * H] + gh[:, H:2 * H])
            n = jnp.tanh(gi[:, 2 * H:] + r * gh[:, 2 * H:])
            h = (1.0 - z) * n + z * h
            return h, h

        h0 = jnp.zeros((xs.shape[1], H), jnp.float32)
        _, ys = lax.scan(step, h0, xs, reverse=reverse)
        return ys

    y = jnp.concatenate([run_dir(0, False), run_dir(1, True)], axis=-1)
    return jnp.transpose(y, (1, 0, 2))                      # [B, T, 2H]


if __name__ == "__main__":
    B, T, rnn_dim, hidden_size = 2, 8, 32, 32

    key = jax.random.PRNGKey(0)
    pkey, xkey = jax.random.split(key)
    raw = init_raw_params(pkey, rnn_dim, hidden_size)
    packed = pack_params(raw, rnn_dim, hidden_size)
    x = jax.random.normal(xkey, (B, T, rnn_dim), jnp.float32)

    forward = jax.jit(bigru_layer_forward, static_argnames=("hidden_size",))
    out = forward(packed, x, hidden_size=hidden_size)
    jax.block_until_ready(out)
    assert out.shape == (B, T, 2 * hidden_size)

    ref = reference_forward(raw, x, hidden_size)
    max_err = float(jnp.max(jnp.abs(out - ref)))
    assert max_err < 5e-2, max_err   # bf16 input-projection operands, f32 accumulate

    print("KERNEL_OK")
</pallas_src>

<mosaic_0001>
module attributes {stable_mosaic.version = 11 : i64} {
  func.func @prep_kernel(%arg0: i32, %arg1: memref<64x128xf32, #tpu.memory_space<vmem>>, %arg2: memref<1x128xf32, #tpu.memory_space<vmem>>, %arg3: memref<1x128xf32, #tpu.memory_space<vmem>>, %arg4: memref<128x768xbf16, #tpu.memory_space<vmem>>, %arg5: memref<1x768xf32, #tpu.memory_space<vmem>>, %arg6: memref<64x768xf32, #tpu.memory_space<vmem>>) attributes {dimension_semantics = [#tpu.dimension_semantics<parallel>], iteration_bounds = array<i64: 1>, scalar_prefetch = 0 : i64, scratch_operands = 0 : i64, tpu.core_type = #tpu.core_type<tc>, window_params = [{transform_indices = @transform_0, window_bounds = array<i64: 64, 128>}, {pipeline_mode = #tpu.pipeline_mode<synchronous>, transform_indices = @transform_1, window_bounds = array<i64: 1, 128>}, {pipeline_mode = #tpu.pipeline_mode<synchronous>, transform_indices = @transform_2, window_bounds = array<i64: 1, 128>}, {pipeline_mode = #tpu.pipeline_mode<synchronous>, transform_indices = @transform_3, window_bounds = array<i64: 128, 768>}, {pipeline_mode = #tpu.pipeline_mode<synchronous>, transform_indices = @transform_4, window_bounds = array<i64: 1, 768>}, {transform_indices = @transform_5, window_bounds = array<i64: 64, 768>}]} {
    %c0 = arith.constant 0 : index
    %c0_0 = arith.constant 0 : index
    %0 = vector.load %arg1[%c0, %c0_0] : memref<64x128xf32, #tpu.memory_space<vmem>>, vector<64x128xf32>
    %cst = arith.constant dense<0.000000e+00> : vector<64xf32>
    %1 = vector.multi_reduction <add>, %0, %cst [1] : vector<64x128xf32> to vector<64xf32>
    %2 = vector.shape_cast %1 : vector<64xf32> to vector<64x1xf32>
    %cst_1 = arith.constant 3.125000e-02 : f32
    %3 = vector.broadcast %cst_1 : f32 to vector<64x1xf32>
    %4 = arith.mulf %2, %3 : vector<64x1xf32>
    %5 = vector.broadcast %4 : vector<64x1xf32> to vector<64x128xf32>
    %6 = arith.subf %0, %5 : vector<64x128xf32>
    %7 = tpu.iota {dimensions = array<i32: 1>} : vector<64x128xi32>
    %c32_i32 = arith.constant 32 : i32
    %8 = vector.broadcast %c32_i32 : i32 to vector<64x128xi32>
    %9 = arith.cmpi slt, %7, %8 : vector<64x128xi32>
    %cst_2 = arith.constant 0.000000e+00 : f32
    %10 = vector.broadcast %cst_2 : f32 to vector<64x128xf32>
    %11 = arith.select %9, %6, %10 : vector<64x128xi1>, vector<64x128xf32>
    %12 = arith.mulf %11, %11 : vector<64x128xf32>
    %cst_3 = arith.constant dense<0.000000e+00> : vector<64xf32>
    %13 = vector.multi_reduction <add>, %12, %cst_3 [1] : vector<64x128xf32> to vector<64xf32>
    %14 = vector.shape_cast %13 : vector<64xf32> to vector<64x1xf32>
    %cst_4 = arith.constant 3.125000e-02 : f32
    %15 = vector.broadcast %cst_4 : f32 to vector<64x1xf32>
    %16 = arith.mulf %14, %15 : vector<64x1xf32>
    %cst_5 = arith.constant 9.99999974E-6 : f32
    %17 = vector.broadcast %cst_5 : f32 to vector<64x1xf32>
    %18 = arith.addf %16, %17 : vector<64x1xf32>
    %19 = math.rsqrt %18 : vector<64x1xf32>
    %20 = vector.broadcast %19 : vector<64x1xf32> to vector<64x128xf32>
    %21 = arith.mulf %11, %20 : vector<64x128xf32>
    %c0_6 = arith.constant 0 : index
    %c0_7 = arith.constant 0 : index
    %22 = vector.load %arg2[%c0_6, %c0_7] : memref<1x128xf32, #tpu.memory_space<vmem>>, vector<1x128xf32>
    %23 = vector.broadcast %22 : vector<1x128xf32> to vector<64x128xf32>
    %24 = arith.mulf %21, %23 : vector<64x128xf32>
    %c0_8 = arith.constant 0 : index
    %c0_9 = arith.constant 0 : index
    %25 = vector.load %arg3[%c0_8, %c0_9] : memref<1x128xf32, #tpu.memory_space<vmem>>, vector<1x128xf32>
    %26 = vector.broadcast %25 : vector<1x128xf32> to vector<64x128xf32>
    %27 = arith.addf %24, %26 : vector<64x128xf32>
    %cst_10 = arith.constant 5.000000e-01 : f32
    %28 = vector.broadcast %cst_10 : f32 to vector<64x128xf32>
    %29 = arith.mulf %28, %27 : vector<64x128xf32>
    %cst_11 = arith.constant 0.707106769 : f32
    %30 = vector.broadcast %cst_11 : f32 to vector<64x128xf32>
    %31 = arith.mulf %27, %30 : vector<64x128xf32>
    %cst_12 = arith.constant 0.000000e+00 : f32
    %32 = vector.broadcast %cst_12 : f32 to vector<64x128xf32>
    %33 = arith.cmpf oge, %31, %32 : vector<64x128xf32>
    %cst_13 = arith.constant 1.000000e+00 : f32
    %cst_14 = arith.constant -1.000000e+00 : f32
    %34 = vector.broadcast %cst_13 : f32 to vector<64x128xf32>
    %35 = vector.broadcast %cst_14 : f32 to vector<64x128xf32>
    %36 = arith.select %33, %34, %35 : vector<64x128xi1>, vector<64x128xf32>
    %37 = math.absf %31 : vector<64x128xf32>
    %cst_15 = arith.constant 0.327591091 : f32
    %38 = vector.broadcast %cst_15 : f32 to vector<64x128xf32>
    %39 = arith.mulf %38, %37 : vector<64x128xf32>
    %cst_16 = arith.constant 1.000000e+00 : f32
    %40 = vector.broadcast %cst_16 : f32 to vector<64x128xf32>
    %41 = arith.addf %40, %39 : vector<64x128xf32>
    %cst_17 = arith.constant 1.000000e+00 : f32
    %42 = vector.broadcast %cst_17 : f32 to vector<64x128xf32>
    %43 = arith.divf %42, %41 : vector<64x128xf32>
    %cst_18 = arith.constant 1.06140542 : f32
    %44 = vector.broadcast %cst_18 : f32 to vector<64x128xf32>
    %45 = arith.mulf %44, %43 : vector<64x128xf32>
    %cst_19 = arith.constant -1.45315206 : f32
    %46 = vector.broadcast %cst_19 : f32 to vector<64x128xf32>
    %47 = arith.addf %45, %46 : vector<64x128xf32>
    %48 = arith.mulf %47, %43 : vector<64x128xf32>
    %cst_20 = arith.constant 1.42141378 : f32
    %49 = vector.broadcast %cst_20 : f32 to vector<64x128xf32>
    %50 = arith.addf %48, %49 : vector<64x128xf32>
    %51 = arith.mulf %50, %43 : vector<64x128xf32>
    %cst_21 = arith.constant -0.284496725 : f32
    %52 = vector.broadcast %cst_21 : f32 to vector<64x128xf32>
    %53 = arith.addf %51, %52 : vector<64x128xf32>
    %54 = arith.mulf %53, %43 : vector<64x128xf32>
    %cst_22 = arith.constant 0.254829586 : f32
    %55 = vector.broadcast %cst_22 : f32 to vector<64x128xf32>
    %56 = arith.addf %54, %55 : vector<64x128xf32>
    %57 = arith.mulf %56, %43 : vector<64x128xf32>
    %cst_23 = arith.constant 0.000000e+00 : f32
    %58 = vector.broadcast %cst_23 : f32 to vector<64x128xf32>
    %59 = arith.subf %58, %37 : vector<64x128xf32>
    %60 = arith.mulf %59, %37 : vector<64x128xf32>
    %61 = math.exp %60 : vector<64x128xf32>
    %62 = arith.mulf %57, %61 : vector<64x128xf32>
    %cst_24 = arith.constant 1.000000e+00 : f32
    %63 = vector.broadcast %cst_24 : f32 to vector<64x128xf32>
    %64 = arith.subf %63, %62 : vector<64x128xf32>
    %65 = arith.mulf %36, %64 : vector<64x128xf32>
    %cst_25 = arith.constant 1.000000e+00 : f32
    %66 = vector.broadcast %cst_25 : f32 to vector<64x128xf32>
    %67 = arith.addf %66, %65 : vector<64x128xf32>
    %68 = arith.mulf %29, %67 : vector<64x128xf32>
    %69 = arith.truncf %68 : vector<64x128xf32> to vector<64x128xbf16>
    %c0_26 = arith.constant 0 : index
    %c0_27 = arith.constant 0 : index
    %70 = vector.load %arg4[%c0_26, %c0_27] : memref<128x768xbf16, #tpu.memory_space<vmem>>, vector<128x768xbf16>
    %cst_28 = arith.constant dense<0.000000e+00> : vector<64x768xf32>
    %71 = tpu.matmul %69, %70, %cst_28 {dimension_numbers = #tpu.dot_dimension_numbers<[1], [0], [0], [1], [0, 0, 1, 1], [], []>} : vector<64x128xbf16>, vector<128x768xbf16>, vector<64x768xf32> -> vector<64x768xf32>
    %c0_29 = arith.constant 0 : index
    %c0_30 = arith.constant 0 : index
    %72 = vector.load %arg5[%c0_29, %c0_30] : memref<1x768xf32, #tpu.memory_space<vmem>>, vector<1x768xf32>
    %73 = vector.broadcast %72 : vector<1x768xf32> to vector<64x768xf32>
    %74 = arith.addf %71, %73 : vector<64x768xf32>
    %c0_31 = arith.constant 0 : index
    %c0_32 = arith.constant 0 : index
    %75 = vector.load %arg6[%c0_31, %c0_32] : memref<64x768xf32, #tpu.memory_space<vmem>>, vector<64x768xf32>
    tpu.vector_store %arg6[%c0_31, %c0_32], %74 {strides = array<i32>} : memref<64x768xf32, #tpu.memory_space<vmem>>, vector<64x768xf32>,
    return
  }
  func.func @transform_0(%arg0: i32) -> (i32, i32) {
    %c0_i32 = arith.constant 0 : i32
    %c0_i32_0 = arith.constant 0 : i32
    return %arg0, %c0_i32 : i32, i32
  }
  func.func @transform_1(%arg0: i32) -> (i32, i32) {
    %c0_i32 = arith.constant 0 : i32
    %c0_i32_0 = arith.constant 0 : i32
    %c0_i32_1 = arith.constant 0 : i32
    return %c0_i32, %c0_i32_0 : i32, i32
  }
  func.func @transform_2(%arg0: i32) -> (i32, i32) {
    %c0_i32 = arith.constant 0 : i32
    %c0_i32_0 = arith.constant 0 : i32
    %c0_i32_1 = arith.constant 0 : i32
    return %c0_i32, %c0_i32_0 : i32, i32
  }
  func.func @transform_3(%arg0: i32) -> (i32, i32) {
    %c0_i32 = arith.constant 0 : i32
    %c0_i32_0 = arith.constant 0 : i32
    %c0_i32_1 = arith.constant 0 : i32
    return %c0_i32, %c0_i32_0 : i32, i32
  }
  func.func @transform_4(%arg0: i32) -> (i32, i32) {
    %c0_i32 = arith.constant 0 : i32
    %c0_i32_0 = arith.constant 0 : i32
    %c0_i32_1 = arith.constant 0 : i32
    return %c0_i32, %c0_i32_0 : i32, i32
  }
  func.func @transform_5(%arg0: i32) -> (i32, i32) {
    %c0_i32 = arith.constant 0 : i32
    %c0_i32_0 = arith.constant 0 : i32
    return %arg0, %c0_i32 : i32, i32
  }
}

module attributes {stable_mosaic.version = 11 : i64} {
  func.func @bigru_kernel(%arg0: i32, %arg1: i32, %arg2: memref<1x8x8x384xf32, #tpu.memory_space<vmem>>, %arg3: memref<1x128x384xf32, #tpu.memory_space<vmem>>, %arg4: memref<1x1x384xf32, #tpu.memory_space<vmem>>, %arg5: memref<1x8x8x128xf32, #tpu.memory_space<vmem>>, %arg6: memref<8x128xf32, #tpu.memory_space<vmem>>) attributes {dimension_semantics = [#tpu.dimension_semantics<parallel>, #tpu.dimension_semantics<arbitrary>], iteration_bounds = array<i64: 2, 1>, scalar_prefetch = 0 : i64, scratch_operands = 1 : i64, tpu.core_type = #tpu.core_type<tc>, window_params = [{transform_indices = @transform_0, window_bounds = array<i64: 1, 8, 8, 384>}, {transform_indices = @transform_1, window_bounds = array<i64: 1, 128, 384>}, {transform_indices = @transform_2, window_bounds = array<i64: 1, 1, 384>}, {transform_indices = @transform_3, window_bounds = array<i64: 1, 8, 8, 128>}]} {
    %c0_i32 = arith.constant 0 : i32
    %0 = arith.cmpi eq, %arg1, %c0_i32 : i32
    %1 = arith.extui %0 : i1 to i32
    %c0_i32_0 = arith.constant 0 : i32
    %2 = arith.cmpi ne, %1, %c0_i32_0 : i32
    scf.if %2 {
      %cst_90 = arith.constant 0.000000e+00 : f32
      %297 = vector.broadcast %cst_90 : f32 to vector<8x128xf32>
      %c0_91 = arith.constant 0 : index
      %c0_92 = arith.constant 0 : index
      %298 = vector.load %arg6[%c0_91, %c0_92] : memref<8x128xf32, #tpu.memory_space<vmem>>, vector<8x128xf32>
      tpu.vector_store %arg6[%c0_91, %c0_92], %297 {strides = array<i32>} : memref<8x128xf32, #tpu.memory_space<vmem>>, vector<8x128xf32>,
    } else {
    }
    %c0 = arith.constant 0 : index
    %c0_1 = arith.constant 0 : index
    %c0_2 = arith.constant 0 : index
    %3 = vector.load %arg3[%c0, %c0_1, %c0_2] : memref<1x128x384xf32, #tpu.memory_space<vmem>>, vector<1x128x384xf32>
    %4 = vector.shape_cast %3 : vector<1x128x384xf32> to vector<128x384xf32>
    %c0_3 = arith.constant 0 : index
    %c0_4 = arith.constant 0 : index
    %c0_5 = arith.constant 0 : index
    %5 = vector.load %arg4[%c0_3, %c0_4, %c0_5] : memref<1x1x384xf32, #tpu.memory_space<vmem>>, vector<1x1x384xf32>
    %6 = vector.shape_cast %5 : vector<1x1x384xf32> to vector<1x384xf32>
    %c0_6 = arith.constant 0 : index
    %c0_7 = arith.constant 0 : index
    %7 = vector.load %arg6[%c0_6, %c0_7] : memref<8x128xf32, #tpu.memory_space<vmem>>, vector<8x128xf32>
    %c0_i32_8 = arith.constant 0 : i32
    %cst = arith.constant dense<0.000000e+00> : vector<8x384xf32>
    %8 = tpu.matmul %7, %4, %cst {dimension_numbers = #tpu.dot_dimension_numbers<[1], [0], [0], [1], [0, 0, 1, 1], [], []>} : vector<8x128xf32>, vector<128x384xf32>, vector<8x384xf32> -> vector<8x384xf32>
    %9 = vector.broadcast %6 : vector<1x384xf32> to vector<8x384xf32>
    %10 = arith.addf %8, %9 : vector<8x384xf32>
    %c0_9 = arith.constant 0 : index
    %11 = arith.index_cast %c0_i32_8 : i32 to index
    %c0_10 = arith.constant 0 : index
    %c0_11 = arith.constant 0 : index
    %12 = vector.load %arg2[%c0_9, %11, %c0_10, %c0_11] : memref<1x8x8x384xf32, #tpu.memory_space<vmem>>, vector<1x1x8x384xf32>
    %13 = vector.shape_cast %12 : vector<1x1x8x384xf32> to vector<8x384xf32>
    %14 = vector.extract_strided_slice %13 {offsets = [0, 0], sizes = [8, 128], strides = [1, 1]} : vector<8x384xf32> to vector<8x128xf32>
    %15 = vector.extract_strided_slice %10 {offsets = [0, 0], sizes = [8, 128], strides = [1, 1]} : vector<8x384xf32> to vector<8x128xf32>
    %16 = arith.addf %14, %15 : vector<8x128xf32>
    %17 = arith.negf %16 : vector<8x128xf32>
    %18 = math.exp %17 : vector<8x128xf32>
    %cst_12 = arith.constant 1.000000e+00 : f32
    %19 = vector.broadcast %cst_12 : f32 to vector<8x128xf32>
    %20 = arith.addf %19, %18 : vector<8x128xf32>
    %21 = arith.divf %19, %20 : vector<8x128xf32>
    %22 = vector.extract_strided_slice %13 {offsets = [0, 128], sizes = [8, 128], strides = [1, 1]} : vector<8x384xf32> to vector<8x128xf32>
    %23 = vector.extract_strided_slice %10 {offsets = [0, 128], sizes = [8, 128], strides = [1, 1]} : vector<8x384xf32> to vector<8x128xf32>
    %24 = arith.addf %22, %23 : vector<8x128xf32>
    %25 = arith.negf %24 : vector<8x128xf32>
    %26 = math.exp %25 : vector<8x128xf32>
    %cst_13 = arith.constant 1.000000e+00 : f32
    %27 = vector.broadcast %cst_13 : f32 to vector<8x128xf32>
    %28 = arith.addf %27, %26 : vector<8x128xf32>
    %29 = arith.divf %27, %28 : vector<8x128xf32>
    %30 = vector.extract_strided_slice %13 {offsets = [0, 256], sizes = [8, 128], strides = [1, 1]} : vector<8x384xf32> to vector<8x128xf32>
    %31 = vector.extract_strided_slice %10 {offsets = [0, 256], sizes = [8, 128], strides = [1, 1]} : vector<8x384xf32> to vector<8x128xf32>
    %32 = arith.mulf %21, %31 : vector<8x128xf32>
    %33 = arith.addf %30, %32 : vector<8x128xf32>
    %34 = math.tanh %33 : vector<8x128xf32>
    %cst_14 = arith.constant 1.000000e+00 : f32
    %35 = vector.broadcast %cst_14 : f32 to vector<8x128xf32>
    %36 = arith.subf %35, %29 : vector<8x128xf32>
    %37 = arith.mulf %36, %34 : vector<8x128xf32>
    %38 = arith.mulf %29, %7 : vector<8x128xf32>
    %39 = arith.addf %37, %38 : vector<8x128xf32>
    %c0_15 = arith.constant 0 : index
    %40 = arith.index_cast %c0_i32_8 : i32 to index
    %c0_16 = arith.constant 0 : index
    %c0_17 = arith.constant 0 : index
    %41 = vector.load %arg5[%c0_15, %40, %c0_16, %c0_17] : memref<1x8x8x128xf32, #tpu.memory_space<vmem>>, vector<1x1x8x128xf32>
    %42 = vector.shape_cast %41 : vector<1x1x8x128xf32> to vector<8x128xf32>
    %43 = vector.shape_cast %39 : vector<8x128xf32> to vector<1x1x8x128xf32>
    tpu.vector_store %arg5[%c0_15, %40, %c0_16, %c0_17], %43 {strides = array<i32>} : memref<1x8x8x128xf32, #tpu.memory_space<vmem>>, vector<1x1x8x128xf32>,
    %c1_i32 = arith.constant 1 : i32
    %cst_18 = arith.constant dense<0.000000e+00> : vector<8x384xf32>
    %44 = tpu.matmul %39, %4, %cst_18 {dimension_numbers = #tpu.dot_dimension_numbers<[1], [0], [0], [1], [0, 0, 1, 1], [], []>} : vector<8x128xf32>, vector<128x384xf32>, vector<8x384xf32> -> vector<8x384xf32>
    %45 = vector.broadcast %6 : vector<1x384xf32> to vector<8x384xf32>
    %46 = arith.addf %44, %45 : vector<8x384xf32>
    %c0_19 = arith.constant 0 : index
    %47 = arith.index_cast %c1_i32 : i32 to index
    %c0_20 = arith.constant 0 : index
    %c0_21 = arith.constant 0 : index
    %48 = vector.load %arg2[%c0_19, %47, %c0_20, %c0_21] : memref<1x8x8x384xf32, #tpu.memory_space<vmem>>, vector<1x1x8x384xf32>
    %49 = vector.shape_cast %48 : vector<1x1x8x384xf32> to vector<8x384xf32>
    %50 = vector.extract_strided_slice %49 {offsets = [0, 0], sizes = [8, 128], strides = [1, 1]} : vector<8x384xf32> to vector<8x128xf32>
    %51 = vector.extract_strided_slice %46 {offsets = [0, 0], sizes = [8, 128], strides = [1, 1]} : vector<8x384xf32> to vector<8x128xf32>
    %52 = arith.addf %50, %51 : vector<8x128xf32>
    %53 = arith.negf %52 : vector<8x128xf32>
    %54 = math.exp %53 : vector<8x128xf32>
    %cst_22 = arith.constant 1.000000e+00 : f32
    %55 = vector.broadcast %cst_22 : f32 to vector<8x128xf32>
    %56 = arith.addf %55, %54 : vector<8x128xf32>
    %57 = arith.divf %55, %56 : vector<8x128xf32>
    %58 = vector.extract_strided_slice %49 {offsets = [0, 128], sizes = [8, 128], strides = [1, 1]} : vector<8x384xf32> to vector<8x128xf32>
    %59 = vector.extract_strided_slice %46 {offsets = [0, 128], sizes = [8, 128], strides = [1, 1]} : vector<8x384xf32> to vector<8x128xf32>
    %60 = arith.addf %58, %59 : vector<8x128xf32>
    %61 = arith.negf %60 : vector<8x128xf32>
    %62 = math.exp %61 : vector<8x128xf32>
    %cst_23 = arith.constant 1.000000e+00 : f32
    %63 = vector.broadcast %cst_23 : f32 to vector<8x128xf32>
    %64 = arith.addf %63, %62 : vector<8x128xf32>
    %65 = arith.divf %63, %64 : vector<8x128xf32>
    %66 = vector.extract_strided_slice %49 {offsets = [0, 256], sizes = [8, 128], strides = [1, 1]} : vector<8x384xf32> to vector<8x128xf32>
    %67 = vector.extract_strided_slice %46 {offsets = [0, 256], sizes = [8, 128], strides = [1, 1]} : vector<8x384xf32> to vector<8x128xf32>
    %68 = arith.mulf %57, %67 : vector<8x128xf32>
    %69 = arith.addf %66, %68 : vector<8x128xf32>
    %70 = math.tanh %69 : vector<8x128xf32>
    %cst_24 = arith.constant 1.000000e+00 : f32
    %71 = vector.broadcast %cst_24 : f32 to vector<8x128xf32>
    %72 = arith.subf %71, %65 : vector<8x128xf32>
    %73 = arith.mulf %72, %70 : vector<8x128xf32>
    %74 = arith.mulf %65, %39 : vector<8x128xf32>
    %75 = arith.addf %73, %74 : vector<8x128xf32>
    %c0_25 = arith.constant 0 : index
    %76 = arith.index_cast %c1_i32 : i32 to index
    %c0_26 = arith.constant 0 : index
    %c0_27 = arith.constant 0 : index
    %77 = vector.load %arg5[%c0_25, %76, %c0_26, %c0_27] : memref<1x8x8x128xf32, #tpu.memory_space<vmem>>, vector<1x1x8x128xf32>
    %78 = vector.shape_cast %77 : vector<1x1x8x128xf32> to vector<8x128xf32>
    %79 = vector.shape_cast %75 : vector<8x128xf32> to vector<1x1x8x128xf32>
    tpu.vector_store %arg5[%c0_25, %76, %c0_26, %c0_27], %79 {strides = array<i32>} : memref<1x8x8x128xf32, #tpu.memory_space<vmem>>, vector<1x1x8x128xf32>,
    %c2_i32 = arith.constant 2 : i32
    %cst_28 = arith.constant dense<0.000000e+00> : vector<8x384xf32>
    %80 = tpu.matmul %75, %4, %cst_28 {dimension_numbers = #tpu.dot_dimension_numbers<[1], [0], [0], [1], [0, 0, 1, 1], [], []>} : vector<8x128xf32>, vector<128x384xf32>, vector<8x384xf32> -> vector<8x384xf32>
    %81 = vector.broadcast %6 : vector<1x384xf32> to vector<8x384xf32>
    %82 = arith.addf %80, %81 : vector<8x384xf32>
    %c0_29 = arith.constant 0 : index
    %83 = arith.index_cast %c2_i32 : i32 to index
    %c0_30 = arith.constant 0 : index
    %c0_31 = arith.constant 0 : index
    %84 = vector.load %arg2[%c0_29, %83, %c0_30, %c0_31] : memref<1x8x8x384xf32, #tpu.memory_space<vmem>>, vector<1x1x8x384xf32>
    %85 = vector.shape_cast %84 : vector<1x1x8x384xf32> to vector<8x384xf32>
    %86 = vector.extract_strided_slice %85 {offsets = [0, 0], sizes = [8, 128], strides = [1, 1]} : vector<8x384xf32> to vector<8x128xf32>
    %87 = vector.extract_strided_slice %82 {offsets = [0, 0], sizes = [8, 128], strides = [1, 1]} : vector<8x384xf32> to vector<8x128xf32>
    %88 = arith.addf %86, %87 : vector<8x128xf32>
    %89 = arith.negf %88 : vector<8x128xf32>
    %90 = math.exp %89 : vector<8x128xf32>
    %cst_32 = arith.constant 1.000000e+00 : f32
    %91 = vector.broadcast %cst_32 : f32 to vector<8x128xf32>
    %92 = arith.addf %91, %90 : vector<8x128xf32>
    %93 = arith.divf %91, %92 : vector<8x128xf32>
    %94 = vector.extract_strided_slice %85 {offsets = [0, 128], sizes = [8, 128], strides = [1, 1]} : vector<8x384xf32> to vector<8x128xf32>
    %95 = vector.extract_strided_slice %82 {offsets = [0, 128], sizes = [8, 128], strides = [1, 1]} : vector<8x384xf32> to vector<8x128xf32>
    %96 = arith.addf %94, %95 : vector<8x128xf32>
    %97 = arith.negf %96 : vector<8x128xf32>
    %98 = math.exp %97 : vector<8x128xf32>
    %cst_33 = arith.constant 1.000000e+00 : f32
    %99 = vector.broadcast %cst_33 : f32 to vector<8x128xf32>
    %100 = arith.addf %99, %98 : vector<8x128xf32>
    %101 = arith.divf %99, %100 : vector<8x128xf32>
    %102 = vector.extract_strided_slice %85 {offsets = [0, 256], sizes = [8, 128], strides = [1, 1]} : vector<8x384xf32> to vector<8x128xf32>
    %103 = vector.extract_strided_slice %82 {offsets = [0, 256], sizes = [8, 128], strides = [1, 1]} : vector<8x384xf32> to vector<8x128xf32>
    %104 = arith.mulf %93, %103 : vector<8x128xf32>
    %105 = arith.addf %102, %104 : vector<8x128xf32>
    %106 = math.tanh %105 : vector<8x128xf32>
    %cst_34 = arith.constant 1.000000e+00 : f32
    %107 = vector.broadcast %cst_34 : f32 to vector<8x128xf32>
    %108 = arith.subf %107, %101 : vector<8x128xf32>
    %109 = arith.mulf %108, %106 : vector<8x128xf32>
    %110 = arith.mulf %101, %75 : vector<8x128xf32>
    %111 = arith.addf %109, %110 : vector<8x128xf32>
    %c0_35 = arith.constant 0 : index
    %112 = arith.index_cast %c2_i32 : i32 to index
    %c0_36 = arith.constant 0 : index
    %c0_37 = arith.constant 0 : index
    %113 = vector.load %arg5[%c0_35, %112, %c0_36, %c0_37] : memref<1x8x8x128xf32, #tpu.memory_space<vmem>>, vector<1x1x8x128xf32>
    %114 = vector.shape_cast %113 : vector<1x1x8x128xf32> to vector<8x128xf32>
    %115 = vector.shape_cast %111 : vector<8x128xf32> to vector<1x1x8x128xf32>
    tpu.vector_store %arg5[%c0_35, %112, %c0_36, %c0_37], %115 {strides = array<i32>} : memref<1x8x8x128xf32, #tpu.memory_space<vmem>>, vector<1x1x8x128xf32>,
    %c3_i32 = arith.constant 3 : i32
    %cst_38 = arith.constant dense<0.000000e+00> : vector<8x384xf32>
    %116 = tpu.matmul %111, %4, %cst_38 {dimension_numbers = #tpu.dot_dimension_numbers<[1], [0], [0], [1], [0, 0, 1, 1], [], []>} : vector<8x128xf32>, vector<128x384xf32>, vector<8x384xf32> -> vector<8x384xf32>
    %117 = vector.broadcast %6 : vector<1x384xf32> to vector<8x384xf32>
    %118 = arith.addf %116, %117 : vector<8x384xf32>
    %c0_39 = arith.constant 0 : index
    %119 = arith.index_cast %c3_i32 : i32 to index
    %c0_40 = arith.constant 0 : index
    %c0_41 = arith.constant 0 : index
    %120 = vector.load %arg2[%c0_39, %119, %c0_40, %c0_41] : memref<1x8x8x384xf32, #tpu.memory_space<vmem>>, vector<1x1x8x384xf32>
    %121 = vector.shape_cast %120 : vector<1x1x8x384xf32> to vector<8x384xf32>
    %122 = vector.extract_strided_slice %121 {offsets = [0, 0], sizes = [8, 128], strides = [1, 1]} : vector<8x384xf32> to vector<8x128xf32>
    %123 = vector.extract_strided_slice %118 {offsets = [0, 0], sizes = [8, 128], strides = [1, 1]} : vector<8x384xf32> to vector<8x128xf32>
    %124 = arith.addf %122, %123 : vector<8x128xf32>
    %125 = arith.negf %124 : vector<8x128xf32>
    %126 = math.exp %125 : vector<8x128xf32>
    %cst_42 = arith.constant 1.000000e+00 : f32
    %127 = vector.broadcast %cst_42 : f32 to vector<8x128xf32>
    %128 = arith.addf %127, %126 : vector<8x128xf32>
    %129 = arith.divf %127, %128 : vector<8x128xf32>
    %130 = vector.extract_strided_slice %121 {offsets = [0, 128], sizes = [8, 128], strides = [1, 1]} : vector<8x384xf32> to vector<8x128xf32>
    %131 = vector.extract_strided_slice %118 {offsets = [0, 128], sizes = [8, 128], strides = [1, 1]} : vector<8x384xf32> to vector<8x128xf32>
    %132 = arith.addf %130, %131 : vector<8x128xf32>
    %133 = arith.negf %132 : vector<8x128xf32>
    %134 = math.exp %133 : vector<8x128xf32>
    %cst_43 = arith.constant 1.000000e+00 : f32
    %135 = vector.broadcast %cst_43 : f32 to vector<8x128xf32>
    %136 = arith.addf %135, %134 : vector<8x128xf32>
    %137 = arith.divf %135, %136 : vector<8x128xf32>
    %138 = vector.extract_strided_slice %121 {offsets = [0, 256], sizes = [8, 128], strides = [1, 1]} : vector<8x384xf32> to vector<8x128xf32>
    %139 = vector.extract_strided_slice %118 {offsets = [0, 256], sizes = [8, 128], strides = [1, 1]} : vector<8x384xf32> to vector<8x128xf32>
    %140 = arith.mulf %129, %139 : vector<8x128xf32>
    %141 = arith.addf %138, %140 : vector<8x128xf32>
    %142 = math.tanh %141 : vector<8x128xf32>
    %cst_44 = arith.constant 1.000000e+00 : f32
    %143 = vector.broadcast %cst_44 : f32 to vector<8x128xf32>
    %144 = arith.subf %143, %137 : vector<8x128xf32>
    %145 = arith.mulf %144, %142 : vector<8x128xf32>
    %146 = arith.mulf %137, %111 : vector<8x128xf32>
    %147 = arith.addf %145, %146 : vector<8x128xf32>
    %c0_45 = arith.constant 0 : index
    %148 = arith.index_cast %c3_i32 : i32 to index
    %c0_46 = arith.constant 0 : index
    %c0_47 = arith.constant 0 : index
    %149 = vector.load %arg5[%c0_45, %148, %c0_46, %c0_47] : memref<1x8x8x128xf32, #tpu.memory_space<vmem>>, vector<1x1x8x128xf32>
    %150 = vector.shape_cast %149 : vector<1x1x8x128xf32> to vector<8x128xf32>
    %151 = vector.shape_cast %147 : vector<8x128xf32> to vector<1x1x8x128xf32>
    tpu.vector_store %arg5[%c0_45, %148, %c0_46, %c0_47], %151 {strides = array<i32>} : memref<1x8x8x128xf32, #tpu.memory_space<vmem>>, vector<1x1x8x128xf32>,
    %c4_i32 = arith.constant 4 : i32
    %cst_48 = arith.constant dense<0.000000e+00> : vector<8x384xf32>
    %152 = tpu.matmul %147, %4, %cst_48 {dimension_numbers = #tpu.dot_dimension_numbers<[1], [0], [0], [1], [0, 0, 1, 1], [], []>} : vector<8x128xf32>, vector<128x384xf32>, vector<8x384xf32> -> vector<8x384xf32>
    %153 = vector.broadcast %6 : vector<1x384xf32> to vector<8x384xf32>
    %154 = arith.addf %152, %153 : vector<8x384xf32>
    %c0_49 = arith.constant 0 : index
    %155 = arith.index_cast %c4_i32 : i32 to index
    %c0_50 = arith.constant 0 : index
    %c0_51 = arith.constant 0 : index
    %156 = vector.load %arg2[%c0_49, %155, %c0_50, %c0_51] : memref<1x8x8x384xf32, #tpu.memory_space<vmem>>, vector<1x1x8x384xf32>
    %157 = vector.shape_cast %156 : vector<1x1x8x384xf32> to vector<8x384xf32>
    %158 = vector.extract_strided_slice %157 {offsets = [0, 0], sizes = [8, 128], strides = [1, 1]} : vector<8x384xf32> to vector<8x128xf32>
    %159 = vector.extract_strided_slice %154 {offsets = [0, 0], sizes = [8, 128], strides = [1, 1]} : vector<8x384xf32> to vector<8x128xf32>
    %160 = arith.addf %158, %159 : vector<8x128xf32>
    %161 = arith.negf %160 : vector<8x128xf32>
    %162 = math.exp %161 : vector<8x128xf32>
    %cst_52 = arith.constant 1.000000e+00 : f32
    %163 = vector.broadcast %cst_52 : f32 to vector<8x128xf32>
    %164 = arith.addf %163, %162 : vector<8x128xf32>
    %165 = arith.divf %163, %164 : vector<8x128xf32>
    %166 = vector.extract_strided_slice %157 {offsets = [0, 128], sizes = [8, 128], strides = [1, 1]} : vector<8x384xf32> to vector<8x128xf32>
    %167 = vector.extract_strided_slice %154 {offsets = [0, 128], sizes = [8, 128], strides = [1, 1]} : vector<8x384xf32> to vector<8x128xf32>
    %168 = arith.addf %166, %167 : vector<8x128xf32>
    %169 = arith.negf %168 : vector<8x128xf32>
    %170 = math.exp %169 : vector<8x128xf32>
    %cst_53 = arith.constant 1.000000e+00 : f32
    %171 = vector.broadcast %cst_53 : f32 to vector<8x128xf32>
    %172 = arith.addf %171, %170 : vector<8x128xf32>
    %173 = arith.divf %171, %172 : vector<8x128xf32>
    %174 = vector.extract_strided_slice %157 {offsets = [0, 256], sizes = [8, 128], strides = [1, 1]} : vector<8x384xf32> to vector<8x128xf32>
    %175 = vector.extract_strided_slice %154 {offsets = [0, 256], sizes = [8, 128], strides = [1, 1]} : vector<8x384xf32> to vector<8x128xf32>
    %176 = arith.mulf %165, %175 : vector<8x128xf32>
    %177 = arith.addf %174, %176 : vector<8x128xf32>
    %178 = math.tanh %177 : vector<8x128xf32>
    %cst_54 = arith.constant 1.000000e+00 : f32
    %179 = vector.broadcast %cst_54 : f32 to vector<8x128xf32>
    %180 = arith.subf %179, %173 : vector<8x128xf32>
    %181 = arith.mulf %180, %178 : vector<8x128xf32>
    %182 = arith.mulf %173, %147 : vector<8x128xf32>
    %183 = arith.addf %181, %182 : vector<8x128xf32>
    %c0_55 = arith.constant 0 : index
    %184 = arith.index_cast %c4_i32 : i32 to index
    %c0_56 = arith.constant 0 : index
    %c0_57 = arith.constant 0 : index
    %185 = vector.load %arg5[%c0_55, %184, %c0_56, %c0_57] : memref<1x8x8x128xf32, #tpu.memory_space<vmem>>, vector<1x1x8x128xf32>
    %186 = vector.shape_cast %185 : vector<1x1x8x128xf32> to vector<8x128xf32>
    %187 = vector.shape_cast %183 : vector<8x128xf32> to vector<1x1x8x128xf32>
    tpu.vector_store %arg5[%c0_55, %184, %c0_56, %c0_57], %187 {strides = array<i32>} : memref<1x8x8x128xf32, #tpu.memory_space<vmem>>, vector<1x1x8x128xf32>,
    %c5_i32 = arith.constant 5 : i32
    %cst_58 = arith.constant dense<0.000000e+00> : vector<8x384xf32>
    %188 = tpu.matmul %183, %4, %cst_58 {dimension_numbers = #tpu.dot_dimension_numbers<[1], [0], [0], [1], [0, 0, 1, 1], [], []>} : vector<8x128xf32>, vector<128x384xf32>, vector<8x384xf32> -> vector<8x384xf32>
    %189 = vector.broadcast %6 : vector<1x384xf32> to vector<8x384xf32>
    %190 = arith.addf %188, %189 : vector<8x384xf32>
    %c0_59 = arith.constant 0 : index
    %191 = arith.index_cast %c5_i32 : i32 to index
    %c0_60 = arith.constant 0 : index
    %c0_61 = arith.constant 0 : index
    %192 = vector.load %arg2[%c0_59, %191, %c0_60, %c0_61] : memref<1x8x8x384xf32, #tpu.memory_space<vmem>>, vector<1x1x8x384xf32>
    %193 = vector.shape_cast %192 : vector<1x1x8x384xf32> to vector<8x384xf32>
    %194 = vector.extract_strided_slice %193 {offsets = [0, 0], sizes = [8, 128], strides = [1, 1]} : vector<8x384xf32> to vector<8x128xf32>
    %195 = vector.extract_strided_slice %190 {offsets = [0, 0], sizes = [8, 128], strides = [1, 1]} : vector<8x384xf32> to vector<8x128xf32>
    %196 = arith.addf %194, %195 : vector<8x128xf32>
    %197 = arith.negf %196 : vector<8x128xf32>
    %198 = math.exp %197 : vector<8x128xf32>
    %cst_62 = arith.constant 1.000000e+00 : f32
    %199 = vector.broadcast %cst_62 : f32 to vector<8x128xf32>
    %200 = arith.addf %199, %198 : vector<8x128xf32>
    %201 = arith.divf %199, %200 : vector<8x128xf32>
    %202 = vector.extract_strided_slice %193 {offsets = [0, 128], sizes = [8, 128], strides = [1, 1]} : vector<8x384xf32> to vector<8x128xf32>
    %203 = vector.extract_strided_slice %190 {offsets = [0, 128], sizes = [8, 128], strides = [1, 1]} : vector<8x384xf32> to vector<8x128xf32>
    %204 = arith.addf %202, %203 : vector<8x128xf32>
    %205 = arith.negf %204 : vector<8x128xf32>
    %206 = math.exp %205 : vector<8x128xf32>
    %cst_63 = arith.constant 1.000000e+00 : f32
    %207 = vector.broadcast %cst_63 : f32 to vector<8x128xf32>
    %208 = arith.addf %207, %206 : vector<8x128xf32>
    %209 = arith.divf %207, %208 : vector<8x128xf32>
    %210 = vector.extract_strided_slice %193 {offsets = [0, 256], sizes = [8, 128], strides = [1, 1]} : vector<8x384xf32> to vector<8x128xf32>
    %211 = vector.extract_strided_slice %190 {offsets = [0, 256], sizes = [8, 128], strides = [1, 1]} : vector<8x384xf32> to vector<8x128xf32>
    %212 = arith.mulf %201, %211 : vector<8x128xf32>
    %213 = arith.addf %210, %212 : vector<8x128xf32>
    %214 = math.tanh %213 : vector<8x128xf32>
    %cst_64 = arith.constant 1.000000e+00 : f32
    %215 = vector.broadcast %cst_64 : f32 to vector<8x128xf32>
    %216 = arith.subf %215, %209 : vector<8x128xf32>
    %217 = arith.mulf %216, %214 : vector<8x128xf32>
    %218 = arith.mulf %209, %183 : vector<8x128xf32>
    %219 = arith.addf %217, %218 : vector<8x128xf32>
    %c0_65 = arith.constant 0 : index
    %220 = arith.index_cast %c5_i32 : i32 to index
    %c0_66 = arith.constant 0 : index
    %c0_67 = arith.constant 0 : index
    %221 = vector.load %arg5[%c0_65, %220, %c0_66, %c0_67] : memref<1x8x8x128xf32, #tpu.memory_space<vmem>>, vector<1x1x8x128xf32>
    %222 = vector.shape_cast %221 : vector<1x1x8x128xf32> to vector<8x128xf32>
    %223 = vector.shape_cast %219 : vector<8x128xf32> to vector<1x1x8x128xf32>
    tpu.vector_store %arg5[%c0_65, %220, %c0_66, %c0_67], %223 {strides = array<i32>} : memref<1x8x8x128xf32, #tpu.memory_space<vmem>>, vector<1x1x8x128xf32>,
    %c6_i32 = arith.constant 6 : i32
    %cst_68 = arith.constant dense<0.000000e+00> : vector<8x384xf32>
    %224 = tpu.matmul %219, %4, %cst_68 {dimension_numbers = #tpu.dot_dimension_numbers<[1], [0], [0], [1], [0, 0, 1, 1], [], []>} : vector<8x128xf32>, vector<128x384xf32>, vector<8x384xf32> -> vector<8x384xf32>
    %225 = vector.broadcast %6 : vector<1x384xf32> to vector<8x384xf32>
    %226 = arith.addf %224, %225 : vector<8x384xf32>
    %c0_69 = arith.constant 0 : index
    %227 = arith.index_cast %c6_i32 : i32 to index
    %c0_70 = arith.constant 0 : index
    %c0_71 = arith.constant 0 : index
    %228 = vector.load %arg2[%c0_69, %227, %c0_70, %c0_71] : memref<1x8x8x384xf32, #tpu.memory_space<vmem>>, vector<1x1x8x384xf32>
    %229 = vector.shape_cast %228 : vector<1x1x8x384xf32> to vector<8x384xf32>
    %230 = vector.extract_strided_slice %229 {offsets = [0, 0], sizes = [8, 128], strides = [1, 1]} : vector<8x384xf32> to vector<8x128xf32>
    %231 = vector.extract_strided_slice %226 {offsets = [0, 0], sizes = [8, 128], strides = [1, 1]} : vector<8x384xf32> to vector<8x128xf32>
    %232 = arith.addf %230, %231 : vector<8x128xf32>
    %233 = arith.negf %232 : vector<8x128xf32>
    %234 = math.exp %233 : vector<8x128xf32>
    %cst_72 = arith.constant 1.000000e+00 : f32
    %235 = vector.broadcast %cst_72 : f32 to vector<8x128xf32>
    %236 = arith.addf %235, %234 : vector<8x128xf32>
    %237 = arith.divf %235, %236 : vector<8x128xf32>
    %238 = vector.extract_strided_slice %229 {offsets = [0, 128], sizes = [8, 128], strides = [1, 1]} : vector<8x384xf32> to vector<8x128xf32>
    %239 = vector.extract_strided_slice %226 {offsets = [0, 128], sizes = [8, 128], strides = [1, 1]} : vector<8x384xf32> to vector<8x128xf32>
    %240 = arith.addf %238, %239 : vector<8x128xf32>
    %241 = arith.negf %240 : vector<8x128xf32>
    %242 = math.exp %241 : vector<8x128xf32>
    %cst_73 = arith.constant 1.000000e+00 : f32
    %243 = vector.broadcast %cst_73 : f32 to vector<8x128xf32>
    %244 = arith.addf %243, %242 : vector<8x128xf32>
    %245 = arith.divf %243, %244 : vector<8x128xf32>
    %246 = vector.extract_strided_slice %229 {offsets = [0, 256], sizes = [8, 128], strides = [1, 1]} : vector<8x384xf32> to vector<8x128xf32>
    %247 = vector.extract_strided_slice %226 {offsets = [0, 256], sizes = [8, 128], strides = [1, 1]} : vector<8x384xf32> to vector<8x128xf32>
    %248 = arith.mulf %237, %247 : vector<8x128xf32>
    %249 = arith.addf %246, %248 : vector<8x128xf32>
    %250 = math.tanh %249 : vector<8x128xf32>
    %cst_74 = arith.constant 1.000000e+00 : f32
    %251 = vector.broadcast %cst_74 : f32 to vector<8x128xf32>
    %252 = arith.subf %251, %245 : vector<8x128xf32>
    %253 = arith.mulf %252, %250 : vector<8x128xf32>
    %254 = arith.mulf %245, %219 : vector<8x128xf32>
    %255 = arith.addf %253, %254 : vector<8x128xf32>
    %c0_75 = arith.constant 0 : index
    %256 = arith.index_cast %c6_i32 : i32 to index
    %c0_76 = arith.constant 0 : index
    %c0_77 = arith.constant 0 : index
    %257 = vector.load %arg5[%c0_75, %256, %c0_76, %c0_77] : memref<1x8x8x128xf32, #tpu.memory_space<vmem>>, vector<1x1x8x128xf32>
    %258 = vector.shape_cast %257 : vector<1x1x8x128xf32> to vector<8x128xf32>
    %259 = vector.shape_cast %255 : vector<8x128xf32> to vector<1x1x8x128xf32>
    tpu.vector_store %arg5[%c0_75, %256, %c0_76, %c0_77], %259 {strides = array<i32>} : memref<1x8x8x128xf32, #tpu.memory_space<vmem>>, vector<1x1x8x128xf32>,
    %c7_i32 = arith.constant 7 : i32
    %cst_78 = arith.constant dense<0.000000e+00> : vector<8x384xf32>
    %260 = tpu.matmul %255, %4, %cst_78 {dimension_numbers = #tpu.dot_dimension_numbers<[1], [0], [0], [1], [0, 0, 1, 1], [], []>} : vector<8x128xf32>, vector<128x384xf32>, vector<8x384xf32> -> vector<8x384xf32>
    %261 = vector.broadcast %6 : vector<1x384xf32> to vector<8x384xf32>
    %262 = arith.addf %260, %261 : vector<8x384xf32>
    %c0_79 = arith.constant 0 : index
    %263 = arith.index_cast %c7_i32 : i32 to index
    %c0_80 = arith.constant 0 : index
    %c0_81 = arith.constant 0 : index
    %264 = vector.load %arg2[%c0_79, %263, %c0_80, %c0_81] : memref<1x8x8x384xf32, #tpu.memory_space<vmem>>, vector<1x1x8x384xf32>
    %265 = vector.shape_cast %264 : vector<1x1x8x384xf32> to vector<8x384xf32>
    %266 = vector.extract_strided_slice %265 {offsets = [0, 0], sizes = [8, 128], strides = [1, 1]} : vector<8x384xf32> to vector<8x128xf32>
    %267 = vector.extract_strided_slice %262 {offsets = [0, 0], sizes = [8, 128], strides = [1, 1]} : vector<8x384xf32> to vector<8x128xf32>
    %268 = arith.addf %266, %267 : vector<8x128xf32>
    %269 = arith.negf %268 : vector<8x128xf32>
    %270 = math.exp %269 : vector<8x128xf32>
    %cst_82 = arith.constant 1.000000e+00 : f32
    %271 = vector.broadcast %cst_82 : f32 to vector<8x128xf32>
    %272 = arith.addf %271, %270 : vector<8x128xf32>
    %273 = arith.divf %271, %272 : vector<8x128xf32>
    %274 = vector.extract_strided_slice %265 {offsets = [0, 128], sizes = [8, 128], strides = [1, 1]} : vector<8x384xf32> to vector<8x128xf32>
    %275 = vector.extract_strided_slice %262 {offsets = [0, 128], sizes = [8, 128], strides = [1, 1]} : vector<8x384xf32> to vector<8x128xf32>
    %276 = arith.addf %274, %275 : vector<8x128xf32>
    %277 = arith.negf %276 : vector<8x128xf32>
    %278 = math.exp %277 : vector<8x128xf32>
    %cst_83 = arith.constant 1.000000e+00 : f32
    %279 = vector.broadcast %cst_83 : f32 to vector<8x128xf32>
    %280 = arith.addf %279, %278 : vector<8x128xf32>
    %281 = arith.divf %279, %280 : vector<8x128xf32>
    %282 = vector.extract_strided_slice %265 {offsets = [0, 256], sizes = [8, 128], strides = [1, 1]} : vector<8x384xf32> to vector<8x128xf32>
    %283 = vector.extract_strided_slice %262 {offsets = [0, 256], sizes = [8, 128], strides = [1, 1]} : vector<8x384xf32> to vector<8x128xf32>
    %284 = arith.mulf %273, %283 : vector<8x128xf32>
    %285 = arith.addf %282, %284 : vector<8x128xf32>
    %286 = math.tanh %285 : vector<8x128xf32>
    %cst_84 = arith.constant 1.000000e+00 : f32
    %287 = vector.broadcast %cst_84 : f32 to vector<8x128xf32>
    %288 = arith.subf %287, %281 : vector<8x128xf32>
    %289 = arith.mulf %288, %286 : vector<8x128xf32>
    %290 = arith.mulf %281, %255 : vector<8x128xf32>
    %291 = arith.addf %289, %290 : vector<8x128xf32>
    %c0_85 = arith.constant 0 : index
    %292 = arith.index_cast %c7_i32 : i32 to index
    %c0_86 = arith.constant 0 : index
    %c0_87 = arith.constant 0 : index
    %293 = vector.load %arg5[%c0_85, %292, %c0_86, %c0_87] : memref<1x8x8x128xf32, #tpu.memory_space<vmem>>, vector<1x1x8x128xf32>
    %294 = vector.shape_cast %293 : vector<1x1x8x128xf32> to vector<8x128xf32>
    %295 = vector.shape_cast %291 : vector<8x128xf32> to vector<1x1x8x128xf32>
    tpu.vector_store %arg5[%c0_85, %292, %c0_86, %c0_87], %295 {strides = array<i32>} : memref<1x8x8x128xf32, #tpu.memory_space<vmem>>, vector<1x1x8x128xf32>,
    %c8_i32 = arith.constant 8 : i32
    %c0_88 = arith.constant 0 : index
    %c0_89 = arith.constant 0 : index
    %296 = vector.load %arg6[%c0_88, %c0_89] : memref<8x128xf32, #tpu.memory_space<vmem>>, vector<8x128xf32>
    tpu.vector_store %arg6[%c0_88, %c0_89], %291 {strides = array<i32>} : memref<8x128xf32, #tpu.memory_space<vmem>>, vector<8x128xf32>,
    return
  }
  func.func @transform_0(%arg0: i32, %arg1: i32) -> (i32, i32, i32, i32) {
    %c0_i32 = arith.constant 0 : i32
    %c0_i32_0 = arith.constant 0 : i32
    %c0_i32_1 = arith.constant 0 : i32
    return %arg0, %arg1, %c0_i32, %c0_i32_0 : i32, i32, i32, i32
  }
  func.func @transform_1(%arg0: i32, %arg1: i32) -> (i32, i32, i32) {
    %c0_i32 = arith.constant 0 : i32
    %c0_i32_0 = arith.constant 0 : i32
    %c0_i32_1 = arith.constant 0 : i32
    return %arg0, %c0_i32, %c0_i32_0 : i32, i32, i32
  }
  func.func @transform_2(%arg0: i32, %arg1: i32) -> (i32, i32, i32) {
    %c0_i32 = arith.constant 0 : i32
    %c0_i32_0 = arith.constant 0 : i32
    %c0_i32_1 = arith.constant 0 : i32
    return %arg0, %c0_i32, %c0_i32_0 : i32, i32, i32
  }
  func.func @transform_3(%arg0: i32, %arg1: i32) -> (i32, i32, i32, i32) {
    %c0_i32 = arith.constant 0 : i32
    %c0_i32_0 = arith.constant 0 : i32
    %c0_i32_1 = arith.constant 0 : i32
    return %arg0, %arg1, %c0_i32, %c0_i32_0 : i32, i32, i32, i32
  }
}

</mosaic_0001>

<llo_original>
// kernel: reverse
$region0: #{reverse}
  #allocation0 [shape = 's32[1]{0}', space=sflag, size = 0x4, scoped, tag = 'scoped memory for reverse']
  %s0 = inlined_call_operand.vmem [shape: f32[8,2,32], index: 0, kind: input, shape index: {}]
  %s1 = inlined_call_operand.vmem [shape: f32[8,2,32], index: 1, kind: output, shape index: {}]
  %s2 = scalar_lea.vmem %s0, 14
  %v3 = vld [vmem:[%s2] sm:$0x3]
  %4 = vst [vmem:[%s1] sm:$0x3] %v3
  %s5 = scalar_lea.vmem %s0, 12
  %v6 = vld [vmem:[%s5] sm:$0x3]
  %s7 = scalar_lea.vmem %s1, 2
  %8 = vst [vmem:[%s7] sm:$0x3] %v6
  %s9 = scalar_lea.vmem %s0, 10
  %v10 = vld [vmem:[%s9] sm:$0x3]
  %s11 = scalar_lea.vmem %s1, 4
  %12 = vst [vmem:[%s11] sm:$0x3] %v10
  %s13 = scalar_lea.vmem %s0, 8
  %v14 = vld [vmem:[%s13] sm:$0x3]
  %s15 = scalar_lea.vmem %s1, 6
  %16 = vst [vmem:[%s15] sm:$0x3] %v14
  %s17 = scalar_lea.vmem %s0, 6
  %v18 = vld [vmem:[%s17] sm:$0x3]
  %s19 = scalar_lea.vmem %s1, 8
  %20 = vst [vmem:[%s19] sm:$0x3] %v18
  %s21 = scalar_lea.vmem %s0, 4
  %v22 = vld [vmem:[%s21] sm:$0x3]
  %s23 = scalar_lea.vmem %s1, 10
  %24 = vst [vmem:[%s23] sm:$0x3] %v22
  %s25 = scalar_lea.vmem %s0, 2
  %v26 = vld [vmem:[%s25] sm:$0x3]
  %s27 = scalar_lea.vmem %s1, 12
  %28 = vst [vmem:[%s27] sm:$0x3] %v26
  %v29 = vld [vmem:[%s0] sm:$0x3]
  %s30 = scalar_lea.vmem %s1, 14
  %31 = vst [vmem:[%s30] sm:$0x3] %v29

// kernel: bigru_layer_forward.2
$region0: #{bigru_layer_forward.2}
  #allocation0 [shape = 'u32[]', space=smem, size = 0x4, offset = 0x4, fixed_abs, tag = 'smem constant byte address 0x4 - core index']
  #allocation1 [shape = 'u32[144,128]{1,0:T(1,128)}', space=vmem, size = 0x12000, scoped, tag = 'internal scratch']
  %s0 = inlined_call_operand.vmem [shape: f32[64,128], index: 0, kind: input, shape index: {}]
  %s1 = inlined_call_operand.vmem [shape: f32[1,128], index: 1, kind: input, shape index: {}]
  %s2 = inlined_call_operand.vmem [shape: f32[1,128], index: 2, kind: input, shape index: {}]
  %s3 = inlined_call_operand.hbm [shape: bf16[128,768], index: 3, kind: input, shape index: {}]
  %s4 = inlined_call_operand.vmem [shape: f32[1,768], index: 4, kind: input, shape index: {}]
  %s5 = inlined_call_operand.vmem [shape: f32[64,768], index: 5, kind: output, shape index: {}]
  %s6 = sld [smem:[#allocation0]]
  $region34: #{bigru_layer_forward.2} parent=0
    _
  %s8 = ssub.s32 1, %s6
  %s9 = scalar_select 0, %s8, %s6
  $region1: #{bigru_layer_forward.2} parent=0
    #allocation2 [shape = 'u8[196608]{0}', space=vmem, size = 0x30000, scoped, tag = 'input window, operand 3, single buffered']
    #allocation3 [shape = 's32[1]{0}', space=sflag, size = 0x4, scoped, tag = 'scoped memory for bigru_layer_forward.2']
    %10 = vsyncpa [#allocation3], 0
    // Predicated region
    $region2: #{bigru_layer_forward.2} parent=1 // pred_check
      _
    $region3: #{bigru_layer_forward.2} parent=1 // pred_check_branch
      %12 = sbr.rel (0) target = $region5
    $region4: #{bigru_layer_forward.2} parent=1 // pred_region
      _
    $region5: #{bigru_layer_forward.2} parent=1 // pred_fallthru
      _
    // Predicated region
    $region6: #{bigru_layer_forward.2} parent=1 // pred_check
      _
    $region7: #{bigru_layer_forward.2} parent=1 // pred_check_branch
      %14 = sbr.rel (0) target = $region9
    $region8: #{bigru_layer_forward.2} parent=1 // pred_region
      _
    $region9: #{bigru_layer_forward.2} parent=1 // pred_fallthru
      _
    // Predicated region
    $region10: #{bigru_layer_forward.2} parent=1 // pred_check
      _
    $region11: #{bigru_layer_forward.2} parent=1 // pred_check_branch
      %16 = sbr.rel (0) target = $region13
    $region12: #{bigru_layer_forward.2} parent=1 // pred_region
      _
    $region13: #{bigru_layer_forward.2} parent=1 // pred_fallthru
      _
    // Predicated region
    $region14: #{bigru_layer_forward.2} parent=1 // pred_check
      _
    $region15: #{bigru_layer_forward.2} parent=1 // pred_check_branch
      %18 = sbr.rel (0) target = $region17
    $region16: #{bigru_layer_forward.2} parent=1 // pred_region
      %s20 = ssub.s32 6144, 6144
      %21 = vsyncadd [#allocation3], %s20
      %s22 = sshll.u32 [#allocation2], 4
      %s23 = int_to_ptr.vmem [resolvable:$true] %s22
      %28 = dma.hbm_to_vmem [thread:$0]  %s3, 6144, %s23, [#allocation3], 384, 384, 24
    $region17: #{bigru_layer_forward.2} parent=1 // pred_fallthru
      _
    // Predicated region
    $region18: #{bigru_layer_forward.2} parent=1 // pred_check
      _
    $region19: #{bigru_layer_forward.2} parent=1 // pred_check_branch
      %30 = sbr.rel (0) target = $region21
    $region20: #{bigru_layer_forward.2} parent=1 // pred_region
      _
    $region21: #{bigru_layer_forward.2} parent=1 // pred_fallthru
      _
    // Predicated region
    $region22: #{bigru_layer_forward.2} parent=1 // pred_check
      _
    $region23: #{bigru_layer_forward.2} parent=1 // pred_check_branch
      %32 = sbr.rel (0) target = $region25
    $region24: #{bigru_layer_forward.2} parent=1 // pred_region
      %33 = dma.done [#allocation3], 6144
    $region25: #{bigru_layer_forward.2} parent=1 // pred_fallthru
      _
    %v35 = vld [vmem:[%s0] sm:$0xff]
    %v36 = vld [vmem:[%s0 + $0x8] sm:$0xff]
    %v37 = vld [vmem:[%s0 + $0x10] sm:$0xff]
    %v38 = vld [vmem:[%s0 + $0x18] sm:$0xff]
    %v39 = vld [vmem:[%s0 + $0x20] sm:$0xff]
    %v40 = vld [vmem:[%s0 + $0x28] sm:$0xff]
    %v41 = vld [vmem:[%s0 + $0x30] sm:$0xff]
    %v42 = vld [vmem:[%s0 + $0x38] sm:$0xff]
    %43 = vadd.xlane.f32.xlu0 %v35
    %v44 = vpop.xlane.xlu0 %43
    %45 = vadd.xlane.f32.xlu0 %v36
    %v46 = vpop.xlane.xlu0 %45
    %47 = vadd.xlane.f32.xlu0 %v37
    %v48 = vpop.xlane.xlu0 %47
    %49 = vadd.xlane.f32.xlu0 %v38
    %v50 = vpop.xlane.xlu0 %49
    %51 = vadd.xlane.f32.xlu0 %v39
    %v52 = vpop.xlane.xlu0 %51
    %53 = vadd.xlane.f32.xlu0 %v40
    %v54 = vpop.xlane.xlu0 %53
    %55 = vadd.xlane.f32.xlu0 %v41
    %v56 = vpop.xlane.xlu0 %55
    %57 = vadd.xlane.f32.xlu0 %v42
    %v58 = vpop.xlane.xlu0 %57
    %v59 = vmul.f32 %v44, 0.03125
    %v60 = vmul.f32 %v46, 0.03125
    %v61 = vmul.f32 %v48, 0.03125
    %v62 = vmul.f32 %v50, 0.03125
    %v63 = vmul.f32 %v52, 0.03125
    %v64 = vmul.f32 %v54, 0.03125
    %v65 = vmul.f32 %v56, 0.03125
    %v66 = vmul.f32 %v58, 0.03125
    %v67 = vsub.f32 %v35, %v59
    %v68 = vsub.f32 %v36, %v60
    %v69 = vsub.f32 %v37, %v61
    %v70 = vsub.f32 %v38, %v62
    %v71 = vsub.f32 %v39, %v63
    %v72 = vsub.f32 %v40, %v64
    %v73 = vsub.f32 %v41, %v65
    %v74 = vsub.f32 %v42, %v66
    %v75 = vlaneseq
    %v76 = vand.u32 %v75, 127
    %vm77 = vcmp.lt.s32.totalorder %v76, 32
    %v78 = vsel %vm77, %v67, 0.0
    %v79 = vsel %vm77, %v68, 0.0
    %v80 = vsel %vm77, %v69, 0.0
    %v81 = vsel %vm77, %v70, 0.0
    %v82 = vsel %vm77, %v71, 0.0
    %v83 = vsel %vm77, %v72, 0.0
    %v84 = vsel %vm77, %v73, 0.0
    %v85 = vsel %vm77, %v74, 0.0
    %v86 = vmul.f32 %v78, %v78
    %v87 = vmul.f32 %v79, %v79
    %v88 = vmul.f32 %v80, %v80
    %v89 = vmul.f32 %v81, %v81
    %v90 = vmul.f32 %v82, %v82
    %v91 = vmul.f32 %v83, %v83
    %v92 = vmul.f32 %v84, %v84
    %v93 = vmul.f32 %v85, %v85
    %94 = vadd.xlane.f32.xlu0 %v86
    %v95 = vpop.xlane.xlu0 %94
    %96 = vadd.xlane.f32.xlu0 %v87
    %v97 = vpop.xlane.xlu0 %96
    %98 = vadd.xlane.f32.xlu0 %v88
    %v99 = vpop.xlane.xlu0 %98
    %100 = vadd.xlane.f32.xlu0 %v89
    %v101 = vpop.xlane.xlu0 %100
    %102 = vadd.xlane.f32.xlu0 %v90
    %v103 = vpop.xlane.xlu0 %102
    %104 = vadd.xlane.f32.xlu0 %v91
    %v105 = vpop.xlane.xlu0 %104
    %106 = vadd.xlane.f32.xlu0 %v92
    %v107 = vpop.xlane.xlu0 %106
    %108 = vadd.xlane.f32.xlu0 %v93
    %v109 = vpop.xlane.xlu0 %108
    %v110 = vmul.f32 %v95, 0.03125
    %v111 = vmul.f32 %v97, 0.03125
    %v112 = vmul.f32 %v99, 0.03125
    %v113 = vmul.f32 %v101, 0.03125
    %v114 = vmul.f32 %v103, 0.03125
    %v115 = vmul.f32 %v105, 0.03125
    %v116 = vmul.f32 %v107, 0.03125
    %v117 = vmul.f32 %v109, 0.03125
    %v118 = vadd.f32 %v110, 1e-05
    %v119 = vadd.f32 %v111, 1e-05
    %v120 = vadd.f32 %v112, 1e-05
    %v121 = vadd.f32 %v113, 1e-05
    %v122 = vadd.f32 %v114, 1e-05
    %v123 = vadd.f32 %v115, 1e-05
    %v124 = vadd.f32 %v116, 1e-05
    %v125 = vadd.f32 %v117, 1e-05
    %v126 = vrsqrt.pop %v118
    %v127 = vrsqrt.pop %v119
    %v128 = vrsqrt.pop %v120
    %v129 = vrsqrt.pop %v121
    %v130 = vrsqrt.pop %v122
    %v131 = vrsqrt.pop %v123
    %v132 = vrsqrt.pop %v124
    %v133 = vrsqrt.pop %v125
    %v134 = vmul.f32 %v78, %v126
    %v135 = vmul.f32 %v79, %v127
    %v136 = vmul.f32 %v80, %v128
    %v137 = vmul.f32 %v81, %v129
    %v138 = vmul.f32 %v82, %v130
    %v139 = vmul.f32 %v83, %v131
    %v140 = vmul.f32 %v84, %v132
    %v141 = vmul.f32 %v85, %v133
    %v142 = vld [vmem:[%s1] sm:$0x1]
    %v144 = vlaneseq
    %v145 = vshrl.u32 %v144, 7
    %v146 = vsub.s32 0, %v145
    %v147 = vrot.slane %v142, %v146
    %v149 = vmul.f32 %v134, %v147
    %v150 = vmul.f32 %v135, %v147
    %v151 = vmul.f32 %v136, %v147
    %v152 = vmul.f32 %v137, %v147
    %v153 = vmul.f32 %v138, %v147
    %v154 = vmul.f32 %v139, %v147
    %v155 = vmul.f32 %v140, %v147
    %v156 = vmul.f32 %v141, %v147
    %v157 = vld [vmem:[%s2] sm:$0x1]
    %v159 = vlaneseq
    %v160 = vshrl.u32 %v159, 7
    %v161 = vsub.s32 0, %v160
    %v162 = vrot.slane %v157, %v161
    %v164 = vadd.f32 %v149, %v162
    %v165 = vadd.f32 %v150, %v162
    %v166 = vadd.f32 %v151, %v162
    %v167 = vadd.f32 %v152, %v162
    %v168 = vadd.f32 %v153, %v162
    %v169 = vadd.f32 %v154, %v162
    %v170 = vadd.f32 %v155, %v162
    %v171 = vadd.f32 %v156, %v162
    %v172 = vmul.f32 %v164, 0.5
    %v173 = vmul.f32 %v165, 0.5
    %v174 = vmul.f32 %v166, 0.5
    %v175 = vmul.f32 %v167, 0.5
    %v176 = vmul.f32 %v168, 0.5
    %v177 = vmul.f32 %v169, 0.5
    %v178 = vmul.f32 %v170, 0.5
    %v179 = vmul.f32 %v171, 0.5
    %v180 = vmul.f32 %v164, 0.70710677
    %v181 = vmul.f32 %v165, 0.70710677
    %v182 = vmul.f32 %v166, 0.70710677
    %v183 = vmul.f32 %v167, 0.70710677
    %v184 = vmul.f32 %v168, 0.70710677
    %v185 = vmul.f32 %v169, 0.70710677
    %v186 = vmul.f32 %v170, 0.70710677
    %v187 = vmul.f32 %v171, 0.70710677
    %vm188 = vcmp.ge.f32.partialorder %v180, 0.0
    %vm189 = vcmp.ge.f32.partialorder %v181, 0.0
    %vm190 = vcmp.ge.f32.partialorder %v182, 0.0
    %vm191 = vcmp.ge.f32.partialorder %v183, 0.0
    %vm192 = vcmp.ge.f32.partialorder %v184, 0.0
    %vm193 = vcmp.ge.f32.partialorder %v185, 0.0
    %vm194 = vcmp.ge.f32.partialorder %v186, 0.0
    %vm195 = vcmp.ge.f32.partialorder %v187, 0.0
    %v196 = vsel %vm188, 1.0, -1.0
    %v197 = vsel %vm189, 1.0, -1.0
    %v198 = vsel %vm190, 1.0, -1.0
    %v199 = vsel %vm191, 1.0, -1.0
    %v200 = vsel %vm192, 1.0, -1.0
    %v201 = vsel %vm193, 1.0, -1.0
    %v202 = vsel %vm194, 1.0, -1.0
    %v203 = vsel %vm195, 1.0, -1.0
    %v204 = vand.u32 2147483647, %v180
    %v205 = vand.u32 2147483647, %v181
    %v206 = vand.u32 2147483647, %v182
    %v207 = vand.u32 2147483647, %v183
    %v208 = vand.u32 2147483647, %v184
    %v209 = vand.u32 2147483647, %v185
    %v210 = vand.u32 2147483647, %v186
    %v211 = vand.u32 2147483647, %v187
    %v212 = vmul.f32 %v204, 0.3275911
    %v213 = vmul.f32 %v205, 0.3275911
    %v214 = vmul.f32 %v206, 0.3275911
    %v215 = vmul.f32 %v207, 0.3275911
    %v216 = vmul.f32 %v208, 0.3275911
    %v217 = vmul.f32 %v209, 0.3275911
    %v218 = vmul.f32 %v210, 0.3275911
    %v219 = vmul.f32 %v211, 0.3275911
    %v220 = vadd.f32 %v212, 1.0
    %v221 = vadd.f32 %v213, 1.0
    %v222 = vadd.f32 %v214, 1.0
    %v223 = vadd.f32 %v215, 1.0
    %v224 = vadd.f32 %v216, 1.0
    %v225 = vadd.f32 %v217, 1.0
    %v226 = vadd.f32 %v218, 1.0
    %v227 = vadd.f32 %v219, 1.0
    %v228 = vrcp.pop %v220
    %v229 = vmul.f32 1.0, %v228
    %v230 = vrcp.pop %v221
    %v231 = vmul.f32 1.0, %v230
    %v232 = vrcp.pop %v222
    %v233 = vmul.f32 1.0, %v232
    %v234 = vrcp.pop %v223
    %v235 = vmul.f32 1.0, %v234
    %v236 = vrcp.pop %v224
    %v237 = vmul.f32 1.0, %v236
    %v238 = vrcp.pop %v225
    %v239 = vmul.f32 1.0, %v238
    %v240 = vrcp.pop %v226
    %v241 = vmul.f32 1.0, %v240
    %v242 = vrcp.pop %v227
    %v243 = vmul.f32 1.0, %v242
    %v244 = vmul.f32 %v229, 1.0614054
    %v245 = vmul.f32 %v231, 1.0614054
    %v246 = vmul.f32 %v233, 1.0614054
    %v247 = vmul.f32 %v235, 1.0614054
    %v248 = vmul.f32 %v237, 1.0614054
    %v249 = vmul.f32 %v239, 1.0614054
    %v250 = vmul.f32 %v241, 1.0614054
    %v251 = vmul.f32 %v243, 1.0614054
    %v252 = vadd.f32 %v244, -1.4531521
    %v253 = vadd.f32 %v245, -1.4531521
    %v254 = vadd.f32 %v246, -1.4531521
    %v255 = vadd.f32 %v247, -1.4531521
    %v256 = vadd.f32 %v248, -1.4531521
    %v257 = vadd.f32 %v249, -1.4531521
    %v258 = vadd.f32 %v250, -1.4531521
    %v259 = vadd.f32 %v251, -1.4531521
    %v260 = vmul.f32 %v252, %v229
    %v261 = vmul.f32 %v253, %v231
    %v262 = vmul.f32 %v254, %v233
    %v263 = vmul.f32 %v255, %v235
    %v264 = vmul.f32 %v256, %v237
    %v265 = vmul.f32 %v257, %v239
    %v266 = vmul.f32 %v258, %v241
    %v267 = vmul.f32 %v259, %v243
    %v268 = vadd.f32 %v260, 1.4214138
    %v269 = vadd.f32 %v261, 1.4214138
    %v270 = vadd.f32 %v262, 1.4214138
    %v271 = vadd.f32 %v263, 1.4214138
    %v272 = vadd.f32 %v264, 1.4214138
    %v273 = vadd.f32 %v265, 1.4214138
    %v274 = vadd.f32 %v266, 1.4214138
    %v275 = vadd.f32 %v267, 1.4214138
    %v276 = vmul.f32 %v268, %v229
    %v277 = vmul.f32 %v269, %v231
    %v278 = vmul.f32 %v270, %v233
    %v279 = vmul.f32 %v271, %v235
    %v280 = vmul.f32 %v272, %v237
    %v281 = vmul.f32 %v273, %v239
    %v282 = vmul.f32 %v274, %v241
    %v283 = vmul.f32 %v275, %v243
    %v284 = vadd.f32 %v276, -0.28449672
    %v285 = vadd.f32 %v277, -0.28449672
    %v286 = vadd.f32 %v278, -0.28449672
    %v287 = vadd.f32 %v279, -0.28449672
    %v288 = vadd.f32 %v280, -0.28449672
    %v289 = vadd.f32 %v281, -0.28449672
    %v290 = vadd.f32 %v282, -0.28449672
    %v291 = vadd.f32 %v283, -0.28449672
    %v292 = vmul.f32 %v284, %v229
    %v293 = vmul.f32 %v285, %v231
    %v294 = vmul.f32 %v286, %v233
    %v295 = vmul.f32 %v287, %v235
    %v296 = vmul.f32 %v288, %v237
    %v297 = vmul.f32 %v289, %v239
    %v298 = vmul.f32 %v290, %v241
    %v299 = vmul.f32 %v291, %v243
    %v300 = vadd.f32 %v292, 0.2548296
    %v301 = vadd.f32 %v293, 0.2548296
    %v302 = vadd.f32 %v294, 0.2548296
    %v303 = vadd.f32 %v295, 0.2548296
    %v304 = vadd.f32 %v296, 0.2548296
    %v305 = vadd.f32 %v297, 0.2548296
    %v306 = vadd.f32 %v298, 0.2548296
    %v307 = vadd.f32 %v299, 0.2548296
    %v308 = vmul.f32 %v300, %v229
    %v309 = vmul.f32 %v301, %v231
    %v310 = vmul.f32 %v302, %v233
    %v311 = vmul.f32 %v303, %v235
    %v312 = vmul.f32 %v304, %v237
    %v313 = vmul.f32 %v305, %v239
    %v314 = vmul.f32 %v306, %v241
    %v315 = vmul.f32 %v307, %v243
    %v316 = vsub.f32 0.0, %v204
    %v317 = vsub.f32 0.0, %v205
    %v318 = vsub.f32 0.0, %v206
    %v319 = vsub.f32 0.0, %v207
    %v320 = vsub.f32 0.0, %v208
    %v321 = vsub.f32 0.0, %v209
    %v322 = vsub.f32 0.0, %v210
    %v323 = vsub.f32 0.0, %v211
    %v324 = vmul.f32 %v316, %v204
    %v325 = vmul.f32 %v317, %v205
    %v326 = vmul.f32 %v318, %v206
    %v327 = vmul.f32 %v319, %v207
    %v328 = vmul.f32 %v320, %v208
    %v329 = vmul.f32 %v321, %v209
    %v330 = vmul.f32 %v322, %v210
    %v331 = vmul.f32 %v323, %v211
    %v332 = vmul.f32 %v324, 1.442695
    %v333 = vpow.pop %v332
    %v334 = vmul.f32 %v325, 1.442695
    %v335 = vpow.pop %v334
    %v336 = vmul.f32 %v326, 1.442695
    %v337 = vpow.pop %v336
    %v338 = vmul.f32 %v327, 1.442695
    %v339 = vpow.pop %v338
    %v340 = vmul.f32 %v328, 1.442695
    %v341 = vpow.pop %v340
    %v342 = vmul.f32 %v329, 1.442695
    %v343 = vpow.pop %v342
    %v344 = vmul.f32 %v330, 1.442695
    %v345 = vpow.pop %v344
    %v346 = vmul.f32 %v331, 1.442695
    %v347 = vpow.pop %v346
    %v348 = vmul.f32 %v308, %v333
    %v349 = vmul.f32 %v309, %v335
    %v350 = vmul.f32 %v310, %v337
    %v351 = vmul.f32 %v311, %v339
    %v352 = vmul.f32 %v312, %v341
    %v353 = vmul.f32 %v313, %v343
    %v354 = vmul.f32 %v314, %v345
    %v355 = vmul.f32 %v315, %v347
    %v356 = vsub.f32 1.0, %v348
    %v357 = vsub.f32 1.0, %v349
    %v358 = vsub.f32 1.0, %v350
    %v359 = vsub.f32 1.0, %v351
    %v360 = vsub.f32 1.0, %v352
    %v361 = vsub.f32 1.0, %v353
    %v362 = vsub.f32 1.0, %v354
    %v363 = vsub.f32 1.0, %v355
    %v364 = vmul.f32 %v196, %v356
    %v365 = vmul.f32 %v197, %v357
    %v366 = vmul.f32 %v198, %v358
    %v367 = vmul.f32 %v199, %v359
    %v368 = vmul.f32 %v200, %v360
    %v369 = vmul.f32 %v201, %v361
    %v370 = vmul.f32 %v202, %v362
    %v371 = vmul.f32 %v203, %v363
    %v372 = vadd.f32 %v364, 1.0
    %v373 = vadd.f32 %v365, 1.0
    %v374 = vadd.f32 %v366, 1.0
    %v375 = vadd.f32 %v367, 1.0
    %v376 = vadd.f32 %v368, 1.0
    %v377 = vadd.f32 %v369, 1.0
    %v378 = vadd.f32 %v370, 1.0
    %v379 = vadd.f32 %v371, 1.0
    %v380 = vmul.f32 %v172, %v372
    %v381 = vmul.f32 %v173, %v373
    %v382 = vmul.f32 %v174, %v374
    %v383 = vmul.f32 %v175, %v375
    %v384 = vmul.f32 %v176, %v376
    %v385 = vmul.f32 %v177, %v377
    %v386 = vmul.f32 %v178, %v378
    %v387 = vmul.f32 %v179, %v379
    %v388 = vpack.c.bf16 %v381, %v380
    %v389 = vpack.c.bf16 %v383, %v382
    %v390 = vpack.c.bf16 %v385, %v384
    %v391 = vpack.c.bf16 %v387, %v386
    %v392 = vld [vmem:[#allocation2] sm:$0xff]
    %v393 = vld [vmem:[#allocation2 + $0x8] sm:$0xff]
    %v394 = vld [vmem:[#allocation2 + $0x10] sm:$0xff]
    %v395 = vld [vmem:[#allocation2 + $0x18] sm:$0xff]
    %v396 = vld [vmem:[#allocation2 + $0x20] sm:$0xff]
    %v397 = vld [vmem:[#allocation2 + $0x28] sm:$0xff]
    %v398 = vld [vmem:[#allocation2 + $0x30] sm:$0xff]
    %v399 = vld [vmem:[#allocation2 + $0x38] sm:$0xff]
    %v400 = vld [vmem:[#allocation2 + $0x40] sm:$0xff]
    %v401 = vld [vmem:[#allocation2 + $0x48] sm:$0xff]
    %v402 = vld [vmem:[#allocation2 + $0x50] sm:$0xff]
    %v403 = vld [vmem:[#allocation2 + $0x58] sm:$0xff]
    %v404 = vld [vmem:[#allocation2 + $0x60] sm:$0xff]
    %v405 = vld [vmem:[#allocation2 + $0x68] sm:$0xff]
    %v406 = vld [vmem:[#allocation2 + $0x70] sm:$0xff]
    %v407 = vld [vmem:[#allocation2 + $0x78] sm:$0xff]
    %v408 = vld [vmem:[#allocation2 + $0x80] sm:$0xff]
    %v409 = vld [vmem:[#allocation2 + $0x88] sm:$0xff]
    %v410 = vld [vmem:[#allocation2 + $0x90] sm:$0xff]
    %v411 = vld [vmem:[#allocation2 + $0x98] sm:$0xff]
    %v412 = vld [vmem:[#allocation2 + $0xa0] sm:$0xff]
    %v413 = vld [vmem:[#allocation2 + $0xa8] sm:$0xff]
    %v414 = vld [vmem:[#allocation2 + $0xb0] sm:$0xff]
    %v415 = vld [vmem:[#allocation2 + $0xb8] sm:$0xff]
    %v416 = vld [vmem:[#allocation2 + $0xc0] sm:$0xff]
    %v417 = vld [vmem:[#allocation2 + $0xc8] sm:$0xff]
    %v418 = vld [vmem:[#allocation2 + $0xd0] sm:$0xff]
    %v419 = vld [vmem:[#allocation2 + $0xd8] sm:$0xff]
    %v420 = vld [vmem:[#allocation2 + $0xe0] sm:$0xff]
    %v421 = vld [vmem:[#allocation2 + $0xe8] sm:$0xff]
    %v422 = vld [vmem:[#allocation2 + $0xf0] sm:$0xff]
    %v423 = vld [vmem:[#allocation2 + $0xf8] sm:$0xff]
    %v424 = vld [vmem:[#allocation2 + $0x100] sm:$0xff]
    %v425 = vld [vmem:[#allocation2 + $0x108] sm:$0xff]
    %v426 = vld [vmem:[#allocation2 + $0x110] sm:$0xff]
    %v427 = vld [vmem:[#allocation2 + $0x118] sm:$0xff]
    %v428 = vld [vmem:[#allocation2 + $0x120] sm:$0xff]
    %v429 = vld [vmem:[#allocation2 + $0x128] sm:$0xff]
    %v430 = vld [vmem:[#allocation2 + $0x130] sm:$0xff]
    %v431 = vld [vmem:[#allocation2 + $0x138] sm:$0xff]
    %v432 = vld [vmem:[#allocation2 + $0x140] sm:$0xff]
    %v433 = vld [vmem:[#allocation2 + $0x148] sm:$0xff]
    %v434 = vld [vmem:[#allocation2 + $0x150] sm:$0xff]
    %v435 = vld [vmem:[#allocation2 + $0x158] sm:$0xff]
    %v436 = vld [vmem:[#allocation2 + $0x160] sm:$0xff]
    %v437 = vld [vmem:[#allocation2 + $0x168] sm:$0xff]
    %v438 = vld [vmem:[#allocation2 + $0x170] sm:$0xff]
    %v439 = vld [vmem:[#allocation2 + $0x178] sm:$0xff]
    %v440 = vld [vmem:[%s4] sm:$0x3f]
    %v442 = vlaneseq
    %v443 = vshrl.u32 %v442, 7
    %v444 = vsub.s32 0, %v443
    %v445 = vrot.slane %v440, %v444
    %v446 = vlaneseq
    %v447 = vshrl.u32 %v446, 7
    %v448 = vsub.s32 1, %v447
    %v449 = vrot.slane %v440, %v448
    %v450 = vlaneseq
    %v451 = vshrl.u32 %v450, 7
    %v452 = vsub.s32 2, %v451
    %v453 = vrot.slane %v440, %v452
    %v454 = vlaneseq
    %v455 = vshrl.u32 %v454, 7
    %v456 = vsub.s32 3, %v455
    %v457 = vrot.slane %v440, %v456
    %v458 = vlaneseq
    %v459 = vshrl.u32 %v458, 7
    %v460 = vsub.s32 4, %v459
    %v461 = vrot.slane %v440, %v460
    %v462 = vlaneseq
    %v463 = vshrl.u32 %v462, 7
    %v464 = vsub.s32 5, %v463
    %v465 = vrot.slane %v440, %v464
    %v520 = vunpack.c.l.b16 %v392
    %v521 = vunpack.c.h.b16 %v392
    %v522 = vunpack.c.l.b16 %v393
    %v523 = vunpack.c.h.b16 %v393
    %v524 = vunpack.c.l.b16 %v394
    %v525 = vunpack.c.h.b16 %v394
    %v526 = vunpack.c.l.b16 %v395
    %v527 = vunpack.c.h.b16 %v395
    %v528 = vunpack.c.l.b16 %v396
    %v529 = vunpack.c.h.b16 %v396
    %v530 = vunpack.c.l.b16 %v397
    %v531 = vunpack.c.h.b16 %v397
    %v532 = vunpack.c.l.b16 %v398
    %v533 = vunpack.c.h.b16 %v398
    %v534 = vunpack.c.l.b16 %v399
    %v535 = vunpack.c.h.b16 %v399
    %v536 = vunpack.c.l.b16 %v400
    %v537 = vunpack.c.h.b16 %v400
    %v538 = vunpack.c.l.b16 %v401
    %v539 = vunpack.c.h.b16 %v401
    %v540 = vunpack.c.l.b16 %v402
    %v541 = vunpack.c.h.b16 %v402
    %v542 = vunpack.c.l.b16 %v403
    %v543 = vunpack.c.h.b16 %v403
    %v544 = vunpack.c.l.b16 %v404
    %v545 = vunpack.c.h.b16 %v404
    %v546 = vunpack.c.l.b16 %v405
    %v547 = vunpack.c.h.b16 %v405
    %v548 = vunpack.c.l.b16 %v406
    %v549 = vunpack.c.h.b16 %v406
    %v550 = vunpack.c.l.b16 %v407
    %v551 = vunpack.c.h.b16 %v407
    %v552 = vunpack.c.l.b16 %v408
    %v553 = vunpack.c.h.b16 %v408
    %v554 = vunpack.c.l.b16 %v409
    %v555 = vunpack.c.h.b16 %v409
    %v556 = vunpack.c.l.b16 %v410
    %v557 = vunpack.c.h.b16 %v410
    %v558 = vunpack.c.l.b16 %v411
    %v559 = vunpack.c.h.b16 %v411
    %v560 = vunpack.c.l.b16 %v412
    %v561 = vunpack.c.h.b16 %v412
    %v562 = vunpack.c.l.b16 %v413
    %v563 = vunpack.c.h.b16 %v413
    %v564 = vunpack.c.l.b16 %v414
    %v565 = vunpack.c.h.b16 %v414
    %v566 = vunpack.c.l.b16 %v415
    %v567 = vunpack.c.h.b16 %v415
    %v568 = vunpack.c.l.b16 %v416
    %v569 = vunpack.c.h.b16 %v416
    %v570 = vunpack.c.l.b16 %v417
    %v571 = vunpack.c.h.b16 %v417
    %v572 = vunpack.c.l.b16 %v418
    %v573 = vunpack.c.h.b16 %v418
    %v574 = vunpack.c.l.b16 %v419
    %v575 = vunpack.c.h.b16 %v419
    %v576 = vunpack.c.l.b16 %v420
    %v577 = vunpack.c.h.b16 %v420
    %v578 = vunpack.c.l.b16 %v421
    %v579 = vunpack.c.h.b16 %v421
    %v580 = vunpack.c.l.b16 %v422
    %v581 = vunpack.c.h.b16 %v422
    %v582 = vunpack.c.l.b16 %v423
    %v583 = vunpack.c.h.b16 %v423
    %v584 = vunpack.c.l.b16 %v424
    %v585 = vunpack.c.h.b16 %v424
    %v586 = vunpack.c.l.b16 %v425
    %v587 = vunpack.c.h.b16 %v425
    %v588 = vunpack.c.l.b16 %v426
    %v589 = vunpack.c.h.b16 %v426
    %v590 = vunpack.c.l.b16 %v427
    %v591 = vunpack.c.h.b16 %v427
    %v592 = vunpack.c.l.b16 %v428
    %v593 = vunpack.c.h.b16 %v428
    %v594 = vunpack.c.l.b16 %v429
    %v595 = vunpack.c.h.b16 %v429
    %v596 = vunpack.c.l.b16 %v430
    %v597 = vunpack.c.h.b16 %v430
    %v598 = vunpack.c.l.b16 %v431
    %v599 = vunpack.c.h.b16 %v431
    %v600 = vunpack.c.l.b16 %v432
    %v601 = vunpack.c.h.b16 %v432
    %v602 = vunpack.c.l.b16 %v433
    %v603 = vunpack.c.h.b16 %v433
    %v604 = vunpack.c.l.b16 %v434
    %v605 = vunpack.c.h.b16 %v434
    %v606 = vunpack.c.l.b16 %v435
    %v607 = vunpack.c.h.b16 %v435
    %v608 = vunpack.c.l.b16 %v436
    %v609 = vunpack.c.h.b16 %v436
    %v610 = vunpack.c.l.b16 %v437
    %v611 = vunpack.c.h.b16 %v437
    %v612 = vunpack.c.l.b16 %v438
    %v613 = vunpack.c.h.b16 %v438
    %v614 = vunpack.c.l.b16 %v439
    %v615 = vunpack.c.h.b16 %v439
    %v616 = vpack.c.b16 %v526, %v520
    %v617 = vpack.c.b16 %v527, %v521
    %v618 = vpack.c.b16 %v528, %v522
    %v619 = vpack.c.b16 %v529, %v523
    %v620 = vpack.c.b16 %v530, %v524
    %v621 = vpack.c.b16 %v531, %v525
    %v622 = vpack.c.b16 %v538, %v532
    %v623 = vpack.c.b16 %v539, %v533
    %v624 = vpack.c.b16 %v540, %v534
    %v625 = vpack.c.b16 %v541, %v535
    %v626 = vpack.c.b16 %v542, %v536
    %v627 = vpack.c.b16 %v543, %v537
    %v628 = vpack.c.b16 %v550, %v544
    %v629 = vpack.c.b16 %v551, %v545
    %v630 = vpack.c.b16 %v552, %v546
    %v631 = vpack.c.b16 %v553, %v547
    %v632 = vpack.c.b16 %v554, %v548
    %v633 = vpack.c.b16 %v555, %v549
    %v634 = vpack.c.b16 %v562, %v556
    %v635 = vpack.c.b16 %v563, %v557
    %v636 = vpack.c.b16 %v564, %v558
    %v637 = vpack.c.b16 %v565, %v559
    %v638 = vpack.c.b16 %v566, %v560
    %v639 = vpack.c.b16 %v567, %v561
    %v640 = vpack.c.b16 %v574, %v568
    %v641 = vpack.c.b16 %v575, %v569
    %v642 = vpack.c.b16 %v576, %v570
    %v643 = vpack.c.b16 %v577, %v571
    %v644 = vpack.c.b16 %v578, %v572
    %v645 = vpack.c.b16 %v579, %v573
    %v646 = vpack.c.b16 %v586, %v580
    %v647 = vpack.c.b16 %v587, %v581
    %v648 = vpack.c.b16 %v588, %v582
    %v649 = vpack.c.b16 %v589, %v583
    %v650 = vpack.c.b16 %v590, %v584
    %v651 = vpack.c.b16 %v591, %v585
    %v652 = vpack.c.b16 %v598, %v592
    %v653 = vpack.c.b16 %v599, %v593
    %v654 = vpack.c.b16 %v600, %v594
    %v655 = vpack.c.b16 %v601, %v595
    %v656 = vpack.c.b16 %v602, %v596
    %v657 = vpack.c.b16 %v603, %v597
    %v658 = vpack.c.b16 %v610, %v604
    %v659 = vpack.c.b16 %v611, %v605
    %v660 = vpack.c.b16 %v612, %v606
    %v661 = vpack.c.b16 %v613, %v607
    %v662 = vpack.c.b16 %v614, %v608
    %v663 = vpack.c.b16 %v615, %v609
    %712 = vmatprep.subr.bf16.mxu0 %v659
    %713 = vmatpush1.bf16.msra.mxu0 %v658
    %714 = vmatprep.subr.bf16.mxu0 %v653
    %715 = vmatpush1.bf16.msra.mxu0 %v652
    %716 = vmatprep.subr.bf16.mxu0 %v647
    %717 = vmatpush1.bf16.msra.mxu0 %v646
    %718 = vmatprep.subr.bf16.mxu0 %v641
    %719 = vmatpush1.bf16.msra.mxu0 %v640
    %720 = vmatprep.subr.bf16.mxu0 %v635
    %721 = vmatpush1.bf16.msra.mxu0 %v634
    %722 = vmatprep.subr.bf16.mxu0 %v629
    %723 = vmatpush1.bf16.msra.mxu0 %v628
    %724 = vmatprep.subr.bf16.mxu0 %v623
    %725 = vmatpush1.bf16.msra.mxu0 %v622
    %726 = vmatprep.subr.bf16.mxu0 %v617
    %727 = vmatpush1.bf16.msra.mxu0 %v616
    %728 = vmatprep.subr.bf16.mxu0 0
    %729 = vmatpush2.bf16.msra.mxu0 0
    %730 = vmatprep.subr.bf16.mxu0 0
    %731 = vmatpush2.bf16.msra.mxu0 0
    %732 = vmatprep.subr.bf16.mxu0 0
    %733 = vmatpush2.bf16.msra.mxu0 0
    %734 = vmatprep.subr.bf16.mxu0 0
    %735 = vmatpush2.bf16.msra.mxu0 0
    %736 = vmatprep.subr.bf16.mxu0 0
    %737 = vmatpush2.bf16.msra.mxu0 0
    %738 = vmatprep.subr.bf16.mxu0 0
    %739 = vmatpush2.bf16.msra.mxu0 0
    %740 = vmatprep.subr.bf16.mxu0 0
    %741 = vmatpush2.bf16.msra.mxu0 0
    %742 = vmatprep.subr.bf16.mxu0 0
    %743 = vmatpush2.bf16.msra.mxu0 0
    %744 = vmatprep.mubr.bf16.mxu0 0
    %745 = vmatmul.mubr.bf16.gmra.mxu0 %v388
    %v746 = vpop.f32.mrf.mxu0
    %v747 = vadd.f32 %v445, %v746
    %v748 = vpop.f32.mrf.mxu0
    %v749 = vadd.f32 %v449, %v748
    %v750 = vpop.f32.mrf.mxu0
    %v751 = vadd.f32 %v445, %v750
    %v752 = vpop.f32.mrf.mxu0
    %v753 = vadd.f32 %v449, %v752
    %754 = vmatprep.mubr.bf16.mxu0 0
    %755 = vmatmul.mubr.bf16.gmra.mxu0 %v389
    %v756 = vpop.f32.mrf.mxu0
    %v757 = vadd.f32 %v445, %v756
    %v758 = vpop.f32.mrf.mxu0
    %v759 = vadd.f32 %v449, %v758
    %v760 = vpop.f32.mrf.mxu0
    %v761 = vadd.f32 %v445, %v760
    %v762 = vpop.f32.mrf.mxu0
    %v763 = vadd.f32 %v449, %v762
    %764 = vmatprep.mubr.bf16.mxu0 0
    %765 = vmatmul.mubr.bf16.gmra.mxu0 %v390
    %v766 = vpop.f32.mrf.mxu0
    %v767 = vadd.f32 %v445, %v766
    %v768 = vpop.f32.mrf.mxu0
    %v769 = vadd.f32 %v449, %v768
    %v770 = vpop.f32.mrf.mxu0
    %v771 = vadd.f32 %v445, %v770
    %v772 = vpop.f32.mrf.mxu0
    %v773 = vadd.f32 %v449, %v772
    %774 = vmatprep.mubr.bf16.mxu0 0
    %775 = vmatmul.mubr.bf16.gmra.mxu0 %v391
    %v776 = vpop.f32.mrf.mxu0
    %v777 = vadd.f32 %v445, %v776
    %v778 = vpop.f32.mrf.mxu0
    %v779 = vadd.f32 %v449, %v778
    %v780 = vpop.f32.mrf.mxu0
    %v781 = vadd.f32 %v445, %v780
    %v782 = vpop.f32.mrf.mxu0
    %v783 = vadd.f32 %v449, %v782
    %784 = vdwg.mxu0
    %785 = vmatprep.subr.bf16.mxu0 %v661
    %786 = vmatpush1.bf16.msra.mxu0 %v660
    %787 = vmatprep.subr.bf16.mxu0 %v655
    %788 = vmatpush1.bf16.msra.mxu0 %v654
    %789 = vmatprep.subr.bf16.mxu0 %v649
    %790 = vmatpush1.bf16.msra.mxu0 %v648
    %791 = vmatprep.subr.bf16.mxu0 %v643
    %792 = vmatpush1.bf16.msra.mxu0 %v642
    %793 = vmatprep.subr.bf16.mxu0 %v637
    %794 = vmatpush1.bf16.msra.mxu0 %v636
    %795 = vmatprep.subr.bf16.mxu0 %v631
    %796 = vmatpush1.bf16.msra.mxu0 %v630
    %797 = vmatprep.subr.bf16.mxu0 %v625
    %798 = vmatpush1.bf16.msra.mxu0 %v624
    %799 = vmatprep.subr.bf16.mxu0 %v619
    %800 = vmatpush1.bf16.msra.mxu0 %v618
    %801 = vmatprep.subr.bf16.mxu0 0
    %802 = vmatpush2.bf16.msra.mxu0 0
    %803 = vmatprep.subr.bf16.mxu0 0
    %804 = vmatpush2.bf16.msra.mxu0 0
    %805 = vmatprep.subr.bf16.mxu0 0
    %806 = vmatpush2.bf16.msra.mxu0 0
    %807 = vmatprep.subr.bf16.mxu0 0
    %808 = vmatpush2.bf16.msra.mxu0 0
    %809 = vmatprep.subr.bf16.mxu0 0
    %810 = vmatpush2.bf16.msra.mxu0 0
    %811 = vmatprep.subr.bf16.mxu0 0
    %812 = vmatpush2.bf16.msra.mxu0 0
    %813 = vmatprep.subr.bf16.mxu0 0
    %814 = vmatpush2.bf16.msra.mxu0 0
    %815 = vmatprep.subr.bf16.mxu0 0
    %816 = vmatpush2.bf16.msra.mxu0 0
    %817 = vmatprep.mubr.bf16.mxu0 0
    %818 = vmatmul.mubr.bf16.gmra.mxu0 %v388
    %v819 = vpop.f32.mrf.mxu0
    %v820 = vadd.f32 %v453, %v819
    %v821 = vpop.f32.mrf.mxu0
    %v822 = vadd.f32 %v457, %v821
    %v823 = vpop.f32.mrf.mxu0
    %v824 = vadd.f32 %v453, %v823
    %v825 = vpop.f32.mrf.mxu0
    %v826 = vadd.f32 %v457, %v825
    %827 = vmatprep.mubr.bf16.mxu0 0
    %828 = vmatmul.mubr.bf16.gmra.mxu0 %v389
    %v829 = vpop.f32.mrf.mxu0
    %v830 = vadd.f32 %v453, %v829
    %v831 = vpop.f32.mrf.mxu0
    %v832 = vadd.f32 %v457, %v831
    %v833 = vpop.f32.mrf.mxu0
    %v834 = vadd.f32 %v453, %v833
    %v835 = vpop.f32.mrf.mxu0
    %v836 = vadd.f32 %v457, %v835
    %837 = vmatprep.mubr.bf16.mxu0 0
    %838 = vmatmul.mubr.bf16.gmra.mxu0 %v390
    %v839 = vpop.f32.mrf.mxu0
    %v840 = vadd.f32 %v453, %v839
    %v841 = vpop.f32.mrf.mxu0
    %v842 = vadd.f32 %v457, %v841
    %v843 = vpop.f32.mrf.mxu0
    %v844 = vadd.f32 %v453, %v843
    %v845 = vpop.f32.mrf.mxu0
    %v846 = vadd.f32 %v457, %v845
    %847 = vmatprep.mubr.bf16.mxu0 0
    %848 = vmatmul.mubr.bf16.gmra.mxu0 %v391
    %v849 = vpop.f32.mrf.mxu0
    %v850 = vadd.f32 %v453, %v849
    %v851 = vpop.f32.mrf.mxu0
    %v852 = vadd.f32 %v457, %v851
    %v853 = vpop.f32.mrf.mxu0
    %v854 = vadd.f32 %v453, %v853
    %v855 = vpop.f32.mrf.mxu0
    %v856 = vadd.f32 %v457, %v855
    %857 = vdwg.mxu0
    %858 = vmatprep.subr.bf16.mxu0 %v663
    %859 = vmatpush1.bf16.msra.mxu0 %v662
    %860 = vmatprep.subr.bf16.mxu0 %v657
    %861 = vmatpush1.bf16.msra.mxu0 %v656
    %862 = vmatprep.subr.bf16.mxu0 %v651
    %863 = vmatpush1.bf16.msra.mxu0 %v650
    %864 = vmatprep.subr.bf16.mxu0 %v645
    %865 = vmatpush1.bf16.msra.mxu0 %v644
    %866 = vmatprep.subr.bf16.mxu0 %v639
    %867 = vmatpush1.bf16.msra.mxu0 %v638
    %868 = vmatprep.subr.bf16.mxu0 %v633
    %869 = vmatpush1.bf16.msra.mxu0 %v632
    %870 = vmatprep.subr.bf16.mxu0 %v627
    %871 = vmatpush1.bf16.msra.mxu0 %v626
    %872 = vmatprep.subr.bf16.mxu0 %v621
    %873 = vmatpush1.bf16.msra.mxu0 %v620
    %874 = vmatprep.subr.bf16.mxu0 0
    %875 = vmatpush2.bf16.msra.mxu0 0
    %876 = vmatprep.subr.bf16.mxu0 0
    %877 = vmatpush2.bf16.msra.mxu0 0
    %878 = vmatprep.subr.bf16.mxu0 0
    %879 = vmatpush2.bf16.msra.mxu0 0
    %880 = vmatprep.subr.bf16.mxu0 0
    %881 = vmatpush2.bf16.msra.mxu0 0
    %882 = vmatprep.subr.bf16.mxu0 0
    %883 = vmatpush2.bf16.msra.mxu0 0
    %884 = vmatprep.subr.bf16.mxu0 0
    %885 = vmatpush2.bf16.msra.mxu0 0
    %886 = vmatprep.subr.bf16.mxu0 0
    %887 = vmatpush2.bf16.msra.mxu0 0
    %888 = vmatprep.subr.bf16.mxu0 0
    %889 = vmatpush2.bf16.msra.mxu0 0
    %890 = vmatprep.mubr.bf16.mxu0 0
    %891 = vmatmul.mubr.bf16.gmra.mxu0 %v388
    %v892 = vpop.f32.mrf.mxu0
    %v893 = vadd.f32 %v461, %v892
    %v894 = vpop.f32.mrf.mxu0
    %v895 = vadd.f32 %v465, %v894
    %v896 = vpop.f32.mrf.mxu0
    %v897 = vadd.f32 %v461, %v896
    %v898 = vpop.f32.mrf.mxu0
    %v899 = vadd.f32 %v465, %v898
    %900 = vmatprep.mubr.bf16.mxu0 0
    %901 = vmatmul.mubr.bf16.gmra.mxu0 %v389
    %v902 = vpop.f32.mrf.mxu0
    %v903 = vadd.f32 %v461, %v902
    %v904 = vpop.f32.mrf.mxu0
    %v905 = vadd.f32 %v465, %v904
    %v906 = vpop.f32.mrf.mxu0
    %v907 = vadd.f32 %v461, %v906
    %v908 = vpop.f32.mrf.mxu0
    %v909 = vadd.f32 %v465, %v908
    %910 = vmatprep.mubr.bf16.mxu0 0
    %911 = vmatmul.mubr.bf16.gmra.mxu0 %v390
    %v912 = vpop.f32.mrf.mxu0
    %v913 = vadd.f32 %v461, %v912
    %v914 = vpop.f32.mrf.mxu0
    %v915 = vadd.f32 %v465, %v914
    %v916 = vpop.f32.mrf.mxu0
    %v917 = vadd.f32 %v461, %v916
    %v918 = vpop.f32.mrf.mxu0
    %v919 = vadd.f32 %v465, %v918
    %920 = vmatprep.mubr.bf16.mxu0 0
    %921 = vmatmul.mubr.bf16.gmra.mxu0 %v391
    %v922 = vpop.f32.mrf.mxu0
    %v923 = vadd.f32 %v461, %v922
    %v924 = vpop.f32.mrf.mxu0
    %v925 = vadd.f32 %v465, %v924
    %v926 = vpop.f32.mrf.mxu0
    %v927 = vadd.f32 %v461, %v926
    %v928 = vpop.f32.mrf.mxu0
    %v929 = vadd.f32 %v465, %v928
    %930 = vdwg.mxu0
    %931 = vst [vmem:[%s5] sm:$0xff] %v747
    %932 = vst [vmem:[%s5 + $0x8] sm:$0xff] %v749
    %933 = vst [vmem:[%s5 + $0x10] sm:$0xff] %v820
    %934 = vst [vmem:[%s5 + $0x18] sm:$0xff] %v822
    %935 = vst [vmem:[%s5 + $0x20] sm:$0xff] %v893
    %936 = vst [vmem:[%s5 + $0x28] sm:$0xff] %v895
    %937 = vst [vmem:[%s5 + $0x30] sm:$0xff] %v751
    %938 = vst [vmem:[%s5 + $0x38] sm:$0xff] %v753
    %939 = vst [vmem:[%s5 + $0x40] sm:$0xff] %v824
    %940 = vst [vmem:[%s5 + $0x48] sm:$0xff] %v826
    %941 = vst [vmem:[%s5 + $0x50] sm:$0xff] %v897
    %942 = vst [vmem:[%s5 + $0x58] sm:$0xff] %v899
    %943 = vst [vmem:[%s5 + $0x60] sm:$0xff] %v757
    %944 = vst [vmem:[%s5 + $0x68] sm:$0xff] %v759
    %945 = vst [vmem:[%s5 + $0x70] sm:$0xff] %v830
    %946 = vst [vmem:[%s5 + $0x78] sm:$0xff] %v832
    %947 = vst [vmem:[%s5 + $0x80] sm:$0xff] %v903
    %948 = vst [vmem:[%s5 + $0x88] sm:$0xff] %v905
    %949 = vst [vmem:[%s5 + $0x90] sm:$0xff] %v761
    %950 = vst [vmem:[%s5 + $0x98] sm:$0xff] %v763
    %951 = vst [vmem:[%s5 + $0xa0] sm:$0xff] %v834
    %952 = vst [vmem:[%s5 + $0xa8] sm:$0xff] %v836
    %953 = vst [vmem:[%s5 + $0xb0] sm:$0xff] %v907
    %954 = vst [vmem:[%s5 + $0xb8] sm:$0xff] %v909
    %955 = vst [vmem:[%s5 + $0xc0] sm:$0xff] %v767
    %956 = vst [vmem:[%s5 + $0xc8] sm:$0xff] %v769
    %957 = vst [vmem:[%s5 + $0xd0] sm:$0xff] %v840
    %958 = vst [vmem:[%s5 + $0xd8] sm:$0xff] %v842
    %959 = vst [vmem:[%s5 + $0xe0] sm:$0xff] %v913
    %960 = vst [vmem:[%s5 + $0xe8] sm:$0xff] %v915
    %961 = vst [vmem:[%s5 + $0xf0] sm:$0xff] %v771
    %962 = vst [vmem:[%s5 + $0xf8] sm:$0xff] %v773
    %963 = vst [vmem:[%s5 + $0x100] sm:$0xff] %v844
    %964 = vst [vmem:[%s5 + $0x108] sm:$0xff] %v846
    %965 = vst [vmem:[%s5 + $0x110] sm:$0xff] %v917
    %966 = vst [vmem:[%s5 + $0x118] sm:$0xff] %v919
    %967 = vst [vmem:[%s5 + $0x120] sm:$0xff] %v777
    %968 = vst [vmem:[%s5 + $0x128] sm:$0xff] %v779
    %969 = vst [vmem:[%s5 + $0x130] sm:$0xff] %v850
    %970 = vst [vmem:[%s5 + $0x138] sm:$0xff] %v852
    %971 = vst [vmem:[%s5 + $0x140] sm:$0xff] %v923
    %972 = vst [vmem:[%s5 + $0x148] sm:$0xff] %v925
    %973 = vst [vmem:[%s5 + $0x150] sm:$0xff] %v781
    %974 = vst [vmem:[%s5 + $0x158] sm:$0xff] %v783
    %975 = vst [vmem:[%s5 + $0x160] sm:$0xff] %v854
    %976 = vst [vmem:[%s5 + $0x168] sm:$0xff] %v856
    %977 = vst [vmem:[%s5 + $0x170] sm:$0xff] %v927
    %978 = vst [vmem:[%s5 + $0x178] sm:$0xff] %v929
    // Predicated region
    $region26: #{bigru_layer_forward.2} parent=1 // pred_check
      _
    $region27: #{bigru_layer_forward.2} parent=1 // pred_check_branch
      %980 = sbr.rel (0) target = $region29
    $region28: #{bigru_layer_forward.2} parent=1 // pred_region
      _
    $region29: #{bigru_layer_forward.2} parent=1 // pred_fallthru
      _
    // Predicated region
    $region30: #{bigru_layer_forward.2} parent=1 // pred_check
      _
    $region31: #{bigru_layer_forward.2} parent=1 // pred_check_branch
      %982 = sbr.rel (0) target = $region33
    $region32: #{bigru_layer_forward.2} parent=1 // pred_region
      _
    $region33: #{bigru_layer_forward.2} parent=1 // pred_fallthru
      _
    %983 = vsyncpa [#allocation3], 1

// kernel: bigru_layer_forward.3
$region0: #{bigru_layer_forward.3}
  #allocation0 [shape = 'u32[]', space=smem, size = 0x4, offset = 0x4, fixed_abs, tag = 'smem constant byte address 0x4 - core index']
  #allocation1 [shape = 'u32[144,128]{1,0:T(1,128)}', space=vmem, size = 0x12000, scoped, tag = 'internal scratch']
  #allocation2 [shape = 'f32[8,128]{1,0:T(8,128)}', space=vmem, size = 0x1000, scoped, tag = 'scratch operand']
  %s0 = inlined_call_operand.vmem [shape: f32[2,8,8,384], index: 0, kind: input, shape index: {}]
  %s1 = inlined_call_operand.vmem [shape: f32[2,128,384], index: 1, kind: input, shape index: {}]
  %s2 = inlined_call_operand.vmem [shape: f32[2,1,384], index: 2, kind: input, shape index: {}]
  %s3 = inlined_call_operand.vmem [shape: f32[2,8,8,128], index: 3, kind: output, shape index: {}]
  %s4 = sld [smem:[#allocation0]]
  $region49: #{bigru_layer_forward.3} parent=0
    _
  %s6 = ssub.s32 1, %s4
  %s7 = scalar_select 0, %s6, %s4
  loop: start=0, step=1, limit=4
  $region2: #{bigru_layer_forward.3} parent=0 // loop_pre_header
    _
  $region3: #{bigru_layer_forward.3} parent=0 // loop_header
    %s9 = sphi 0, %s13
    %p10 = scmp.ge.s32.totalorder %s9, 4
    %s16 = sphi 0, %s28
    %s17 = sphi 0, %s24
    %s18 = sphi 0, %s16
    %s19 = sphi 0, %s17
    %s20 = sphi 0, %s18
    %s21 = sphi 0, %s19
    %s33 = sphi 0, %s35
    %s36 = sphi 0, %s33
    %s37 = sphi 0, %s36
    %s53 = sphi 0, %s37
    %s59 = sphi 0, %s61
    %s62 = sphi 0, %s59
    %s63 = sphi 0, %s62
    %s79 = sphi 0, %s63
    %s85 = sphi 0, %s87
    %s88 = sphi 0, %s85
    %s89 = sphi 0, %s88
    %s105 = sphi 0, %s89
    %s113 = sphi 0, %s115
    %s116 = sphi 0, %s113
    %s117 = sphi 0, %s116
    %s133 = sphi 0, %s117
  $region4: #{bigru_layer_forward.3} parent=0 // loop_header_branch
    %12 = sbr.rel (%p10) target = $region8
  $region5: #{bigru_layer_forward.3} parent=0 // loop_body
    %s14 = ssub.s32 %s9, 1
    %s15 = ssub.s32 %s9, 2
    %s22 = sadd.s32 1, %s17
    %p23 = scmp.ge.s32.totalorder %s22, 1
    %s24 = scalar_select %p23, 0, %s22
    %s25 = sadd.s32 1, %s16
    %s26 = scalar_select %p23, %s25, %s16
    %p27 = scmp.ge.s32.totalorder %s26, 2
    %s28 = scalar_select %p27, 0, %s26
    %s29 = ssub.s32 %s16, %s28
    %s30 = ssub.s32 %s17, %s24
    %s31 = sor.u32 %s29, %s30
    %p32 = scmp.eq.s32.totalorder %s31, 0
    %s34 = sadd.s32 %s33, 1
    %s35 = scalar_select %p32, %s33, %s34
    %p38 = pneg %p32
    %p39 = scmp.eq.s32.totalorder %s9, 1
    %p40 = por %p38, %p39
    %p41 = scmp.ne.s32.totalorder %s33, %s36
    %p42 = scmp.eq.s32.totalorder %s9, 0
    %p43 = por %p41, %p42
    %p44 = scmp.ne.s32.totalorder %s33, %s36
    %p45 = scmp.eq.s32.totalorder %s14, 1
    %p46 = por %p44, %p45
    %p47 = scmp.ne.s32.totalorder %s36, %s37
    %p48 = scmp.eq.s32.totalorder %s14, 0
    %p49 = por %p47, %p48
    %p50 = scmp.ne.s32.totalorder %s36, %s37
    %p51 = scmp.eq.s32.totalorder %s15, 1
    %p52 = por %p50, %p51
    %p54 = scmp.ne.s32.totalorder %s37, %s53
    %p55 = scmp.eq.s32.totalorder %s15, 0
    %p56 = por %p54, %p55
    %s57 = ssub.s32 %s16, %s28
    %p58 = scmp.eq.s32.totalorder %s57, 0
    %s60 = sadd.s32 %s59, 1
    %s61 = scalar_select %p58, %s59, %s60
    %p64 = pneg %p58
    %p65 = scmp.eq.s32.totalorder %s9, 1
    %p66 = por %p64, %p65
    %p67 = scmp.ne.s32.totalorder %s59, %s62
    %p68 = scmp.eq.s32.totalorder %s9, 0
    %p69 = por %p67, %p68
    %p70 = scmp.ne.s32.totalorder %s59, %s62
    %p71 = scmp.eq.s32.totalorder %s14, 1
    %p72 = por %p70, %p71
    %p73 = scmp.ne.s32.totalorder %s62, %s63
    %p74 = scmp.eq.s32.totalorder %s14, 0
    %p75 = por %p73, %p74
    %p76 = scmp.ne.s32.totalorder %s62, %s63
    %p77 = scmp.eq.s32.totalorder %s15, 1
    %p78 = por %p76, %p77
    %p80 = scmp.ne.s32.totalorder %s63, %s79
    %p81 = scmp.eq.s32.totalorder %s15, 0
    %p82 = por %p80, %p81
    %s83 = ssub.s32 %s16, %s28
    %p84 = scmp.eq.s32.totalorder %s83, 0
    %s86 = sadd.s32 %s85, 1
    %s87 = scalar_select %p84, %s85, %s86
    %p90 = pneg %p84
    %p91 = scmp.eq.s32.totalorder %s9, 1
    %p92 = por %p90, %p91
    %p93 = scmp.ne.s32.totalorder %s85, %s88
    %p94 = scmp.eq.s32.totalorder %s9, 0
    %p95 = por %p93, %p94
    %p96 = scmp.ne.s32.totalorder %s85, %s88
    %p97 = scmp.eq.s32.totalorder %s14, 1
    %p98 = por %p96, %p97
    %p99 = scmp.ne.s32.totalorder %s88, %s89
    %p100 = scmp.eq.s32.totalorder %s14, 0
    %p101 = por %p99, %p100
    %p102 = scmp.ne.s32.totalorder %s88, %s89
    %p103 = scmp.eq.s32.totalorder %s15, 1
    %p104 = por %p102, %p103
    %p106 = scmp.ne.s32.totalorder %s89, %s105
    %p107 = scmp.eq.s32.totalorder %s15, 0
    %p108 = por %p106, %p107
    %s109 = ssub.s32 %s16, %s28
    %s110 = ssub.s32 %s17, %s24
    %s111 = sor.u32 %s109, %s110
    %p112 = scmp.eq.s32.totalorder %s111, 0
    %s114 = sadd.s32 %s113, 1
    %s115 = scalar_select %p112, %s113, %s114
    %p118 = pneg %p112
    %p119 = scmp.eq.s32.totalorder %s9, 1
    %p120 = por %p118, %p119
    %p121 = scmp.ne.s32.totalorder %s113, %s116
    %p122 = scmp.eq.s32.totalorder %s9, 0
    %p123 = por %p121, %p122
    %p124 = scmp.ne.s32.totalorder %s113, %s116
    %p125 = scmp.eq.s32.totalorder %s14, 1
    %p126 = por %p124, %p125
    %p127 = scmp.ne.s32.totalorder %s116, %s117
    %p128 = scmp.eq.s32.totalorder %s14, 0
    %p129 = por %p127, %p128
    %p130 = scmp.ne.s32.totalorder %s116, %s117
    %p131 = scmp.eq.s32.totalorder %s15, 1
    %p132 = por %p130, %p131
    %p134 = scmp.ne.s32.totalorder %s117, %s133
    %p135 = scmp.eq.s32.totalorder %s15, 0
    %p136 = por %p134, %p135
    %p137 = scmp.le.s32.totalorder 1, %s9
    %p138 = scmp.lt.s32.totalorder %s9, 3
    %p139 = pnand %p137, %p138
    %p140 = pneg %p139
    // Predicated region
    $region9: #{bigru_layer_forward.3} parent=5 // pred_check
      _
    $region10: #{bigru_layer_forward.3} parent=5 // pred_check_branch
      %142 = sbr.rel (%p139) target = $region12
    $region11: #{bigru_layer_forward.3} parent=5 // pred_region
      %s143 = ssub.s32 %s9, 1
    $region12: #{bigru_layer_forward.3} parent=5 // pred_fallthru
      _
    %p144 = scmp.lt.s32.totalorder %s9, 2
    // Predicated region
    $region13: #{bigru_layer_forward.3} parent=5 // pred_check
      %p145 = pneg %p144
    $region14: #{bigru_layer_forward.3} parent=5 // pred_check_branch
      %147 = sbr.rel (%p145) target = $region16
    $region15: #{bigru_layer_forward.3} parent=5 // pred_region
      // Predicated region
      $region17: #{bigru_layer_forward.3} parent=15 // pred_check
        %p148 = pneg %p43
      $region18: #{bigru_layer_forward.3} parent=15 // pred_check_branch
        %150 = sbr.rel (%p148) target = $region20
      $region19: #{bigru_layer_forward.3} parent=15 // pred_region
        %s151 = smul.u32 8, %s17
        %p152 = scmp.lt.s32.totalorder %s16, 1
        %s153 = scalar_select %p152, %s16, 1
        %p154 = scmp.lt.s32.totalorder %s151, 7
        %s155 = scalar_select %p154, %s151, 7
        %s156 = smul.addr %s155, 3
        %s157 = smul.addr %s153, 24
        %s158 = sadd.s32 %s156, %s157
        %s159 = smul.addr %s158, 8
        %s160 = scalar_lea.vmem %s0, %s159
        %s161 = smul.u32 8, %s17
      $region20: #{bigru_layer_forward.3} parent=15 // pred_fallthru
        _
      // Predicated region
      $region21: #{bigru_layer_forward.3} parent=15 // pred_check
        %p162 = pneg %p69
      $region22: #{bigru_layer_forward.3} parent=15 // pred_check_branch
        %164 = sbr.rel (%p162) target = $region24
      $region23: #{bigru_layer_forward.3} parent=15 // pred_region
        %p165 = scmp.lt.s32.totalorder %s16, 1
        %s166 = scalar_select %p165, %s16, 1
        %s167 = smul.addr %s166, 48
        %s168 = smul.addr %s167, 8
        %s169 = scalar_lea.vmem %s1, %s168
      $region24: #{bigru_layer_forward.3} parent=15 // pred_fallthru
        _
      // Predicated region
      $region25: #{bigru_layer_forward.3} parent=15 // pred_check
        %p170 = pneg %p95
      $region26: #{bigru_layer_forward.3} parent=15 // pred_check_branch
        %172 = sbr.rel (%p170) target = $region28
      $region27: #{bigru_layer_forward.3} parent=15 // pred_region
        %p173 = scmp.lt.s32.totalorder %s16, 1
        %s174 = scalar_select %p173, %s16, 1
        %s175 = smul.addr %s174, 3
        %s176 = scalar_lea.vmem %s2, %s175
      $region28: #{bigru_layer_forward.3} parent=15 // pred_fallthru
        _
    $region16: #{bigru_layer_forward.3} parent=5 // pred_fallthru
      _
    %p177 = scmp.le.s32.totalorder 1, %s9
    %p178 = scmp.lt.s32.totalorder %s9, 3
    %p179 = pnand %p177, %p178
    %p180 = pneg %p179
    // Predicated region
    $region29: #{bigru_layer_forward.3} parent=5 // pred_check
      _
    $region30: #{bigru_layer_forward.3} parent=5 // pred_check_branch
      %182 = sbr.rel (%p179) target = $region32
    $region31: #{bigru_layer_forward.3} parent=5 // pred_region
      %s183 = ssub.s32 %s9, 1
      %s184 = smul.u32 8, %s19
      %p185 = scmp.lt.s32.totalorder %s18, 1
      %s186 = scalar_select %p185, %s18, 1
      %p187 = scmp.lt.s32.totalorder %s184, 7
      %s188 = scalar_select %p187, %s184, 7
      %s189 = smul.addr %s188, 3
      %s190 = smul.addr %s186, 24
      %s191 = sadd.s32 %s189, %s190
      %s192 = smul.addr %s191, 8
      %s193 = scalar_lea.vmem %s0, %s192
      %p194 = pneg %p49
      %p195 = pneg %p46
      %p196 = scmp.lt.s32.totalorder %s18, 1
      %s197 = scalar_select %p196, %s18, 1
      %s198 = smul.addr %s197, 48
      %s199 = smul.addr %s198, 8
      %s200 = scalar_lea.vmem %s1, %s199
      %p201 = pneg %p75
      %p202 = pneg %p72
      %p203 = scmp.lt.s32.totalorder %s18, 1
      %s204 = scalar_select %p203, %s18, 1
      %s205 = smul.addr %s204, 3
      %s206 = scalar_lea.vmem %s2, %s205
      %p207 = pneg %p101
      %p208 = pneg %p98
      %p209 = pneg %p129
      %p210 = pneg %p126
      %s211 = smul.u32 8, %s19
      %p212 = scmp.lt.s32.totalorder %s18, 1
      %s213 = scalar_select %p212, %s18, 1
      %p214 = scmp.lt.s32.totalorder %s211, 7
      %s215 = scalar_select %p214, %s211, 7
      %s216 = smul.addr %s213, 8
      %s217 = sadd.s32 %s215, %s216
      %s218 = smul.addr %s217, 8
      %s219 = scalar_lea.vmem %s3, %s218
      %s220 = smul.u32 8, %s19
      %p221 = scmp.lt.s32.totalorder %s18, 1
      %s222 = scalar_select %p221, %s18, 1
      %p223 = scmp.lt.s32.totalorder %s220, 7
      %s224 = scalar_select %p223, %s220, 7
      %s225 = smul.addr %s224, 3
      %s226 = smul.addr %s222, 24
      %s227 = sadd.s32 %s225, %s226
      %s228 = smul.addr %s227, 8
      %s229 = scalar_lea.vmem %s0, %s228
      %s230 = smul.u32 8, %s19
      %p231 = scmp.lt.s32.totalorder %s18, 1
      %s232 = scalar_select %p231, %s18, 1
      %s233 = smul.addr %s232, 48
      %s234 = smul.addr %s233, 8
      %s235 = scalar_lea.vmem %s1, %s234
      %p236 = scmp.lt.s32.totalorder %s18, 1
      %s237 = scalar_select %p236, %s18, 1
      %s238 = smul.addr %s237, 3
      %s239 = scalar_lea.vmem %s2, %s238
      %s240 = smul.u32 8, %s19
      %p241 = scmp.lt.s32.totalorder %s18, 1
      %s242 = scalar_select %p241, %s18, 1
      %p243 = scmp.lt.s32.totalorder %s240, 7
      %s244 = scalar_select %p243, %s240, 7
      %s245 = smul.addr %s242, 8
      %s246 = sadd.s32 %s244, %s245
      %s247 = smul.addr %s246, 8
      %s248 = scalar_lea.vmem %s3, %s247
      %s249 = smul.u32 8, %s19
      %p250 = scmp.eq.s32.totalorder %s19, 0
      // Predicated region
      $region33: #{bigru_layer_forward.3} parent=31 // pred_check
        %p251 = pneg %p250
      $region34: #{bigru_layer_forward.3} parent=31 // pred_check_branch
        %253 = sbr.rel (%p251) target = $region36
      $region35: #{bigru_layer_forward.3} parent=31 // pred_region
        %254 = vst [vmem:[#allocation2] sm:$0xff] 0.0
      $region36: #{bigru_layer_forward.3} parent=31 // pred_fallthru
        _
      %v255 = vld [vmem:[%s235] sm:$0xff]
      %v256 = vld [vmem:[%s235 + $0x8] sm:$0xff]
      %v257 = vld [vmem:[%s235 + $0x10] sm:$0xff]
      %v258 = vld [vmem:[%s235 + $0x18] sm:$0xff]
      %v259 = vld [vmem:[%s235 + $0x20] sm:$0xff]
      %v260 = vld [vmem:[%s235 + $0x28] sm:$0xff]
      %v261 = vld [vmem:[%s235 + $0x30] sm:$0xff]
      %v262 = vld [vmem:[%s235 + $0x38] sm:$0xff]
      %v263 = vld [vmem:[%s235 + $0x40] sm:$0xff]
      %v264 = vld [vmem:[%s235 + $0x48] sm:$0xff]
      %v265 = vld [vmem:[%s235 + $0x50] sm:$0xff]
      %v266 = vld [vmem:[%s235 + $0x58] sm:$0xff]
      %v267 = vld [vmem:[%s235 + $0x60] sm:$0xff]
      %v268 = vld [vmem:[%s235 + $0x68] sm:$0xff]
      %v269 = vld [vmem:[%s235 + $0x70] sm:$0xff]
      %v270 = vld [vmem:[%s235 + $0x78] sm:$0xff]
      %v271 = vld [vmem:[%s235 + $0x80] sm:$0xff]
      %v272 = vld [vmem:[%s235 + $0x88] sm:$0xff]
      %v273 = vld [vmem:[%s235 + $0x90] sm:$0xff]
      %v274 = vld [vmem:[%s235 + $0x98] sm:$0xff]
      %v275 = vld [vmem:[%s235 + $0xa0] sm:$0xff]
      %v276 = vld [vmem:[%s235 + $0xa8] sm:$0xff]
      %v277 = vld [vmem:[%s235 + $0xb0] sm:$0xff]
      %v278 = vld [vmem:[%s235 + $0xb8] sm:$0xff]
      %v279 = vld [vmem:[%s235 + $0xc0] sm:$0xff]
      %v280 = vld [vmem:[%s235 + $0xc8] sm:$0xff]
      %v281 = vld [vmem:[%s235 + $0xd0] sm:$0xff]
      %v282 = vld [vmem:[%s235 + $0xd8] sm:$0xff]
      %v283 = vld [vmem:[%s235 + $0xe0] sm:$0xff]
      %v284 = vld [vmem:[%s235 + $0xe8] sm:$0xff]
      %v285 = vld [vmem:[%s235 + $0xf0] sm:$0xff]
      %v286 = vld [vmem:[%s235 + $0xf8] sm:$0xff]
      %v287 = vld [vmem:[%s235 + $0x100] sm:$0xff]
      %v288 = vld [vmem:[%s235 + $0x108] sm:$0xff]
      %v289 = vld [vmem:[%s235 + $0x110] sm:$0xff]
      %v290 = vld [vmem:[%s235 + $0x118] sm:$0xff]
      %v291 = vld [vmem:[%s235 + $0x120] sm:$0xff]
      %v292 = vld [vmem:[%s235 + $0x128] sm:$0xff]
      %v293 = vld [vmem:[%s235 + $0x130] sm:$0xff]
      %v294 = vld [vmem:[%s235 + $0x138] sm:$0xff]
      %v295 = vld [vmem:[%s235 + $0x140] sm:$0xff]
      %v296 = vld [vmem:[%s235 + $0x148] sm:$0xff]
      %v297 = vld [vmem:[%s235 + $0x150] sm:$0xff]
      %v298 = vld [vmem:[%s235 + $0x158] sm:$0xff]
      %v299 = vld [vmem:[%s235 + $0x160] sm:$0xff]
      %v300 = vld [vmem:[%s235 + $0x168] sm:$0xff]
      %v301 = vld [vmem:[%s235 + $0x170] sm:$0xff]
      %v302 = vld [vmem:[%s235 + $0x178] sm:$0xff]
      %v303 = vld [vmem:[%s239] sm:$0x7]
      %v304 = vld [vmem:[#allocation2] sm:$0xff]
      %v306 = vlaneseq
      %v307 = vshrl.u32 %v306, 7
      %v308 = vsub.s32 0, %v307
      %v309 = vrot.slane %v303, %v308
      %v310 = vlaneseq
      %v311 = vshrl.u32 %v310, 7
      %v312 = vsub.s32 1, %v311
      %v313 = vrot.slane %v303, %v312
      %v314 = vlaneseq
      %v315 = vshrl.u32 %v314, 7
      %v316 = vsub.s32 2, %v315
      %v317 = vrot.slane %v303, %v316
      %321 = vmatprep.subr.mxu0 %v301
      %322 = vmatpush1.msra.mxu0 %v300
      %323 = vmatprep.subr.mxu0 %v298
      %324 = vmatpush1.msra.mxu0 %v297
      %325 = vmatprep.subr.mxu0 %v295
      %326 = vmatpush1.msra.mxu0 %v294
      %327 = vmatprep.subr.mxu0 %v292
      %328 = vmatpush1.msra.mxu0 %v291
      %329 = vmatprep.subr.mxu0 %v289
      %330 = vmatpush1.msra.mxu0 %v288
      %331 = vmatprep.subr.mxu0 %v286
      %332 = vmatpush1.msra.mxu0 %v285
      %333 = vmatprep.subr.mxu0 %v283
      %334 = vmatpush1.msra.mxu0 %v282
      %335 = vmatprep.subr.mxu0 %v280
      %336 = vmatpush1.msra.mxu0 %v279
      %337 = vmatprep.subr.mxu0 %v277
      %338 = vmatpush1.msra.mxu0 %v276
      %339 = vmatprep.subr.mxu0 %v274
      %340 = vmatpush1.msra.mxu0 %v273
      %341 = vmatprep.subr.mxu0 %v271
      %342 = vmatpush1.msra.mxu0 %v270
      %343 = vmatprep.subr.mxu0 %v268
      %344 = vmatpush1.msra.mxu0 %v267
      %345 = vmatprep.subr.mxu0 %v265
      %346 = vmatpush1.msra.mxu0 %v264
      %347 = vmatprep.subr.mxu0 %v262
      %348 = vmatpush1.msra.mxu0 %v261
      %349 = vmatprep.subr.mxu0 %v259
      %350 = vmatpush1.msra.mxu0 %v258
      %351 = vmatprep.subr.mxu0 %v256
      %352 = vmatpush1.msra.mxu0 %v255
      %353 = vmatprep.subr.mxu0 0.0
      %354 = vmatpush2.msra.mxu0 0.0
      %355 = vmatprep.subr.mxu0 0.0
      %356 = vmatpush2.msra.mxu0 0.0
      %357 = vmatprep.subr.mxu0 0.0
      %358 = vmatpush2.msra.mxu0 0.0
      %359 = vmatprep.subr.mxu0 0.0
      %360 = vmatpush2.msra.mxu0 0.0
      %361 = vmatprep.subr.mxu0 0.0
      %362 = vmatpush2.msra.mxu0 0.0
      %363 = vmatprep.subr.mxu0 0.0
      %364 = vmatpush2.msra.mxu0 0.0
      %365 = vmatprep.subr.mxu0 0.0
      %366 = vmatpush2.msra.mxu0 0.0
      %367 = vmatprep.subr.mxu0 0.0
      %368 = vmatpush2.msra.mxu0 0.0
      %369 = vmatprep.subr.mxu0 0.0
      %370 = vmatpush2.msra.mxu0 0.0
      %371 = vmatprep.subr.mxu0 0.0
      %372 = vmatpush2.msra.mxu0 0.0
      %373 = vmatprep.subr.mxu0 0.0
      %374 = vmatpush2.msra.mxu0 0.0
      %375 = vmatprep.subr.mxu0 0.0
      %376 = vmatpush2.msra.mxu0 0.0
      %377 = vmatprep.subr.mxu0 0.0
      %378 = vmatpush2.msra.mxu0 0.0
      %379 = vmatprep.subr.mxu0 0.0
      %380 = vmatpush2.msra.mxu0 0.0
      %381 = vmatprep.subr.mxu0 0.0
      %382 = vmatpush2.msra.mxu0 0.0
      %383 = vmatprep.subr.mxu0 0.0
      %384 = vmatpush2.msra.mxu0 0.0
      %385 = vmatprep.mubr.f32.mxu0 0.0
      %386 = vmatmul.mubr.f32.gmra.mxu0 %v304
      %v387 = vpop.f32.mrf.mxu0
      %v388 = vadd.f32 %v309, %v387
      %v389 = vpop.f32.mrf.mxu0
      %v390 = vadd.f32 %v313, %v389
      %391 = vdwg.mxu0
      %392 = vmatprep.subr.mxu0 0.0
      %393 = vmatpush1.msra.mxu0 %v302
      %394 = vmatprep.subr.mxu0 0.0
      %395 = vmatpush1.msra.mxu0 %v299
      %396 = vmatprep.subr.mxu0 0.0
      %397 = vmatpush1.msra.mxu0 %v296
      %398 = vmatprep.subr.mxu0 0.0
      %399 = vmatpush1.msra.mxu0 %v293
      %400 = vmatprep.subr.mxu0 0.0
      %401 = vmatpush1.msra.mxu0 %v290
      %402 = vmatprep.subr.mxu0 0.0
      %403 = vmatpush1.msra.mxu0 %v287
      %404 = vmatprep.subr.mxu0 0.0
      %405 = vmatpush1.msra.mxu0 %v284
      %406 = vmatprep.subr.mxu0 0.0
      %407 = vmatpush1.msra.mxu0 %v281
      %408 = vmatprep.subr.mxu0 0.0
      %409 = vmatpush1.msra.mxu0 %v278
      %410 = vmatprep.subr.mxu0 0.0
      %411 = vmatpush1.msra.mxu0 %v275
      %412 = vmatprep.subr.mxu0 0.0
      %413 = vmatpush1.msra.mxu0 %v272
      %414 = vmatprep.subr.mxu0 0.0
      %415 = vmatpush1.msra.mxu0 %v269
      %416 = vmatprep.subr.mxu0 0.0
      %417 = vmatpush1.msra.mxu0 %v266
      %418 = vmatprep.subr.mxu0 0.0
      %419 = vmatpush1.msra.mxu0 %v263
      %420 = vmatprep.subr.mxu0 0.0
      %421 = vmatpush1.msra.mxu0 %v260
      %422 = vmatprep.subr.mxu0 0.0
      %423 = vmatpush1.msra.mxu0 %v257
      %424 = vmatprep.subr.mxu0 0.0
      %425 = vmatpush2.msra.mxu0 0.0
      %426 = vmatprep.subr.mxu0 0.0
      %427 = vmatpush2.msra.mxu0 0.0
      %428 = vmatprep.subr.mxu0 0.0
      %429 = vmatpush2.msra.mxu0 0.0
      %430 = vmatprep.subr.mxu0 0.0
      %431 = vmatpush2.msra.mxu0 0.0
      %432 = vmatprep.subr.mxu0 0.0
      %433 = vmatpush2.msra.mxu0 0.0
      %434 = vmatprep.subr.mxu0 0.0
      %435 = vmatpush2.msra.mxu0 0.0
      %436 = vmatprep.subr.mxu0 0.0
      %437 = vmatpush2.msra.mxu0 0.0
      %438 = vmatprep.subr.mxu0 0.0
      %439 = vmatpush2.msra.mxu0 0.0
      %440 = vmatprep.subr.mxu0 0.0
      %441 = vmatpush2.msra.mxu0 0.0
      %442 = vmatprep.subr.mxu0 0.0
      %443 = vmatpush2.msra.mxu0 0.0
      %444 = vmatprep.subr.mxu0 0.0
      %445 = vmatpush2.msra.mxu0 0.0
      %446 = vmatprep.subr.mxu0 0.0
      %447 = vmatpush2.msra.mxu0 0.0
      %448 = vmatprep.subr.mxu0 0.0
      %449 = vmatpush2.msra.mxu0 0.0
      %450 = vmatprep.subr.mxu0 0.0
      %451 = vmatpush2.msra.mxu0 0.0
      %452 = vmatprep.subr.mxu0 0.0
      %453 = vmatpush2.msra.mxu0 0.0
      %454 = vmatprep.subr.mxu0 0.0
      %455 = vmatpush2.msra.mxu0 0.0
      %456 = vmatprep.mubr.f32.mxu0 0.0
      %457 = vmatmul.mubr.f32.gmra.mxu0 %v304
      %v458 = vpop.f32.mrf.mxu0
      %v459 = vadd.f32 %v317, %v458
      %v460 = vpop.f32.mrf.mxu0
      %461 = vdwg.mxu0
      %v462 = vld [vmem:[%s229] sm:$0xff]
      %v463 = vld [vmem:[%s229 + $0x8] sm:$0xff]
      %v464 = vld [vmem:[%s229 + $0x10] sm:$0xff]
      %v465 = vadd.f32 %v462, %v388
      %v466 = vxor.u32 %v465, 2147483648
      %v467 = vmul.f32 %v466, 1.442695
      %v468 = vpow.pop %v467
      %v469 = vadd.f32 %v468, 1.0
      %v470 = vrcp.pop %v469
      %v471 = vmul.f32 1.0, %v470
      %v472 = vadd.f32 %v463, %v390
      %v473 = vxor.u32 %v472, 2147483648
      %v474 = vmul.f32 %v473, 1.442695
      %v475 = vpow.pop %v474
      %v476 = vadd.f32 %v475, 1.0
      %v477 = vrcp.pop %v476
      %v478 = vmul.f32 1.0, %v477
      %v479 = vmul.f32 %v471, %v459
      %v480 = vadd.f32 %v464, %v479
      %v481 = vtanh.pop %v480
      %v482 = vsub.f32 1.0, %v478
      %v483 = vmul.f32 %v482, %v481
      %v484 = vmul.f32 %v478, %v304
      %v485 = vadd.f32 %v483, %v484
      %486 = vst [vmem:[%s248] sm:$0xff] %v485
      %487 = vmatprep.subr.mxu0 %v301
      %488 = vmatpush1.msra.mxu0 %v300
      %489 = vmatprep.subr.mxu0 %v298
      %490 = vmatpush1.msra.mxu0 %v297
      %491 = vmatprep.subr.mxu0 %v295
      %492 = vmatpush1.msra.mxu0 %v294
      %493 = vmatprep.subr.mxu0 %v292
      %494 = vmatpush1.msra.mxu0 %v291
      %495 = vmatprep.subr.mxu0 %v289
      %496 = vmatpush1.msra.mxu0 %v288
      %497 = vmatprep.subr.mxu0 %v286
      %498 = vmatpush1.msra.mxu0 %v285
      %499 = vmatprep.subr.mxu0 %v283
      %500 = vmatpush1.msra.mxu0 %v282
      %501 = vmatprep.subr.mxu0 %v280
      %502 = vmatpush1.msra.mxu0 %v279
      %503 = vmatprep.subr.mxu0 %v277
      %504 = vmatpush1.msra.mxu0 %v276
      %505 = vmatprep.subr.mxu0 %v274
      %506 = vmatpush1.msra.mxu0 %v273
      %507 = vmatprep.subr.mxu0 %v271
      %508 = vmatpush1.msra.mxu0 %v270
      %509 = vmatprep.subr.mxu0 %v268
      %510 = vmatpush1.msra.mxu0 %v267
      %511 = vmatprep.subr.mxu0 %v265
      %512 = vmatpush1.msra.mxu0 %v264
      %513 = vmatprep.subr.mxu0 %v262
      %514 = vmatpush1.msra.mxu0 %v261
      %515 = vmatprep.subr.mxu0 %v259
      %516 = vmatpush1.msra.mxu0 %v258
      %517 = vmatprep.subr.mxu0 %v256
      %518 = vmatpush1.msra.mxu0 %v255
      %519 = vmatprep.subr.mxu0 0.0
      %520 = vmatpush2.msra.mxu0 0.0
      %521 = vmatprep.subr.mxu0 0.0
      %522 = vmatpush2.msra.mxu0 0.0
      %523 = vmatprep.subr.mxu0 0.0
      %524 = vmatpush2.msra.mxu0 0.0
      %525 = vmatprep.subr.mxu0 0.0
      %526 = vmatpush2.msra.mxu0 0.0
      %527 = vmatprep.subr.mxu0 0.0
      %528 = vmatpush2.msra.mxu0 0.0
      %529 = vmatprep.subr.mxu0 0.0
      %530 = vmatpush2.msra.mxu0 0.0
      %531 = vmatprep.subr.mxu0 0.0
      %532 = vmatpush2.msra.mxu0 0.0
      %533 = vmatprep.subr.mxu0 0.0
      %534 = vmatpush2.msra.mxu0 0.0
      %535 = vmatprep.subr.mxu0 0.0
      %536 = vmatpush2.msra.mxu0 0.0
      %537 = vmatprep.subr.mxu0 0.0
      %538 = vmatpush2.msra.mxu0 0.0
      %539 = vmatprep.subr.mxu0 0.0
      %540 = vmatpush2.msra.mxu0 0.0
      %541 = vmatprep.subr.mxu0 0.0
      %542 = vmatpush2.msra.mxu0 0.0
      %543 = vmatprep.subr.mxu0 0.0
      %544 = vmatpush2.msra.mxu0 0.0
      %545 = vmatprep.subr.mxu0 0.0
      %546 = vmatpush2.msra.mxu0 0.0
      %547 = vmatprep.subr.mxu0 0.0
      %548 = vmatpush2.msra.mxu0 0.0
      %549 = vmatprep.subr.mxu0 0.0
      %550 = vmatpush2.msra.mxu0 0.0
      %551 = vmatprep.mubr.f32.mxu0 0.0
      %552 = vmatmul.mubr.f32.gmra.mxu0 %v485
      %v553 = vpop.f32.mrf.mxu0
      %v554 = vadd.f32 %v309, %v553
      %v555 = vpop.f32.mrf.mxu0
      %v556 = vadd.f32 %v313, %v555
      %557 = vdwg.mxu0
      %558 = vmatprep.subr.mxu0 0.0
      %559 = vmatpush1.msra.mxu0 %v302
      %560 = vmatprep.subr.mxu0 0.0
      %561 = vmatpush1.msra.mxu0 %v299
      %562 = vmatprep.subr.mxu0 0.0
      %563 = vmatpush1.msra.mxu0 %v296
      %564 = vmatprep.subr.mxu0 0.0
      %565 = vmatpush1.msra.mxu0 %v293
      %566 = vmatprep.subr.mxu0 0.0
      %567 = vmatpush1.msra.mxu0 %v290
      %568 = vmatprep.subr.mxu0 0.0
      %569 = vmatpush1.msra.mxu0 %v287
      %570 = vmatprep.subr.mxu0 0.0
      %571 = vmatpush1.msra.mxu0 %v284
      %572 = vmatprep.subr.mxu0 0.0
      %573 = vmatpush1.msra.mxu0 %v281
      %574 = vmatprep.subr.mxu0 0.0
      %575 = vmatpush1.msra.mxu0 %v278
      %576 = vmatprep.subr.mxu0 0.0
      %577 = vmatpush1.msra.mxu0 %v275
      %578 = vmatprep.subr.mxu0 0.0
      %579 = vmatpush1.msra.mxu0 %v272
      %580 = vmatprep.subr.mxu0 0.0
      %581 = vmatpush1.msra.mxu0 %v269
      %582 = vmatprep.subr.mxu0 0.0
      %583 = vmatpush1.msra.mxu0 %v266
      %584 = vmatprep.subr.mxu0 0.0
      %585 = vmatpush1.msra.mxu0 %v263
      %586 = vmatprep.subr.mxu0 0.0
      %587 = vmatpush1.msra.mxu0 %v260
      %588 = vmatprep.subr.mxu0 0.0
      %589 = vmatpush1.msra.mxu0 %v257
      %590 = vmatprep.subr.mxu0 0.0
      %591 = vmatpush2.msra.mxu0 0.0
      %592 = vmatprep.subr.mxu0 0.0
      %593 = vmatpush2.msra.mxu0 0.0
      %594 = vmatprep.subr.mxu0 0.0
      %595 = vmatpush2.msra.mxu0 0.0
      %596 = vmatprep.subr.mxu0 0.0
      %597 = vmatpush2.msra.mxu0 0.0
      %598 = vmatprep.subr.mxu0 0.0
      %599 = vmatpush2.msra.mxu0 0.0
      %600 = vmatprep.subr.mxu0 0.0
      %601 = vmatpush2.msra.mxu0 0.0
      %602 = vmatprep.subr.mxu0 0.0
      %603 = vmatpush2.msra.mxu0 0.0
      %604 = vmatprep.subr.mxu0 0.0
      %605 = vmatpush2.msra.mxu0 0.0
      %606 = vmatprep.subr.mxu0 0.0
      %607 = vmatpush2.msra.mxu0 0.0
      %608 = vmatprep.subr.mxu0 0.0
      %609 = vmatpush2.msra.mxu0 0.0
      %610 = vmatprep.subr.mxu0 0.0
      %611 = vmatpush2.msra.mxu0 0.0
      %612 = vmatprep.subr.mxu0 0.0
      %613 = vmatpush2.msra.mxu0 0.0
      %614 = vmatprep.subr.mxu0 0.0
      %615 = vmatpush2.msra.mxu0 0.0
      %616 = vmatprep.subr.mxu0 0.0
      %617 = vmatpush2.msra.mxu0 0.0
      %618 = vmatprep.subr.mxu0 0.0
      %619 = vmatpush2.msra.mxu0 0.0
      %620 = vmatprep.subr.mxu0 0.0
      %621 = vmatpush2.msra.mxu0 0.0
      %622 = vmatprep.mubr.f32.mxu0 0.0
      %623 = vmatmul.mubr.f32.gmra.mxu0 %v485
      %v624 = vpop.f32.mrf.mxu0
      %v625 = vadd.f32 %v317, %v624
      %v626 = vpop.f32.mrf.mxu0
      %627 = vdwg.mxu0
      %s628 = scalar_lea.vmem %s229, 24
      %v629 = vld [vmem:[%s628] sm:$0xff]
      %v630 = vld [vmem:[%s628 + $0x8] sm:$0xff]
      %v631 = vld [vmem:[%s628 + $0x10] sm:$0xff]
      %v632 = vadd.f32 %v629, %v554
      %v633 = vxor.u32 %v632, 2147483648
      %v634 = vmul.f32 %v633, 1.442695
      %v635 = vpow.pop %v634
      %v636 = vadd.f32 %v635, 1.0
      %v637 = vrcp.pop %v636
      %v638 = vmul.f32 1.0, %v637
      %v639 = vadd.f32 %v630, %v556
      %v640 = vxor.u32 %v639, 2147483648
      %v641 = vmul.f32 %v640, 1.442695
      %v642 = vpow.pop %v641
      %v643 = vadd.f32 %v642, 1.0
      %v644 = vrcp.pop %v643
      %v645 = vmul.f32 1.0, %v644
      %v646 = vmul.f32 %v638, %v625
      %v647 = vadd.f32 %v631, %v646
      %v648 = vtanh.pop %v647
      %v649 = vsub.f32 1.0, %v645
      %v650 = vmul.f32 %v649, %v648
      %v651 = vmul.f32 %v645, %v485
      %v652 = vadd.f32 %v650, %v651
      %s653 = scalar_lea.vmem %s248, 8
      %654 = vst [vmem:[%s653] sm:$0xff] %v652
      %655 = vmatprep.subr.mxu0 %v301
      %656 = vmatpush1.msra.mxu0 %v300
      %657 = vmatprep.subr.mxu0 %v298
      %658 = vmatpush1.msra.mxu0 %v297
      %659 = vmatprep.subr.mxu0 %v295
      %660 = vmatpush1.msra.mxu0 %v294
      %661 = vmatprep.subr.mxu0 %v292
      %662 = vmatpush1.msra.mxu0 %v291
      %663 = vmatprep.subr.mxu0 %v289
      %664 = vmatpush1.msra.mxu0 %v288
      %665 = vmatprep.subr.mxu0 %v286
      %666 = vmatpush1.msra.mxu0 %v285
      %667 = vmatprep.subr.mxu0 %v283
      %668 = vmatpush1.msra.mxu0 %v282
      %669 = vmatprep.subr.mxu0 %v280
      %670 = vmatpush1.msra.mxu0 %v279
      %671 = vmatprep.subr.mxu0 %v277
      %672 = vmatpush1.msra.mxu0 %v276
      %673 = vmatprep.subr.mxu0 %v274
      %674 = vmatpush1.msra.mxu0 %v273
      %675 = vmatprep.subr.mxu0 %v271
      %676 = vmatpush1.msra.mxu0 %v270
      %677 = vmatprep.subr.mxu0 %v268
      %678 = vmatpush1.msra.mxu0 %v267
      %679 = vmatprep.subr.mxu0 %v265
      %680 = vmatpush1.msra.mxu0 %v264
      %681 = vmatprep.subr.mxu0 %v262
      %682 = vmatpush1.msra.mxu0 %v261
      %683 = vmatprep.subr.mxu0 %v259
      %684 = vmatpush1.msra.mxu0 %v258
      %685 = vmatprep.subr.mxu0 %v256
      %686 = vmatpush1.msra.mxu0 %v255
      %687 = vmatprep.subr.mxu0 0.0
      %688 = vmatpush2.msra.mxu0 0.0
      %689 = vmatprep.subr.mxu0 0.0
      %690 = vmatpush2.msra.mxu0 0.0
      %691 = vmatprep.subr.mxu0 0.0
      %692 = vmatpush2.msra.mxu0 0.0
      %693 = vmatprep.subr.mxu0 0.0
      %694 = vmatpush2.msra.mxu0 0.0
      %695 = vmatprep.subr.mxu0 0.0
      %696 = vmatpush2.msra.mxu0 0.0
      %697 = vmatprep.subr.mxu0 0.0
      %698 = vmatpush2.msra.mxu0 0.0
      %699 = vmatprep.subr.mxu0 0.0
      %700 = vmatpush2.msra.mxu0 0.0
      %701 = vmatprep.subr.mxu0 0.0
      %702 = vmatpush2.msra.mxu0 0.0
      %703 = vmatprep.subr.mxu0 0.0
      %704 = vmatpush2.msra.mxu0 0.0
      %705 = vmatprep.subr.mxu0 0.0
      %706 = vmatpush2.msra.mxu0 0.0
      %707 = vmatprep.subr.mxu0 0.0
      %708 = vmatpush2.msra.mxu0 0.0
      %709 = vmatprep.subr.mxu0 0.0
      %710 = vmatpush2.msra.mxu0 0.0
      %711 = vmatprep.subr.mxu0 0.0
      %712 = vmatpush2.msra.mxu0 0.0
      %713 = vmatprep.subr.mxu0 0.0
      %714 = vmatpush2.msra.mxu0 0.0
      %715 = vmatprep.subr.mxu0 0.0
      %716 = vmatpush2.msra.mxu0 0.0
      %717 = vmatprep.subr.mxu0 0.0
      %718 = vmatpush2.msra.mxu0 0.0
      %719 = vmatprep.mubr.f32.mxu0 0.0
      %720 = vmatmul.mubr.f32.gmra.mxu0 %v652
      %v721 = vpop.f32.mrf.mxu0
      %v722 = vadd.f32 %v309, %v721
      %v723 = vpop.f32.mrf.mxu0
      %v724 = vadd.f32 %v313, %v723
      %725 = vdwg.mxu0
      %726 = vmatprep.subr.mxu0 0.0
      %727 = vmatpush1.msra.mxu0 %v302
      %728 = vmatprep.subr.mxu0 0.0
      %729 = vmatpush1.msra.mxu0 %v299
      %730 = vmatprep.subr.mxu0 0.0
      %731 = vmatpush1.msra.mxu0 %v296
      %732 = vmatprep.subr.mxu0 0.0
      %733 = vmatpush1.msra.mxu0 %v293
      %734 = vmatprep.subr.mxu0 0.0
      %735 = vmatpush1.msra.mxu0 %v290
      %736 = vmatprep.subr.mxu0 0.0
      %737 = vmatpush1.msra.mxu0 %v287
      %738 = vmatprep.subr.mxu0 0.0
      %739 = vmatpush1.msra.mxu0 %v284
      %740 = vmatprep.subr.mxu0 0.0
      %741 = vmatpush1.msra.mxu0 %v281
      %742 = vmatprep.subr.mxu0 0.0
      %743 = vmatpush1.msra.mxu0 %v278
      %744 = vmatprep.subr.mxu0 0.0
      %745 = vmatpush1.msra.mxu0 %v275
      %746 = vmatprep.subr.mxu0 0.0
      %747 = vmatpush1.msra.mxu0 %v272
      %748 = vmatprep.subr.mxu0 0.0
      %749 = vmatpush1.msra.mxu0 %v269
      %750 = vmatprep.subr.mxu0 0.0
      %751 = vmatpush1.msra.mxu0 %v266
      %752 = vmatprep.subr.mxu0 0.0
      %753 = vmatpush1.msra.mxu0 %v263
      %754 = vmatprep.subr.mxu0 0.0
      %755 = vmatpush1.msra.mxu0 %v260
      %756 = vmatprep.subr.mxu0 0.0
      %757 = vmatpush1.msra.mxu0 %v257
      %758 = vmatprep.subr.mxu0 0.0
      %759 = vmatpush2.msra.mxu0 0.0
      %760 = vmatprep.subr.mxu0 0.0
      %761 = vmatpush2.msra.mxu0 0.0
      %762 = vmatprep.subr.mxu0 0.0
      %763 = vmatpush2.msra.mxu0 0.0
      %764 = vmatprep.subr.mxu0 0.0
      %765 = vmatpush2.msra.mxu0 0.0
      %766 = vmatprep.subr.mxu0 0.0
      %767 = vmatpush2.msra.mxu0 0.0
      %768 = vmatprep.subr.mxu0 0.0
      %769 = vmatpush2.msra.mxu0 0.0
      %770 = vmatprep.subr.mxu0 0.0
      %771 = vmatpush2.msra.mxu0 0.0
      %772 = vmatprep.subr.mxu0 0.0
      %773 = vmatpush2.msra.mxu0 0.0
      %774 = vmatprep.subr.mxu0 0.0
      %775 = vmatpush2.msra.mxu0 0.0
      %776 = vmatprep.subr.mxu0 0.0
      %777 = vmatpush2.msra.mxu0 0.0
      %778 = vmatprep.subr.mxu0 0.0
      %779 = vmatpush2.msra.mxu0 0.0
      %780 = vmatprep.subr.mxu0 0.0
      %781 = vmatpush2.msra.mxu0 0.0
      %782 = vmatprep.subr.mxu0 0.0
      %783 = vmatpush2.msra.mxu0 0.0
      %784 = vmatprep.subr.mxu0 0.0
      %785 = vmatpush2.msra.mxu0 0.0
      %786 = vmatprep.subr.mxu0 0.0
      %787 = vmatpush2.msra.mxu0 0.0
      %788 = vmatprep.subr.mxu0 0.0
      %789 = vmatpush2.msra.mxu0 0.0
      %790 = vmatprep.mubr.f32.mxu0 0.0
      %791 = vmatmul.mubr.f32.gmra.mxu0 %v652
      %v792 = vpop.f32.mrf.mxu0
      %v793 = vadd.f32 %v317, %v792
      %v794 = vpop.f32.mrf.mxu0
      %795 = vdwg.mxu0
      %s796 = scalar_lea.vmem %s229, 48
      %v797 = vld [vmem:[%s796] sm:$0xff]
      %v798 = vld [vmem:[%s796 + $0x8] sm:$0xff]
      %v799 = vld [vmem:[%s796 + $0x10] sm:$0xff]
      %v800 = vadd.f32 %v797, %v722
      %v801 = vxor.u32 %v800, 2147483648
      %v802 = vmul.f32 %v801, 1.442695
      %v803 = vpow.pop %v802
      %v804 = vadd.f32 %v803, 1.0
      %v805 = vrcp.pop %v804
      %v806 = vmul.f32 1.0, %v805
      %v807 = vadd.f32 %v798, %v724
      %v808 = vxor.u32 %v807, 2147483648
      %v809 = vmul.f32 %v808, 1.442695
      %v810 = vpow.pop %v809
      %v811 = vadd.f32 %v810, 1.0
      %v812 = vrcp.pop %v811
      %v813 = vmul.f32 1.0, %v812
      %v814 = vmul.f32 %v806, %v793
      %v815 = vadd.f32 %v799, %v814
      %v816 = vtanh.pop %v815
      %v817 = vsub.f32 1.0, %v813
      %v818 = vmul.f32 %v817, %v816
      %v819 = vmul.f32 %v813, %v652
      %v820 = vadd.f32 %v818, %v819
      %s821 = scalar_lea.vmem %s248, 16
      %822 = vst [vmem:[%s821] sm:$0xff] %v820
      %823 = vmatprep.subr.mxu0 %v301
      %824 = vmatpush1.msra.mxu0 %v300
      %825 = vmatprep.subr.mxu0 %v298
      %826 = vmatpush1.msra.mxu0 %v297
      %827 = vmatprep.subr.mxu0 %v295
      %828 = vmatpush1.msra.mxu0 %v294
      %829 = vmatprep.subr.mxu0 %v292
      %830 = vmatpush1.msra.mxu0 %v291
      %831 = vmatprep.subr.mxu0 %v289
      %832 = vmatpush1.msra.mxu0 %v288
      %833 = vmatprep.subr.mxu0 %v286
      %834 = vmatpush1.msra.mxu0 %v285
      %835 = vmatprep.subr.mxu0 %v283
      %836 = vmatpush1.msra.mxu0 %v282
      %837 = vmatprep.subr.mxu0 %v280
      %838 = vmatpush1.msra.mxu0 %v279
      %839 = vmatprep.subr.mxu0 %v277
      %840 = vmatpush1.msra.mxu0 %v276
      %841 = vmatprep.subr.mxu0 %v274
      %842 = vmatpush1.msra.mxu0 %v273
      %843 = vmatprep.subr.mxu0 %v271
      %844 = vmatpush1.msra.mxu0 %v270
      %845 = vmatprep.subr.mxu0 %v268
      %846 = vmatpush1.msra.mxu0 %v267
      %847 = vmatprep.subr.mxu0 %v265
      %848 = vmatpush1.msra.mxu0 %v264
      %849 = vmatprep.subr.mxu0 %v262
      %850 = vmatpush1.msra.mxu0 %v261
      %851 = vmatprep.subr.mxu0 %v259
      %852 = vmatpush1.msra.mxu0 %v258
      %853 = vmatprep.subr.mxu0 %v256
      %854 = vmatpush1.msra.mxu0 %v255
      %855 = vmatprep.subr.mxu0 0.0
      %856 = vmatpush2.msra.mxu0 0.0
      %857 = vmatprep.subr.mxu0 0.0
      %858 = vmatpush2.msra.mxu0 0.0
      %859 = vmatprep.subr.mxu0 0.0
      %860 = vmatpush2.msra.mxu0 0.0
      %861 = vmatprep.subr.mxu0 0.0
      %862 = vmatpush2.msra.mxu0 0.0
      %863 = vmatprep.subr.mxu0 0.0
      %864 = vmatpush2.msra.mxu0 0.0
      %865 = vmatprep.subr.mxu0 0.0
      %866 = vmatpush2.msra.mxu0 0.0
      %867 = vmatprep.subr.mxu0 0.0
      %868 = vmatpush2.msra.mxu0 0.0
      %869 = vmatprep.subr.mxu0 0.0
      %870 = vmatpush2.msra.mxu0 0.0
      %871 = vmatprep.subr.mxu0 0.0
      %872 = vmatpush2.msra.mxu0 0.0
      %873 = vmatprep.subr.mxu0 0.0
      %874 = vmatpush2.msra.mxu0 0.0
      %875 = vmatprep.subr.mxu0 0.0
      %876 = vmatpush2.msra.mxu0 0.0
      %877 = vmatprep.subr.mxu0 0.0
      %878 = vmatpush2.msra.mxu0 0.0
      %879 = vmatprep.subr.mxu0 0.0
      %880 = vmatpush2.msra.mxu0 0.0
      %881 = vmatprep.subr.mxu0 0.0
      %882 = vmatpush2.msra.mxu0 0.0
      %883 = vmatprep.subr.mxu0 0.0
      %884 = vmatpush2.msra.mxu0 0.0
      %885 = vmatprep.subr.mxu0 0.0
      %886 = vmatpush2.msra.mxu0 0.0
      %887 = vmatprep.mubr.f32.mxu0 0.0
      %888 = vmatmul.mubr.f32.gmra.mxu0 %v820
      %v889 = vpop.f32.mrf.mxu0
      %v890 = vadd.f32 %v309, %v889
      %v891 = vpop.f32.mrf.mxu0
      %v892 = vadd.f32 %v313, %v891
      %893 = vdwg.mxu0
      %894 = vmatprep.subr.mxu0 0.0
      %895 = vmatpush1.msra.mxu0 %v302
      %896 = vmatprep.subr.mxu0 0.0
      %897 = vmatpush1.msra.mxu0 %v299
      %898 = vmatprep.subr.mxu0 0.0
      %899 = vmatpush1.msra.mxu0 %v296
      %900 = vmatprep.subr.mxu0 0.0
      %901 = vmatpush1.msra.mxu0 %v293
      %902 = vmatprep.subr.mxu0 0.0
      %903 = vmatpush1.msra.mxu0 %v290
      %904 = vmatprep.subr.mxu0 0.0
      %905 = vmatpush1.msra.mxu0 %v287
      %906 = vmatprep.subr.mxu0 0.0
      %907 = vmatpush1.msra.mxu0 %v284
      %908 = vmatprep.subr.mxu0 0.0
      %909 = vmatpush1.msra.mxu0 %v281
      %910 = vmatprep.subr.mxu0 0.0
      %911 = vmatpush1.msra.mxu0 %v278
      %912 = vmatprep.subr.mxu0 0.0
      %913 = vmatpush1.msra.mxu0 %v275
      %914 = vmatprep.subr.mxu0 0.0
      %915 = vmatpush1.msra.mxu0 %v272
      %916 = vmatprep.subr.mxu0 0.0
      %917 = vmatpush1.msra.mxu0 %v269
      %918 = vmatprep.subr.mxu0 0.0
      %919 = vmatpush1.msra.mxu0 %v266
      %920 = vmatprep.subr.mxu0 0.0
      %921 = vmatpush1.msra.mxu0 %v263
      %922 = vmatprep.subr.mxu0 0.0
      %923 = vmatpush1.msra.mxu0 %v260
      %924 = vmatprep.subr.mxu0 0.0
      %925 = vmatpush1.msra.mxu0 %v257
      %926 = vmatprep.subr.mxu0 0.0
      %927 = vmatpush2.msra.mxu0 0.0
      %928 = vmatprep.subr.mxu0 0.0
      %929 = vmatpush2.msra.mxu0 0.0
      %930 = vmatprep.subr.mxu0 0.0
      %931 = vmatpush2.msra.mxu0 0.0
      %932 = vmatprep.subr.mxu0 0.0
      %933 = vmatpush2.msra.mxu0 0.0
      %934 = vmatprep.subr.mxu0 0.0
      %935 = vmatpush2.msra.mxu0 0.0
      %936 = vmatprep.subr.mxu0 0.0
      %937 = vmatpush2.msra.mxu0 0.0
      %938 = vmatprep.subr.mxu0 0.0
      %939 = vmatpush2.msra.mxu0 0.0
      %940 = vmatprep.subr.mxu0 0.0
      %941 = vmatpush2.msra.mxu0 0.0
      %942 = vmatprep.subr.mxu0 0.0
      %943 = vmatpush2.msra.mxu0 0.0
      %944 = vmatprep.subr.mxu0 0.0
      %945 = vmatpush2.msra.mxu0 0.0
      %946 = vmatprep.subr.mxu0 0.0
      %947 = vmatpush2.msra.mxu0 0.0
      %948 = vmatprep.subr.mxu0 0.0
      %949 = vmatpush2.msra.mxu0 0.0
      %950 = vmatprep.subr.mxu0 0.0
      %951 = vmatpush2.msra.mxu0 0.0
      %952 = vmatprep.subr.mxu0 0.0
      %953 = vmatpush2.msra.mxu0 0.0
      %954 = vmatprep.subr.mxu0 0.0
      %955 = vmatpush2.msra.mxu0 0.0
      %956 = vmatprep.subr.mxu0 0.0
      %957 = vmatpush2.msra.mxu0 0.0
      %958 = vmatprep.mubr.f32.mxu0 0.0
      %959 = vmatmul.mubr.f32.gmra.mxu0 %v820
      %v960 = vpop.f32.mrf.mxu0
      %v961 = vadd.f32 %v317, %v960
      %v962 = vpop.f32.mrf.mxu0
      %963 = vdwg.mxu0
      %s964 = scalar_lea.vmem %s229, 72
      %v965 = vld [vmem:[%s964] sm:$0xff]
      %v966 = vld [vmem:[%s964 + $0x8] sm:$0xff]
      %v967 = vld [vmem:[%s964 + $0x10] sm:$0xff]
      %v968 = vadd.f32 %v965, %v890
      %v969 = vxor.u32 %v968, 2147483648
      %v970 = vmul.f32 %v969, 1.442695
      %v971 = vpow.pop %v970
      %v972 = vadd.f32 %v971, 1.0
      %v973 = vrcp.pop %v972
      %v974 = vmul.f32 1.0, %v973
      %v975 = vadd.f32 %v966, %v892
      %v976 = vxor.u32 %v975, 2147483648
      %v977 = vmul.f32 %v976, 1.442695
      %v978 = vpow.pop %v977
      %v979 = vadd.f32 %v978, 1.0
      %v980 = vrcp.pop %v979
      %v981 = vmul.f32 1.0, %v980
      %v982 = vmul.f32 %v974, %v961
      %v983 = vadd.f32 %v967, %v982
      %v984 = vtanh.pop %v983
      %v985 = vsub.f32 1.0, %v981
      %v986 = vmul.f32 %v985, %v984
      %v987 = vmul.f32 %v981, %v820
      %v988 = vadd.f32 %v986, %v987
      %s989 = scalar_lea.vmem %s248, 24
      %990 = vst [vmem:[%s989] sm:$0xff] %v988
      %991 = vmatprep.subr.mxu0 %v301
      %992 = vmatpush1.msra.mxu0 %v300
      %993 = vmatprep.subr.mxu0 %v298
      %994 = vmatpush1.msra.mxu0 %v297
      %995 = vmatprep.subr.mxu0 %v295
      %996 = vmatpush1.msra.mxu0 %v294
      %997 = vmatprep.subr.mxu0 %v292
      %998 = vmatpush1.msra.mxu0 %v291
      %999 = vmatprep.subr.mxu0 %v289
      %1000 = vmatpush1.msra.mxu0 %v288
      %1001 = vmatprep.subr.mxu0 %v286
      %1002 = vmatpush1.msra.mxu0 %v285
      %1003 = vmatprep.subr.mxu0 %v283
      %1004 = vmatpush1.msra.mxu0 %v282
      %1005 = vmatprep.subr.mxu0 %v280
      %1006 = vmatpush1.msra.mxu0 %v279
      %1007 = vmatprep.subr.mxu0 %v277
      %1008 = vmatpush1.msra.mxu0 %v276
      %1009 = vmatprep.subr.mxu0 %v274
      %1010 = vmatpush1.msra.mxu0 %v273
      %1011 = vmatprep.subr.mxu0 %v271
      %1012 = vmatpush1.msra.mxu0 %v270
      %1013 = vmatprep.subr.mxu0 %v268
      %1014 = vmatpush1.msra.mxu0 %v267
      %1015 = vmatprep.subr.mxu0 %v265
      %1016 = vmatpush1.msra.mxu0 %v264
      %1017 = vmatprep.subr.mxu0 %v262
      %1018 = vmatpush1.msra.mxu0 %v261
      %1019 = vmatprep.subr.mxu0 %v259
      %1020 = vmatpush1.msra.mxu0 %v258
      %1021 = vmatprep.subr.mxu0 %v256
      %1022 = vmatpush1.msra.mxu0 %v255
      %1023 = vmatprep.subr.mxu0 0.0
      %1024 = vmatpush2.msra.mxu0 0.0
      %1025 = vmatprep.subr.mxu0 0.0
      %1026 = vmatpush2.msra.mxu0 0.0
      %1027 = vmatprep.subr.mxu0 0.0
      %1028 = vmatpush2.msra.mxu0 0.0
      %1029 = vmatprep.subr.mxu0 0.0
      %1030 = vmatpush2.msra.mxu0 0.0
      %1031 = vmatprep.subr.mxu0 0.0
      %1032 = vmatpush2.msra.mxu0 0.0
      %1033 = vmatprep.subr.mxu0 0.0
      %1034 = vmatpush2.msra.mxu0 0.0
      %1035 = vmatprep.subr.mxu0 0.0
      %1036 = vmatpush2.msra.mxu0 0.0
      %1037 = vmatprep.subr.mxu0 0.0
      %1038 = vmatpush2.msra.mxu0 0.0
      %1039 = vmatprep.subr.mxu0 0.0
      %1040 = vmatpush2.msra.mxu0 0.0
      %1041 = vmatprep.subr.mxu0 0.0
      %1042 = vmatpush2.msra.mxu0 0.0
      %1043 = vmatprep.subr.mxu0 0.0
      %1044 = vmatpush2.msra.mxu0 0.0
      %1045 = vmatprep.subr.mxu0 0.0
      %1046 = vmatpush2.msra.mxu0 0.0
      %1047 = vmatprep.subr.mxu0 0.0
      %1048 = vmatpush2.msra.mxu0 0.0
      %1049 = vmatprep.subr.mxu0 0.0
      %1050 = vmatpush2.msra.mxu0 0.0
      %1051 = vmatprep.subr.mxu0 0.0
      %1052 = vmatpush2.msra.mxu0 0.0
      %1053 = vmatprep.subr.mxu0 0.0
      %1054 = vmatpush2.msra.mxu0 0.0
      %1055 = vmatprep.mubr.f32.mxu0 0.0
      %1056 = vmatmul.mubr.f32.gmra.mxu0 %v988
      %v1057 = vpop.f32.mrf.mxu0
      %v1058 = vadd.f32 %v309, %v1057
      %v1059 = vpop.f32.mrf.mxu0
      %v1060 = vadd.f32 %v313, %v1059
      %1061 = vdwg.mxu0
      %1062 = vmatprep.subr.mxu0 0.0
      %1063 = vmatpush1.msra.mxu0 %v302
      %1064 = vmatprep.subr.mxu0 0.0
      %1065 = vmatpush1.msra.mxu0 %v299
      %1066 = vmatprep.subr.mxu0 0.0
      %1067 = vmatpush1.msra.mxu0 %v296
      %1068 = vmatprep.subr.mxu0 0.0
      %1069 = vmatpush1.msra.mxu0 %v293
      %1070 = vmatprep.subr.mxu0 0.0
      %1071 = vmatpush1.msra.mxu0 %v290
      %1072 = vmatprep.subr.mxu0 0.0
      %1073 = vmatpush1.msra.mxu0 %v287
      %1074 = vmatprep.subr.mxu0 0.0
      %1075 = vmatpush1.msra.mxu0 %v284
      %1076 = vmatprep.subr.mxu0 0.0
      %1077 = vmatpush1.msra.mxu0 %v281
      %1078 = vmatprep.subr.mxu0 0.0
      %1079 = vmatpush1.msra.mxu0 %v278
      %1080 = vmatprep.subr.mxu0 0.0
      %1081 = vmatpush1.msra.mxu0 %v275
      %1082 = vmatprep.subr.mxu0 0.0
      %1083 = vmatpush1.msra.mxu0 %v272
      %1084 = vmatprep.subr.mxu0 0.0
      %1085 = vmatpush1.msra.mxu0 %v269
      %1086 = vmatprep.subr.mxu0 0.0
      %1087 = vmatpush1.msra.mxu0 %v266
      %1088 = vmatprep.subr.mxu0 0.0
      %1089 = vmatpush1.msra.mxu0 %v263
      %1090 = vmatprep.subr.mxu0 0.0
      %1091 = vmatpush1.msra.mxu0 %v260
      %1092 = vmatprep.subr.mxu0 0.0
      %1093 = vmatpush1.msra.mxu0 %v257
      %1094 = vmatprep.subr.mxu0 0.0
      %1095 = vmatpush2.msra.mxu0 0.0
      %1096 = vmatprep.subr.mxu0 0.0
      %1097 = vmatpush2.msra.mxu0 0.0
      %1098 = vmatprep.subr.mxu0 0.0
      %1099 = vmatpush2.msra.mxu0 0.0
      %1100 = vmatprep.subr.mxu0 0.0
      %1101 = vmatpush2.msra.mxu0 0.0
      %1102 = vmatprep.subr.mxu0 0.0
      %1103 = vmatpush2.msra.mxu0 0.0
      %1104 = vmatprep.subr.mxu0 0.0
      %1105 = vmatpush2.msra.mxu0 0.0
      %1106 = vmatprep.subr.mxu0 0.0
      %1107 = vmatpush2.msra.mxu0 0.0
      %1108 = vmatprep.subr.mxu0 0.0
      %1109 = vmatpush2.msra.mxu0 0.0
      %1110 = vmatprep.subr.mxu0 0.0
      %1111 = vmatpush2.msra.mxu0 0.0
      %1112 = vmatprep.subr.mxu0 0.0
      %1113 = vmatpush2.msra.mxu0 0.0
      %1114 = vmatprep.subr.mxu0 0.0
      %1115 = vmatpush2.msra.mxu0 0.0
      %1116 = vmatprep.subr.mxu0 0.0
      %1117 = vmatpush2.msra.mxu0 0.0
      %1118 = vmatprep.subr.mxu0 0.0
      %1119 = vmatpush2.msra.mxu0 0.0
      %1120 = vmatprep.subr.mxu0 0.0
      %1121 = vmatpush2.msra.mxu0 0.0
      %1122 = vmatprep.subr.mxu0 0.0
      %1123 = vmatpush2.msra.mxu0 0.0
      %1124 = vmatprep.subr.mxu0 0.0
      %1125 = vmatpush2.msra.mxu0 0.0
      %1126 = vmatprep.mubr.f32.mxu0 0.0
      %1127 = vmatmul.mubr.f32.gmra.mxu0 %v988
      %v1128 = vpop.f32.mrf.mxu0
      %v1129 = vadd.f32 %v317, %v1128
      %v1130 = vpop.f32.mrf.mxu0
      %1131 = vdwg.mxu0
      %s1132 = scalar_lea.vmem %s229, 96
      %v1133 = vld [vmem:[%s1132] sm:$0xff]
      %v1134 = vld [vmem:[%s1132 + $0x8] sm:$0xff]
      %v1135 = vld [vmem:[%s1132 + $0x10] sm:$0xff]
      %v1136 = vadd.f32 %v1133, %v1058
      %v1137 = vxor.u32 %v1136, 2147483648
      %v1138 = vmul.f32 %v1137, 1.442695
      %v1139 = vpow.pop %v1138
      %v1140 = vadd.f32 %v1139, 1.0
      %v1141 = vrcp.pop %v1140
      %v1142 = vmul.f32 1.0, %v1141
      %v1143 = vadd.f32 %v1134, %v1060
      %v1144 = vxor.u32 %v1143, 2147483648
      %v1145 = vmul.f32 %v1144, 1.442695
      %v1146 = vpow.pop %v1145
      %v1147 = vadd.f32 %v1146, 1.0
      %v1148 = vrcp.pop %v1147
      %v1149 = vmul.f32 1.0, %v1148
      %v1150 = vmul.f32 %v1142, %v1129
      %v1151 = vadd.f32 %v1135, %v1150
      %v1152 = vtanh.pop %v1151
      %v1153 = vsub.f32 1.0, %v1149
      %v1154 = vmul.f32 %v1153, %v1152
      %v1155 = vmul.f32 %v1149, %v988
      %v1156 = vadd.f32 %v1154, %v1155
      %s1157 = scalar_lea.vmem %s248, 32
      %1158 = vst [vmem:[%s1157] sm:$0xff] %v1156
      %1159 = vmatprep.subr.mxu0 %v301
      %1160 = vmatpush1.msra.mxu0 %v300
      %1161 = vmatprep.subr.mxu0 %v298
      %1162 = vmatpush1.msra.mxu0 %v297
      %1163 = vmatprep.subr.mxu0 %v295
      %1164 = vmatpush1.msra.mxu0 %v294
      %1165 = vmatprep.subr.mxu0 %v292
      %1166 = vmatpush1.msra.mxu0 %v291
      %1167 = vmatprep.subr.mxu0 %v289
      %1168 = vmatpush1.msra.mxu0 %v288
      %1169 = vmatprep.subr.mxu0 %v286
      %1170 = vmatpush1.msra.mxu0 %v285
      %1171 = vmatprep.subr.mxu0 %v283
      %1172 = vmatpush1.msra.mxu0 %v282
      %1173 = vmatprep.subr.mxu0 %v280
      %1174 = vmatpush1.msra.mxu0 %v279
      %1175 = vmatprep.subr.mxu0 %v277
      %1176 = vmatpush1.msra.mxu0 %v276
      %1177 = vmatprep.subr.mxu0 %v274
      %1178 = vmatpush1.msra.mxu0 %v273
      %1179 = vmatprep.subr.mxu0 %v271
      %1180 = vmatpush1.msra.mxu0 %v270
      %1181 = vmatprep.subr.mxu0 %v268
      %1182 = vmatpush1.msra.mxu0 %v267
      %1183 = vmatprep.subr.mxu0 %v265
      %1184 = vmatpush1.msra.mxu0 %v264
      %1185 = vmatprep.subr.mxu0 %v262
      %1186 = vmatpush1.msra.mxu0 %v261
      %1187 = vmatprep.subr.mxu0 %v259
      %1188 = vmatpush1.msra.mxu0 %v258
      %1189 = vmatprep.subr.mxu0 %v256
      %1190 = vmatpush1.msra.mxu0 %v255
      %1191 = vmatprep.subr.mxu0 0.0
      %1192 = vmatpush2.msra.mxu0 0.0
      %1193 = vmatprep.subr.mxu0 0.0
      %1194 = vmatpush2.msra.mxu0 0.0
      %1195 = vmatprep.subr.mxu0 0.0
      %1196 = vmatpush2.msra.mxu0 0.0
      %1197 = vmatprep.subr.mxu0 0.0
      %1198 = vmatpush2.msra.mxu0 0.0
      %1199 = vmatprep.subr.mxu0 0.0
      %1200 = vmatpush2.msra.mxu0 0.0
      %1201 = vmatprep.subr.mxu0 0.0
      %1202 = vmatpush2.msra.mxu0 0.0
      %1203 = vmatprep.subr.mxu0 0.0
      %1204 = vmatpush2.msra.mxu0 0.0
      %1205 = vmatprep.subr.mxu0 0.0
      %1206 = vmatpush2.msra.mxu0 0.0
      %1207 = vmatprep.subr.mxu0 0.0
      %1208 = vmatpush2.msra.mxu0 0.0
      %1209 = vmatprep.subr.mxu0 0.0
      %1210 = vmatpush2.msra.mxu0 0.0
      %1211 = vmatprep.subr.mxu0 0.0
      %1212 = vmatpush2.msra.mxu0 0.0
      %1213 = vmatprep.subr.mxu0 0.0
      %1214 = vmatpush2.msra.mxu0 0.0
      %1215 = vmatprep.subr.mxu0 0.0
      %1216 = vmatpush2.msra.mxu0 0.0
      %1217 = vmatprep.subr.mxu0 0.0
      %1218 = vmatpush2.msra.mxu0 0.0
      %1219 = vmatprep.subr.mxu0 0.0
      %1220 = vmatpush2.msra.mxu0 0.0
      %1221 = vmatprep.subr.mxu0 0.0
      %1222 = vmatpush2.msra.mxu0 0.0
      %1223 = vmatprep.mubr.f32.mxu0 0.0
      %1224 = vmatmul.mubr.f32.gmra.mxu0 %v1156
      %v1225 = vpop.f32.mrf.mxu0
      %v1226 = vadd.f32 %v309, %v1225
      %v1227 = vpop.f32.mrf.mxu0
      %v1228 = vadd.f32 %v313, %v1227
      %1229 = vdwg.mxu0
      %1230 = vmatprep.subr.mxu0 0.0
      %1231 = vmatpush1.msra.mxu0 %v302
      %1232 = vmatprep.subr.mxu0 0.0
      %1233 = vmatpush1.msra.mxu0 %v299
      %1234 = vmatprep.subr.mxu0 0.0
      %1235 = vmatpush1.msra.mxu0 %v296
      %1236 = vmatprep.subr.mxu0 0.0
      %1237 = vmatpush1.msra.mxu0 %v293
      %1238 = vmatprep.subr.mxu0 0.0
      %1239 = vmatpush1.msra.mxu0 %v290
      %1240 = vmatprep.subr.mxu0 0.0
      %1241 = vmatpush1.msra.mxu0 %v287
      %1242 = vmatprep.subr.mxu0 0.0
      %1243 = vmatpush1.msra.mxu0 %v284
      %1244 = vmatprep.subr.mxu0 0.0
      %1245 = vmatpush1.msra.mxu0 %v281
      %1246 = vmatprep.subr.mxu0 0.0
      %1247 = vmatpush1.msra.mxu0 %v278
      %1248 = vmatprep.subr.mxu0 0.0
      %1249 = vmatpush1.msra.mxu0 %v275
      %1250 = vmatprep.subr.mxu0 0.0
      %1251 = vmatpush1.msra.mxu0 %v272
      %1252 = vmatprep.subr.mxu0 0.0
      %1253 = vmatpush1.msra.mxu0 %v269
      %1254 = vmatprep.subr.mxu0 0.0
      %1255 = vmatpush1.msra.mxu0 %v266
      %1256 = vmatprep.subr.mxu0 0.0
      %1257 = vmatpush1.msra.mxu0 %v263
      %1258 = vmatprep.subr.mxu0 0.0
      %1259 = vmatpush1.msra.mxu0 %v260
      %1260 = vmatprep.subr.mxu0 0.0
      %1261 = vmatpush1.msra.mxu0 %v257
      %1262 = vmatprep.subr.mxu0 0.0
      %1263 = vmatpush2.msra.mxu0 0.0
      %1264 = vmatprep.subr.mxu0 0.0
      %1265 = vmatpush2.msra.mxu0 0.0
      %1266 = vmatprep.subr.mxu0 0.0
      %1267 = vmatpush2.msra.mxu0 0.0
      %1268 = vmatprep.subr.mxu0 0.0
      %1269 = vmatpush2.msra.mxu0 0.0
      %1270 = vmatprep.subr.mxu0 0.0
      %1271 = vmatpush2.msra.mxu0 0.0
      %1272 = vmatprep.subr.mxu0 0.0
      %1273 = vmatpush2.msra.mxu0 0.0
      %1274 = vmatprep.subr.mxu0 0.0
      %1275 = vmatpush2.msra.mxu0 0.0
      %1276 = vmatprep.subr.mxu0 0.0
      %1277 = vmatpush2.msra.mxu0 0.0
      %1278 = vmatprep.subr.mxu0 0.0
      %1279 = vmatpush2.msra.mxu0 0.0
      %1280 = vmatprep.subr.mxu0 0.0
      %1281 = vmatpush2.msra.mxu0 0.0
      %1282 = vmatprep.subr.mxu0 0.0
      %1283 = vmatpush2.msra.mxu0 0.0
      %1284 = vmatprep.subr.mxu0 0.0
      %1285 = vmatpush2.msra.mxu0 0.0
      %1286 = vmatprep.subr.mxu0 0.0
      %1287 = vmatpush2.msra.mxu0 0.0
      %1288 = vmatprep.subr.mxu0 0.0
      %1289 = vmatpush2.msra.mxu0 0.0
      %1290 = vmatprep.subr.mxu0 0.0
      %1291 = vmatpush2.msra.mxu0 0.0
      %1292 = vmatprep.subr.mxu0 0.0
      %1293 = vmatpush2.msra.mxu0 0.0
      %1294 = vmatprep.mubr.f32.mxu0 0.0
      %1295 = vmatmul.mubr.f32.gmra.mxu0 %v1156
      %v1296 = vpop.f32.mrf.mxu0
      %v1297 = vadd.f32 %v317, %v1296
      %v1298 = vpop.f32.mrf.mxu0
      %1299 = vdwg.mxu0
      %s1300 = scalar_lea.vmem %s229, 120
      %v1301 = vld [vmem:[%s1300] sm:$0xff]
      %v1302 = vld [vmem:[%s1300 + $0x8] sm:$0xff]
      %v1303 = vld [vmem:[%s1300 + $0x10] sm:$0xff]
      %v1304 = vadd.f32 %v1301, %v1226
      %v1305 = vxor.u32 %v1304, 2147483648
      %v1306 = vmul.f32 %v1305, 1.442695
      %v1307 = vpow.pop %v1306
      %v1308 = vadd.f32 %v1307, 1.0
      %v1309 = vrcp.pop %v1308
      %v1310 = vmul.f32 1.0, %v1309
      %v1311 = vadd.f32 %v1302, %v1228
      %v1312 = vxor.u32 %v1311, 2147483648
      %v1313 = vmul.f32 %v1312, 1.442695
      %v1314 = vpow.pop %v1313
      %v1315 = vadd.f32 %v1314, 1.0
      %v1316 = vrcp.pop %v1315
      %v1317 = vmul.f32 1.0, %v1316
      %v1318 = vmul.f32 %v1310, %v1297
      %v1319 = vadd.f32 %v1303, %v1318
      %v1320 = vtanh.pop %v1319
      %v1321 = vsub.f32 1.0, %v1317
      %v1322 = vmul.f32 %v1321, %v1320
      %v1323 = vmul.f32 %v1317, %v1156
      %v1324 = vadd.f32 %v1322, %v1323
      %s1325 = scalar_lea.vmem %s248, 40
      %1326 = vst [vmem:[%s1325] sm:$0xff] %v1324
      %1327 = vmatprep.subr.mxu0 %v301
      %1328 = vmatpush1.msra.mxu0 %v300
      %1329 = vmatprep.subr.mxu0 %v298
      %1330 = vmatpush1.msra.mxu0 %v297
      %1331 = vmatprep.subr.mxu0 %v295
      %1332 = vmatpush1.msra.mxu0 %v294
      %1333 = vmatprep.subr.mxu0 %v292
      %1334 = vmatpush1.msra.mxu0 %v291
      %1335 = vmatprep.subr.mxu0 %v289
      %1336 = vmatpush1.msra.mxu0 %v288
      %1337 = vmatprep.subr.mxu0 %v286
      %1338 = vmatpush1.msra.mxu0 %v285
      %1339 = vmatprep.subr.mxu0 %v283
      %1340 = vmatpush1.msra.mxu0 %v282
      %1341 = vmatprep.subr.mxu0 %v280
      %1342 = vmatpush1.msra.mxu0 %v279
      %1343 = vmatprep.subr.mxu0 %v277
      %1344 = vmatpush1.msra.mxu0 %v276
      %1345 = vmatprep.subr.mxu0 %v274
      %1346 = vmatpush1.msra.mxu0 %v273
      %1347 = vmatprep.subr.mxu0 %v271
      %1348 = vmatpush1.msra.mxu0 %v270
      %1349 = vmatprep.subr.mxu0 %v268
      %1350 = vmatpush1.msra.mxu0 %v267
      %1351 = vmatprep.subr.mxu0 %v265
      %1352 = vmatpush1.msra.mxu0 %v264
      %1353 = vmatprep.subr.mxu0 %v262
      %1354 = vmatpush1.msra.mxu0 %v261
      %1355 = vmatprep.subr.mxu0 %v259
      %1356 = vmatpush1.msra.mxu0 %v258
      %1357 = vmatprep.subr.mxu0 %v256
      %1358 = vmatpush1.msra.mxu0 %v255
      %1359 = vmatprep.subr.mxu0 0.0
      %1360 = vmatpush2.msra.mxu0 0.0
      %1361 = vmatprep.subr.mxu0 0.0
      %1362 = vmatpush2.msra.mxu0 0.0
      %1363 = vmatprep.subr.mxu0 0.0
      %1364 = vmatpush2.msra.mxu0 0.0
      %1365 = vmatprep.subr.mxu0 0.0
      %1366 = vmatpush2.msra.mxu0 0.0
      %1367 = vmatprep.subr.mxu0 0.0
      %1368 = vmatpush2.msra.mxu0 0.0
      %1369 = vmatprep.subr.mxu0 0.0
      %1370 = vmatpush2.msra.mxu0 0.0
      %1371 = vmatprep.subr.mxu0 0.0
      %1372 = vmatpush2.msra.mxu0 0.0
      %1373 = vmatprep.subr.mxu0 0.0
      %1374 = vmatpush2.msra.mxu0 0.0
      %1375 = vmatprep.subr.mxu0 0.0
      %1376 = vmatpush2.msra.mxu0 0.0
      %1377 = vmatprep.subr.mxu0 0.0
      %1378 = vmatpush2.msra.mxu0 0.0
      %1379 = vmatprep.subr.mxu0 0.0
      %1380 = vmatpush2.msra.mxu0 0.0
      %1381 = vmatprep.subr.mxu0 0.0
      %1382 = vmatpush2.msra.mxu0 0.0
      %1383 = vmatprep.subr.mxu0 0.0
      %1384 = vmatpush2.msra.mxu0 0.0
      %1385 = vmatprep.subr.mxu0 0.0
      %1386 = vmatpush2.msra.mxu0 0.0
      %1387 = vmatprep.subr.mxu0 0.0
      %1388 = vmatpush2.msra.mxu0 0.0
      %1389 = vmatprep.subr.mxu0 0.0
      %1390 = vmatpush2.msra.mxu0 0.0
      %1391 = vmatprep.mubr.f32.mxu0 0.0
      %1392 = vmatmul.mubr.f32.gmra.mxu0 %v1324
      %v1393 = vpop.f32.mrf.mxu0
      %v1394 = vadd.f32 %v309, %v1393
      %v1395 = vpop.f32.mrf.mxu0
      %v1396 = vadd.f32 %v313, %v1395
      %1397 = vdwg.mxu0
      %1398 = vmatprep.subr.mxu0 0.0
      %1399 = vmatpush1.msra.mxu0 %v302
      %1400 = vmatprep.subr.mxu0 0.0
      %1401 = vmatpush1.msra.mxu0 %v299
      %1402 = vmatprep.subr.mxu0 0.0
      %1403 = vmatpush1.msra.mxu0 %v296
      %1404 = vmatprep.subr.mxu0 0.0
      %1405 = vmatpush1.msra.mxu0 %v293
      %1406 = vmatprep.subr.mxu0 0.0
      %1407 = vmatpush1.msra.mxu0 %v290
      %1408 = vmatprep.subr.mxu0 0.0
      %1409 = vmatpush1.msra.mxu0 %v287
      %1410 = vmatprep.subr.mxu0 0.0
      %1411 = vmatpush1.msra.mxu0 %v284
      %1412 = vmatprep.subr.mxu0 0.0
      %1413 = vmatpush1.msra.mxu0 %v281
      %1414 = vmatprep.subr.mxu0 0.0
      %1415 = vmatpush1.msra.mxu0 %v278
      %1416 = vmatprep.subr.mxu0 0.0
      %1417 = vmatpush1.msra.mxu0 %v275
      %1418 = vmatprep.subr.mxu0 0.0
      %1419 = vmatpush1.msra.mxu0 %v272
      %1420 = vmatprep.subr.mxu0 0.0
      %1421 = vmatpush1.msra.mxu0 %v269
      %1422 = vmatprep.subr.mxu0 0.0
      %1423 = vmatpush1.msra.mxu0 %v266
      %1424 = vmatprep.subr.mxu0 0.0
      %1425 = vmatpush1.msra.mxu0 %v263
      %1426 = vmatprep.subr.mxu0 0.0
      %1427 = vmatpush1.msra.mxu0 %v260
      %1428 = vmatprep.subr.mxu0 0.0
      %1429 = vmatpush1.msra.mxu0 %v257
      %1430 = vmatprep.subr.mxu0 0.0
      %1431 = vmatpush2.msra.mxu0 0.0
      %1432 = vmatprep.subr.mxu0 0.0
      %1433 = vmatpush2.msra.mxu0 0.0
      %1434 = vmatprep.subr.mxu0 0.0
      %1435 = vmatpush2.msra.mxu0 0.0
      %1436 = vmatprep.subr.mxu0 0.0
      %1437 = vmatpush2.msra.mxu0 0.0
      %1438 = vmatprep.subr.mxu0 0.0
      %1439 = vmatpush2.msra.mxu0 0.0
      %1440 = vmatprep.subr.mxu0 0.0
      %1441 = vmatpush2.msra.mxu0 0.0
      %1442 = vmatprep.subr.mxu0 0.0
      %1443 = vmatpush2.msra.mxu0 0.0
      %1444 = vmatprep.subr.mxu0 0.0
      %1445 = vmatpush2.msra.mxu0 0.0
      %1446 = vmatprep.subr.mxu0 0.0
      %1447 = vmatpush2.msra.mxu0 0.0
      %1448 = vmatprep.subr.mxu0 0.0
      %1449 = vmatpush2.msra.mxu0 0.0
      %1450 = vmatprep.subr.mxu0 0.0
      %1451 = vmatpush2.msra.mxu0 0.0
      %1452 = vmatprep.subr.mxu0 0.0
      %1453 = vmatpush2.msra.mxu0 0.0
      %1454 = vmatprep.subr.mxu0 0.0
      %1455 = vmatpush2.msra.mxu0 0.0
      %1456 = vmatprep.subr.mxu0 0.0
      %1457 = vmatpush2.msra.mxu0 0.0
      %1458 = vmatprep.subr.mxu0 0.0
      %1459 = vmatpush2.msra.mxu0 0.0
      %1460 = vmatprep.subr.mxu0 0.0
      %1461 = vmatpush2.msra.mxu0 0.0
      %1462 = vmatprep.mubr.f32.mxu0 0.0
      %1463 = vmatmul.mubr.f32.gmra.mxu0 %v1324
      %v1464 = vpop.f32.mrf.mxu0
      %v1465 = vadd.f32 %v317, %v1464
      %v1466 = vpop.f32.mrf.mxu0
      %1467 = vdwg.mxu0
      %s1468 = scalar_lea.vmem %s229, 144
      %v1469 = vld [vmem:[%s1468] sm:$0xff]
      %v1470 = vld [vmem:[%s1468 + $0x8] sm:$0xff]
      %v1471 = vld [vmem:[%s1468 + $0x10] sm:$0xff]
      %v1472 = vadd.f32 %v1469, %v1394
      %v1473 = vxor.u32 %v1472, 2147483648
      %v1474 = vmul.f32 %v1473, 1.442695
      %v1475 = vpow.pop %v1474
      %v1476 = vadd.f32 %v1475, 1.0
      %v1477 = vrcp.pop %v1476
      %v1478 = vmul.f32 1.0, %v1477
      %v1479 = vadd.f32 %v1470, %v1396
      %v1480 = vxor.u32 %v1479, 2147483648
      %v1481 = vmul.f32 %v1480, 1.442695
      %v1482 = vpow.pop %v1481
      %v1483 = vadd.f32 %v1482, 1.0
      %v1484 = vrcp.pop %v1483
      %v1485 = vmul.f32 1.0, %v1484
      %v1486 = vmul.f32 %v1478, %v1465
      %v1487 = vadd.f32 %v1471, %v1486
      %v1488 = vtanh.pop %v1487
      %v1489 = vsub.f32 1.0, %v1485
      %v1490 = vmul.f32 %v1489, %v1488
      %v1491 = vmul.f32 %v1485, %v1324
      %v1492 = vadd.f32 %v1490, %v1491
      %s1493 = scalar_lea.vmem %s248, 48
      %1494 = vst [vmem:[%s1493] sm:$0xff] %v1492
      %1495 = vmatprep.subr.mxu0 %v301
      %1496 = vmatpush1.msra.mxu0 %v300
      %1497 = vmatprep.subr.mxu0 %v298
      %1498 = vmatpush1.msra.mxu0 %v297
      %1499 = vmatprep.subr.mxu0 %v295
      %1500 = vmatpush1.msra.mxu0 %v294
      %1501 = vmatprep.subr.mxu0 %v292
      %1502 = vmatpush1.msra.mxu0 %v291
      %1503 = vmatprep.subr.mxu0 %v289
      %1504 = vmatpush1.msra.mxu0 %v288
      %1505 = vmatprep.subr.mxu0 %v286
      %1506 = vmatpush1.msra.mxu0 %v285
      %1507 = vmatprep.subr.mxu0 %v283
      %1508 = vmatpush1.msra.mxu0 %v282
      %1509 = vmatprep.subr.mxu0 %v280
      %1510 = vmatpush1.msra.mxu0 %v279
      %1511 = vmatprep.subr.mxu0 %v277
      %1512 = vmatpush1.msra.mxu0 %v276
      %1513 = vmatprep.subr.mxu0 %v274
      %1514 = vmatpush1.msra.mxu0 %v273
      %1515 = vmatprep.subr.mxu0 %v271
      %1516 = vmatpush1.msra.mxu0 %v270
      %1517 = vmatprep.subr.mxu0 %v268
      %1518 = vmatpush1.msra.mxu0 %v267
      %1519 = vmatprep.subr.mxu0 %v265
      %1520 = vmatpush1.msra.mxu0 %v264
      %1521 = vmatprep.subr.mxu0 %v262
      %1522 = vmatpush1.msra.mxu0 %v261
      %1523 = vmatprep.subr.mxu0 %v259
      %1524 = vmatpush1.msra.mxu0 %v258
      %1525 = vmatprep.subr.mxu0 %v256
      %1526 = vmatpush1.msra.mxu0 %v255
      %1527 = vmatprep.subr.mxu0 0.0
      %1528 = vmatpush2.msra.mxu0 0.0
      %1529 = vmatprep.subr.mxu0 0.0
      %1530 = vmatpush2.msra.mxu0 0.0
      %1531 = vmatprep.subr.mxu0 0.0
      %1532 = vmatpush2.msra.mxu0 0.0
      %1533 = vmatprep.subr.mxu0 0.0
      %1534 = vmatpush2.msra.mxu0 0.0
      %1535 = vmatprep.subr.mxu0 0.0
      %1536 = vmatpush2.msra.mxu0 0.0
      %1537 = vmatprep.subr.mxu0 0.0
      %1538 = vmatpush2.msra.mxu0 0.0
      %1539 = vmatprep.subr.mxu0 0.0
      %1540 = vmatpush2.msra.mxu0 0.0
      %1541 = vmatprep.subr.mxu0 0.0
      %1542 = vmatpush2.msra.mxu0 0.0
      %1543 = vmatprep.subr.mxu0 0.0
      %1544 = vmatpush2.msra.mxu0 0.0
      %1545 = vmatprep.subr.mxu0 0.0
      %1546 = vmatpush2.msra.mxu0 0.0
      %1547 = vmatprep.subr.mxu0 0.0
      %1548 = vmatpush2.msra.mxu0 0.0
      %1549 = vmatprep.subr.mxu0 0.0
      %1550 = vmatpush2.msra.mxu0 0.0
      %1551 = vmatprep.subr.mxu0 0.0
      %1552 = vmatpush2.msra.mxu0 0.0
      %1553 = vmatprep.subr.mxu0 0.0
      %1554 = vmatpush2.msra.mxu0 0.0
      %1555 = vmatprep.subr.mxu0 0.0
      %1556 = vmatpush2.msra.mxu0 0.0
      %1557 = vmatprep.subr.mxu0 0.0
      %1558 = vmatpush2.msra.mxu0 0.0
      %1559 = vmatprep.mubr.f32.mxu0 0.0
      %1560 = vmatmul.mubr.f32.gmra.mxu0 %v1492
      %v1561 = vpop.f32.mrf.mxu0
      %v1562 = vadd.f32 %v309, %v1561
      %v1563 = vpop.f32.mrf.mxu0
      %v1564 = vadd.f32 %v313, %v1563
      %1565 = vdwg.mxu0
      %1566 = vmatprep.subr.mxu0 0.0
      %1567 = vmatpush1.msra.mxu0 %v302
      %1568 = vmatprep.subr.mxu0 0.0
      %1569 = vmatpush1.msra.mxu0 %v299
      %1570 = vmatprep.subr.mxu0 0.0
      %1571 = vmatpush1.msra.mxu0 %v296
      %1572 = vmatprep.subr.mxu0 0.0
      %1573 = vmatpush1.msra.mxu0 %v293
      %1574 = vmatprep.subr.mxu0 0.0
      %1575 = vmatpush1.msra.mxu0 %v290
      %1576 = vmatprep.subr.mxu0 0.0
      %1577 = vmatpush1.msra.mxu0 %v287
      %1578 = vmatprep.subr.mxu0 0.0
      %1579 = vmatpush1.msra.mxu0 %v284
      %1580 = vmatprep.subr.mxu0 0.0
      %1581 = vmatpush1.msra.mxu0 %v281
      %1582 = vmatprep.subr.mxu0 0.0
      %1583 = vmatpush1.msra.mxu0 %v278
      %1584 = vmatprep.subr.mxu0 0.0
      %1585 = vmatpush1.msra.mxu0 %v275
      %1586 = vmatprep.subr.mxu0 0.0
      %1587 = vmatpush1.msra.mxu0 %v272
      %1588 = vmatprep.subr.mxu0 0.0
      %1589 = vmatpush1.msra.mxu0 %v269
      %1590 = vmatprep.subr.mxu0 0.0
      %1591 = vmatpush1.msra.mxu0 %v266
      %1592 = vmatprep.subr.mxu0 0.0
      %1593 = vmatpush1.msra.mxu0 %v263
      %1594 = vmatprep.subr.mxu0 0.0
      %1595 = vmatpush1.msra.mxu0 %v260
      %1596 = vmatprep.subr.mxu0 0.0
      %1597 = vmatpush1.msra.mxu0 %v257
      %1598 = vmatprep.subr.mxu0 0.0
      %1599 = vmatpush2.msra.mxu0 0.0
      %1600 = vmatprep.subr.mxu0 0.0
      %1601 = vmatpush2.msra.mxu0 0.0
      %1602 = vmatprep.subr.mxu0 0.0
      %1603 = vmatpush2.msra.mxu0 0.0
      %1604 = vmatprep.subr.mxu0 0.0
      %1605 = vmatpush2.msra.mxu0 0.0
      %1606 = vmatprep.subr.mxu0 0.0
      %1607 = vmatpush2.msra.mxu0 0.0
      %1608 = vmatprep.subr.mxu0 0.0
      %1609 = vmatpush2.msra.mxu0 0.0
      %1610 = vmatprep.subr.mxu0 0.0
      %1611 = vmatpush2.msra.mxu0 0.0
      %1612 = vmatprep.subr.mxu0 0.0
      %1613 = vmatpush2.msra.mxu0 0.0
      %1614 = vmatprep.subr.mxu0 0.0
      %1615 = vmatpush2.msra.mxu0 0.0
      %1616 = vmatprep.subr.mxu0 0.0
      %1617 = vmatpush2.msra.mxu0 0.0
      %1618 = vmatprep.subr.mxu0 0.0
      %1619 = vmatpush2.msra.mxu0 0.0
      %1620 = vmatprep.subr.mxu0 0.0
      %1621 = vmatpush2.msra.mxu0 0.0
      %1622 = vmatprep.subr.mxu0 0.0
      %1623 = vmatpush2.msra.mxu0 0.0
      %1624 = vmatprep.subr.mxu0 0.0
      %1625 = vmatpush2.msra.mxu0 0.0
      %1626 = vmatprep.subr.mxu0 0.0
      %1627 = vmatpush2.msra.mxu0 0.0
      %1628 = vmatprep.subr.mxu0 0.0
      %1629 = vmatpush2.msra.mxu0 0.0
      %1630 = vmatprep.mubr.f32.mxu0 0.0
      %1631 = vmatmul.mubr.f32.gmra.mxu0 %v1492
      %v1632 = vpop.f32.mrf.mxu0
      %v1633 = vadd.f32 %v317, %v1632
      %v1634 = vpop.f32.mrf.mxu0
      %1635 = vdwg.mxu0
      %s1636 = scalar_lea.vmem %s229, 168
      %v1637 = vld [vmem:[%s1636] sm:$0xff]
      %v1638 = vld [vmem:[%s1636 + $0x8] sm:$0xff]
      %v1639 = vld [vmem:[%s1636 + $0x10] sm:$0xff]
      %v1640 = vadd.f32 %v1637, %v1562
      %v1641 = vxor.u32 %v1640, 2147483648
      %v1642 = vmul.f32 %v1641, 1.442695
      %v1643 = vpow.pop %v1642
      %v1644 = vadd.f32 %v1643, 1.0
      %v1645 = vrcp.pop %v1644
      %v1646 = vmul.f32 1.0, %v1645
      %v1647 = vadd.f32 %v1638, %v1564
      %v1648 = vxor.u32 %v1647, 2147483648
      %v1649 = vmul.f32 %v1648, 1.442695
      %v1650 = vpow.pop %v1649
      %v1651 = vadd.f32 %v1650, 1.0
      %v1652 = vrcp.pop %v1651
      %v1653 = vmul.f32 1.0, %v1652
      %v1654 = vmul.f32 %v1646, %v1633
      %v1655 = vadd.f32 %v1639, %v1654
      %v1656 = vtanh.pop %v1655
      %v1657 = vsub.f32 1.0, %v1653
      %v1658 = vmul.f32 %v1657, %v1656
      %v1659 = vmul.f32 %v1653, %v1492
      %v1660 = vadd.f32 %v1658, %v1659
      %s1661 = scalar_lea.vmem %s248, 56
      %1662 = vst [vmem:[%s1661] sm:$0xff] %v1660
      %1663 = vst [vmem:[#allocation2] sm:$0xff] %v1660
      %s1664 = smul.u32 8, %s19
      %p1665 = scmp.lt.s32.totalorder %s18, 1
      %s1666 = scalar_select %p1665, %s18, 1
      %p1667 = scmp.lt.s32.totalorder %s1664, 7
      %s1668 = scalar_select %p1667, %s1664, 7
      %s1669 = smul.addr %s1666, 8
      %s1670 = sadd.s32 %s1668, %s1669
      %s1671 = smul.addr %s1670, 8
      %s1672 = scalar_lea.vmem %s3, %s1671
      // Predicated region
      $region37: #{bigru_layer_forward.3} parent=31 // pred_check
        %p1673 = pneg %p126
      $region38: #{bigru_layer_forward.3} parent=31 // pred_check_branch
        %1675 = sbr.rel (%p1673) target = $region40
      $region39: #{bigru_layer_forward.3} parent=31 // pred_region
        %s1676 = smul.u32 8, %s19
      $region40: #{bigru_layer_forward.3} parent=31 // pred_fallthru
        _
    $region32: #{bigru_layer_forward.3} parent=5 // pred_fallthru
      _
    %p1677 = scmp.le.s32.totalorder 2, %s9
    // Predicated region
    $region41: #{bigru_layer_forward.3} parent=5 // pred_check
      %p1678 = pneg %p1677
    $region42: #{bigru_layer_forward.3} parent=5 // pred_check_branch
      %1680 = sbr.rel (%p1678) target = $region44
    $region43: #{bigru_layer_forward.3} parent=5 // pred_region
      %s1681 = ssub.s32 %s9, 2
      // Predicated region
      $region45: #{bigru_layer_forward.3} parent=43 // pred_check
        %p1682 = pneg %p132
      $region46: #{bigru_layer_forward.3} parent=43 // pred_check_branch
        %1684 = sbr.rel (%p1682) target = $region48
      $region47: #{bigru_layer_forward.3} parent=43 // pred_region
        %s1685 = smul.u32 8, %s21
        %p1686 = scmp.lt.s32.totalorder %s20, 1
        %s1687 = scalar_select %p1686, %s20, 1
        %p1688 = scmp.lt.s32.totalorder %s1685, 7
        %s1689 = scalar_select %p1688, %s1685, 7
        %s1690 = smul.addr %s1687, 8
        %s1691 = sadd.s32 %s1689, %s1690
        %s1692 = smul.addr %s1691, 8
        %s1693 = scalar_lea.vmem %s3, %s1692
      $region48: #{bigru_layer_forward.3} parent=43 // pred_fallthru
        _
    $region44: #{bigru_layer_forward.3} parent=5 // pred_fallthru
      _
  $region6: #{bigru_layer_forward.3} parent=0 // loop_footer
    %s13 = sadd.s32 1, %s9
  $region7: #{bigru_layer_forward.3} parent=0 // loop_footer_branch
    %8 = sbr.rel target = $region3
  $region8: #{bigru_layer_forward.3} parent=0 // loop_exit
    _

</llo_original>
